<compile_context>
chip_gen: v6e
topology: v6e:2x2x1
jax: 0.10.0
libtpu: 0.0.40
codegen_flags: <defaults>
</compile_context>

<pallas_src>
import functools
import math

import jax
import jax.numpy as jnp
import numpy as np
from jax import lax
from jax.experimental import pallas as pl
from jax.experimental.pallas import tpu as pltpu

GROUPS = 32          # nn.GroupNorm(num_groups=32, ...)
EPS = 1e-5           # PyTorch GroupNorm default eps


def _lcm(a, b):
    return a * b // math.gcd(a, b)


def _pick_tile(total, pref, quantum):
    """Largest multiple of `quantum` that divides `total` and is <= pref, else `total`."""
    t = (min(pref, total) // quantum) * quantum
    while t >= quantum:
        if total % t == 0:
            return t
        t -= quantum
    return total


def _vmem_limit_bytes():
    # Generation-aware scoped-VMEM limit: ~3/4 of physical per-core VMEM
    # (<= 48 MiB on 64 MiB v7x cores, up to 96 MiB on 128 MiB v5e/v6e cores).
    cap = 64 * 1024 * 1024
    try:
        info = pltpu.get_tpu_info()
        cap = int(getattr(info, "vmem_capacity_bytes", cap) or cap)
    except Exception:
        pass
    return int(min(cap * 3 // 4, 96 * 1024 * 1024))


# -------------------- kernel A: GroupNorm + fused QKV --------------------
def _norm_qkv_kernel(x_ref, gm_ref, gamma_ref, beta_ref, wqkv_ref, bqkv_ref, qkv_ref):
    """One batch element, channels-major: x_ref[0, c, h*W + w] == x_nchw[b, c, h, w]."""
    f32 = jnp.float32
    x = x_ref[0]                                                # (C, S) f32

    # GroupNorm: gm[c, c'] = 1/(S*Cg) iff c, c' share a group, so `gm @ column`
    # does "group-average + broadcast back to channels" in one tiny matmul.
    gm = gm_ref[...]
    row_sum = jnp.sum(x, axis=1, keepdims=True)                 # (C, 1)
    mean_c = jnp.dot(gm, row_sum, preferred_element_type=f32)   # (C, 1)
    xc = x - mean_c
    var_row = jnp.sum(xc * xc, axis=1, keepdims=True)           # (C, 1)
    var_c = jnp.dot(gm, var_row, preferred_element_type=f32)    # biased variance
    inv = lax.rsqrt(var_c + EPS)
    h = (xc * (inv * gamma_ref[...]) + beta_ref[...]).astype(jnp.bfloat16)  # (C, S)

    # Fused QKV: one (3C, C) @ (C, S) bf16 MXU matmul.  The softmax scale is already
    # folded into the q rows of wqkv/bqkv, so no in-kernel q scaling is needed.
    qkv = jnp.dot(wqkv_ref[...], h, preferred_element_type=f32) + bqkv_ref[...]
    qkv_ref[0] = qkv.astype(qkv_ref.dtype)
    # TODO(synk): at very large C*S, tile this matmul over S (stats still need the
    # full row) to shrink the (3C, S) f32 intermediate on 64 MiB-VMEM parts.


# -------------------- kernel B: flash attention (+ fused proj_out/residual) ----------
def _flash_attn_kernel(*refs, fuse_proj, pg, n_pg):
    """Online-softmax attention for one (batch, query tile); kv tiles = grid axis 2."""
    if fuse_proj:
        (x_ref, q_ref, k_ref, v_ref, wp_ref, bp_ref, o_ref,
         m_sc, l_sc, acc_sc) = refs
    else:
        q_ref, k_ref, v_ref, o_ref, m_sc, l_sc, acc_sc = refs

    f32, bf16 = jnp.float32, jnp.bfloat16
    ki = pl.program_id(2)

    @pl.when(ki == 0)
    def _init():
        m_sc[...] = jnp.full_like(m_sc, -jnp.inf)
        l_sc[...] = jnp.zeros_like(l_sc)
        acc_sc[...] = jnp.zeros_like(acc_sc)

    qT = q_ref[0]                                               # (C, Tq) bf16, pre-scaled
    kT = k_ref[0]                                               # (C, Tk) bf16
    vT = v_ref[0]                                               # (C, Tk) bf16

    # Keys-major scores: contract channel dim 0 of both operands -> (Tk, Tq).  No
    # materialized transpose of q, p or k anywhere; softmax stats come out as
    # lane-major (1, Tq) rows that broadcast directly onto the (C, Tq) accumulator.
    s = lax.dot_general(kT, qT, (((0,), (0,)), ((), ())),
                        preferred_element_type=f32)             # (Tk, Tq) f32
    m_new = jnp.maximum(m_sc[...], jnp.max(s, axis=0, keepdims=True))   # (1, Tq)
    alpha = jnp.exp(m_sc[...] - m_new)                                   # (1, Tq)
    p = jnp.exp(s - m_new)                                               # (Tk, Tq) f32
    l_sc[...] = alpha * l_sc[...] + jnp.sum(p, axis=0, keepdims=True)
    # Deferred normalization: un-normalized p feeds the PV matmul (the bf16 cast is
    # the only Tk*Tq-sized VPU op); 1/l is applied once per output column below.
    acc_sc[...] = alpha * acc_sc[...] + jnp.dot(vT, p.astype(bf16),
                                                preferred_element_type=f32)
    m_sc[...] = m_new

    @pl.when(ki == pl.num_programs(2) - 1)
    def _finalize():
        inv_l = pl.reciprocal(l_sc[...], approx=True)           # EUP reciprocal, (1, Tq)
        aT = (acc_sc[...] * inv_l).astype(bf16)                 # (C, Tq)
        if fuse_proj:
            # PyTorch: bmm(w,v).reshape(B,H,W,C).permute(0,3,1,2).reshape(B,S,C) -> proj.
            # With S % C == 0 (and Tq % C == 0) that scramble is exactly "apply proj_out
            # to each width-C lane slice of the channels-major attention output".
            # Blocks are applied per group of `pg` lanes (block-diag weight when C < 128
            # keeps stores >= 128 lanes wide) and stored directly with the residual --
            # no concat, and x is only read here.
            wp = wp_ref[...]
            bp = bp_ref[...]
            for t in range(n_pg):                               # static, small
                sl = slice(t * pg, (t + 1) * pg)
                blk = jnp.dot(aT[:, sl], wp, preferred_element_type=f32) + bp
                o_ref[0, :, sl] = x_ref[0, :, sl] + blk
        else:
            o_ref[0] = aT                                       # bf16 intermediate


# -------------------- fallback (S % C != 0): proj_out + residual --------------------
def _proj_residual_kernel(a_ref, x_ref, wp_ref, bp_ref, o_ref):
    a = a_ref[0]                                                # (Tr, C) bf16, scrambled rows
    p = jnp.dot(a, wp_ref[...], preferred_element_type=jnp.float32) + bp_ref[...]
    o_ref[0] = x_ref[0] + p


# -------------------- wrapper --------------------
def attn_block(x, params):
    B, C, H, W = x.shape
    S = H * W
    G = GROUPS
    assert C % G == 0, "GroupNorm(32) requires channels divisible by 32"
    Cg = C // G

    f32, bf16 = jnp.float32, jnp.bfloat16
    scale = float(C) ** -0.5
    vlim = _vmem_limit_bytes()

    # group-average + broadcast matrix (see _norm_qkv_kernel).
    group_id = jnp.arange(C) // Cg
    gm = (group_id[:, None] == group_id[None, :]).astype(f32) / float(S * Cg)
    gamma_col = params["gamma"].reshape(C, 1).astype(f32)
    beta_col = params["beta"].reshape(C, 1).astype(f32)

    # fused QKV weights; softmax scale folded into q rows / bias (zero in-kernel cost).
    wqkv = jnp.concatenate([params["wq"] * scale, params["wk"], params["wv"]],
                           axis=0).astype(bf16)                           # (3C, C)
    bqkv = jnp.concatenate([params["bq"] * scale, params["bk"], params["bv"]],
                           axis=0).reshape(3 * C, 1).astype(f32)

    # channels-major token view: a FREE flat relabel of NCHW (no transpose kernel).
    x_cs = x.astype(f32).reshape(B, C, S)

    const2 = lambda shape: pl.BlockSpec(shape, lambda b: (0, 0))

    # ---------------- kernel A: GroupNorm + fused QKV ----------------
    qkv = pl.pallas_call(
        _norm_qkv_kernel,
        out_shape=jax.ShapeDtypeStruct((B, 3 * C, S), bf16),
        grid=(B,),
        in_specs=[
            pl.BlockSpec((1, C, S), lambda b: (b, 0, 0)),
            const2((C, C)), const2((C, 1)), const2((C, 1)),
            const2((3 * C, C)), const2((3 * C, 1)),
        ],
        out_specs=pl.BlockSpec((1, 3 * C, S), lambda b: (b, 0, 0)),
        compiler_params=pltpu.CompilerParams(
            dimension_semantics=("parallel",), vmem_limit_bytes=vlim),
        cost_estimate=pl.CostEstimate(
            flops=2 * B * S * C * 3 * C, transcendentals=0,
            bytes_accessed=B * C * S * 4 + B * 3 * C * S * 2),
    )(x_cs, gm, gamma_col, beta_col, wqkv, bqkv)

    # ---------------- kernel B: flash attention (+ fused proj/residual) ----------------
    fuse_proj = (S % C == 0)
    q_quant = _lcm(C, 128) if fuse_proj else 128
    Tq = _pick_tile(S, max(128, q_quant), q_quant)        # query tile (multiple of C if fused)
    Tk = _pick_tile(S, max(128, min(512, S // 2)), 128)   # kv tile
    n_q, n_kv = S // Tq, S // Tk

    cparams = pltpu.CompilerParams(
        dimension_semantics=("parallel", "parallel", "arbitrary"),
        vmem_limit_bytes=vlim)
    cost = pl.CostEstimate(
        flops=4 * B * S * S * C + 2 * B * S * C * C,
        transcendentals=B * S * S,
        bytes_accessed=2 * B * C * S * 4 + B * C * S * 2 * (1 + 2 * n_q))
    scratch = [pltpu.VMEM((1, Tq), f32),       # running max
               pltpu.VMEM((1, Tq), f32),       # running sum (un-normalized)
               pltpu.VMEM((C, Tq), f32)]       # channels-major output accumulator

    # q/k/v are C-row slices of the same fused qkv array (no HBM split copies).
    q_spec = pl.BlockSpec((1, C, Tq), lambda b, qi, ki: (b, 0, qi))
    k_spec = pl.BlockSpec((1, C, Tk), lambda b, qi, ki: (b, 1, ki))
    v_spec = pl.BlockSpec((1, C, Tk), lambda b, qi, ki: (b, 2, ki))
    o_spec = pl.BlockSpec((1, C, Tq), lambda b, qi, ki: (b, 0, qi))
    const3 = lambda shape: pl.BlockSpec(shape, lambda b, qi, ki: (0, 0))

    if fuse_proj:
        # proj group width: keep every finalize store >= 128 lanes wide when possible.
        PG = C if C >= 128 else (128 // C) * C
        if Tq % PG != 0:
            PG = C
        reps = PG // C
        wpT = params["wp"].T.astype(f32)                   # (C_in, C_out)
        if reps == 1:
            wp_blk = wpT
        else:
            wp_blk = jnp.zeros((PG, PG), f32)
            for r in range(reps):
                wp_blk = wp_blk.at[r * C:(r + 1) * C, r * C:(r + 1) * C].set(wpT)
        wp_blk = wp_blk.astype(bf16)
        bp_blk = jnp.tile(params["bp"].reshape(1, C).astype(f32), (1, reps))

        kernel = functools.partial(_flash_attn_kernel, fuse_proj=True,
                                   pg=PG, n_pg=Tq // PG)
        out_cs = pl.pallas_call(
            kernel,
            out_shape=jax.ShapeDtypeStruct((B, C, S), f32),
            grid=(B, n_q, n_kv),
            in_specs=[pl.BlockSpec((1, C, Tq), lambda b, qi, ki: (b, 0, qi)),  # x (residual)
                      q_spec, k_spec, v_spec,
                      const3((PG, PG)), const3((1, PG))],
            out_specs=o_spec,
            scratch_shapes=scratch,
            compiler_params=cparams,
            cost_estimate=cost,
        )(x_cs, qkv, qkv, qkv, wp_blk, bp_blk)
        # Note: x_cs and out_cs share shape/dtype/block mapping, so input_output_aliases
        # ={0: 0} would be legal; skipped because x is a jit parameter here and XLA
        # would insert a defensive copy, negating the win.
        return out_cs.reshape(B, C, H, W)                  # flat relabel, free

    # ---- general-shape fallback (S % C != 0): proj + residual in a second kernel ----
    kernel = functools.partial(_flash_attn_kernel, fuse_proj=False, pg=0, n_pg=0)
    aT = pl.pallas_call(
        kernel,
        out_shape=jax.ShapeDtypeStruct((B, C, S), bf16),
        grid=(B, n_q, n_kv),
        in_specs=[q_spec, k_spec, v_spec],
        out_specs=o_spec,
        scratch_shapes=scratch,
        compiler_params=cparams,
        cost_estimate=cost,
    )(qkv, qkv, qkv)

    # The PyTorch pre-proj scramble is a flat relabel of the channels-major attention
    # output, so both reshapes below are free.
    a_scr = aT.reshape(B, S, C)
    x_flat = x.astype(f32).reshape(B, S, C)
    wpT_bf = params["wp"].T.astype(bf16)
    bp_row = params["bp"].reshape(1, C).astype(f32)
    Tr = _pick_tile(S, 512, 8)
    out_flat = pl.pallas_call(
        _proj_residual_kernel,
        out_shape=jax.ShapeDtypeStruct((B, S, C), f32),
        grid=(B, S // Tr),
        in_specs=[pl.BlockSpec((1, Tr, C), lambda b, r: (b, r, 0)),
                  pl.BlockSpec((1, Tr, C), lambda b, r: (b, r, 0)),
                  pl.BlockSpec((C, C), lambda b, r: (0, 0)),
                  pl.BlockSpec((1, C), lambda b, r: (0, 0))],
        out_specs=pl.BlockSpec((1, Tr, C), lambda b, r: (b, r, 0)),
        compiler_params=pltpu.CompilerParams(
            dimension_semantics=("parallel", "parallel"), vmem_limit_bytes=vlim),
    )(a_scr, x_flat, wpT_bf, bp_row)
    return out_flat.reshape(B, C, H, W)


# -------------------- pure-JAX reference (for correctness check) --------------------
def ref_forward(x, params):
    B, C, H, W = x.shape
    G = GROUPS
    Cg = C // G
    xg = x.reshape(B, G, Cg, H, W)
    mean = xg.mean(axis=(2, 3, 4), keepdims=True)
    var = xg.var(axis=(2, 3, 4), keepdims=True)          # biased, like PyTorch
    hn = (xg - mean) / jnp.sqrt(var + EPS)
    hn = hn.reshape(B, C, H, W) * params["gamma"][None, :, None, None] \
         + params["beta"][None, :, None, None]
    h = jnp.transpose(hn, (0, 2, 3, 1)).reshape(B, H * W, C)
    q = h @ params["wq"].T + params["bq"]
    k = h @ params["wk"].T + params["bk"]
    v = h @ params["wv"].T + params["bv"]
    w = jnp.einsum("bsc,btc->bst", q, k) * (C ** -0.5)
    w = jax.nn.softmax(w, axis=-1)
    a = jnp.einsum("bst,btc->bsc", w, v)
    a = a.reshape(B, H, W, C).transpose(0, 3, 1, 2).reshape(B, H * W, C)
    p = a @ params["wp"].T + params["bp"]
    return x + p.reshape(B, C, H, W)


if __name__ == "__main__":
    # GroupNorm(32) requires C % 32 == 0; H*W % C == 0 exercises the fully fused path
    # (2 query tiles x 2 kv tiles -> multi-step online softmax is exercised too).
    B, C, H, W = 2, 64, 16, 16
    key = jax.random.PRNGKey(0)
    keys = jax.random.split(key, 12)

    def lin(kw, kb, fan_in):
        bound = 1.0 / np.sqrt(fan_in)
        w = jax.random.uniform(kw, (C, C), jnp.float32, -bound, bound)
        b = jax.random.uniform(kb, (C,), jnp.float32, -bound, bound)
        return w, b

    wq, bq = lin(keys[0], keys[1], C)
    wk, bk = lin(keys[2], keys[3], C)
    wv, bv = lin(keys[4], keys[5], C)
    wp, bp = lin(keys[6], keys[7], C)
    gamma = 1.0 + 0.1 * jax.random.normal(keys[8], (C,), jnp.float32)
    beta = 0.1 * jax.random.normal(keys[9], (C,), jnp.float32)
    params = dict(gamma=gamma, beta=beta, wq=wq, bq=bq, wk=wk, bk=bk,
                  wv=wv, bv=bv, wp=wp, bp=bp)

    x = jax.random.normal(keys[10], (B, C, H, W), jnp.float32)

    fn = jax.jit(attn_block)
    out = jax.block_until_ready(fn(x, params))
    ref = jax.block_until_ready(ref_forward(x, params))

    # Intentional precision contract: bf16 MXU operands (f32 accumulation) + approx
    # EUP reciprocal => slightly looser tolerance than a pure-f32 reference.
    np.testing.assert_allclose(np.asarray(out), np.asarray(ref), rtol=2e-2, atol=2e-2)
    print("KERNEL_OK")
</pallas_src>

<mosaic_0001>
module attributes {stable_mosaic.version = 11 : i64} {
  func.func @_norm_qkv_kernel(%arg0: i32, %arg1: memref<1x64x256xf32, #tpu.memory_space<vmem>>, %arg2: memref<64x64xf32, #tpu.memory_space<vmem>>, %arg3: memref<64x1xf32, #tpu.memory_space<vmem>>, %arg4: memref<64x1xf32, #tpu.memory_space<vmem>>, %arg5: memref<192x64xbf16, #tpu.memory_space<vmem>>, %arg6: memref<192x1xf32, #tpu.memory_space<vmem>>, %arg7: memref<1x192x256xbf16, #tpu.memory_space<vmem>>) attributes {dimension_semantics = [#tpu.dimension_semantics<parallel>], iteration_bounds = array<i64: 2>, scalar_prefetch = 0 : i64, scratch_operands = 0 : i64, tpu.core_type = #tpu.core_type<tc>, window_params = [{transform_indices = @transform_0, window_bounds = array<i64: 1, 64, 256>}, {pipeline_mode = #tpu.pipeline_mode<synchronous>, transform_indices = @transform_1, window_bounds = array<i64: 64, 64>}, {pipeline_mode = #tpu.pipeline_mode<synchronous>, transform_indices = @transform_2, window_bounds = array<i64: 64, 1>}, {pipeline_mode = #tpu.pipeline_mode<synchronous>, transform_indices = @transform_3, window_bounds = array<i64: 64, 1>}, {pipeline_mode = #tpu.pipeline_mode<synchronous>, transform_indices = @transform_4, window_bounds = array<i64: 192, 64>}, {pipeline_mode = #tpu.pipeline_mode<synchronous>, transform_indices = @transform_5, window_bounds = array<i64: 192, 1>}, {transform_indices = @transform_6, window_bounds = array<i64: 1, 192, 256>}]} {
    %c0 = arith.constant 0 : index
    %c0_0 = arith.constant 0 : index
    %c0_1 = arith.constant 0 : index
    %0 = vector.load %arg1[%c0, %c0_0, %c0_1] : memref<1x64x256xf32, #tpu.memory_space<vmem>>, vector<1x64x256xf32>
    %1 = vector.shape_cast %0 : vector<1x64x256xf32> to vector<64x256xf32>
    %c0_2 = arith.constant 0 : index
    %c0_3 = arith.constant 0 : index
    %2 = vector.load %arg2[%c0_2, %c0_3] : memref<64x64xf32, #tpu.memory_space<vmem>>, vector<64x64xf32>
    %cst = arith.constant dense<0.000000e+00> : vector<64xf32>
    %3 = vector.multi_reduction <add>, %1, %cst [1] : vector<64x256xf32> to vector<64xf32>
    %4 = vector.shape_cast %3 : vector<64xf32> to vector<64x1xf32>
    %cst_4 = arith.constant dense<0.000000e+00> : vector<64x1xf32>
    %5 = tpu.matmul %2, %4, %cst_4 {dimension_numbers = #tpu.dot_dimension_numbers<[1], [0], [0], [1], [0, 0, 1, 1], [], []>} : vector<64x64xf32>, vector<64x1xf32>, vector<64x1xf32> -> vector<64x1xf32>
    %6 = vector.broadcast %5 : vector<64x1xf32> to vector<64x256xf32>
    %7 = arith.subf %1, %6 : vector<64x256xf32>
    %8 = arith.mulf %7, %7 : vector<64x256xf32>
    %cst_5 = arith.constant dense<0.000000e+00> : vector<64xf32>
    %9 = vector.multi_reduction <add>, %8, %cst_5 [1] : vector<64x256xf32> to vector<64xf32>
    %10 = vector.shape_cast %9 : vector<64xf32> to vector<64x1xf32>
    %cst_6 = arith.constant dense<0.000000e+00> : vector<64x1xf32>
    %11 = tpu.matmul %2, %10, %cst_6 {dimension_numbers = #tpu.dot_dimension_numbers<[1], [0], [0], [1], [0, 0, 1, 1], [], []>} : vector<64x64xf32>, vector<64x1xf32>, vector<64x1xf32> -> vector<64x1xf32>
    %cst_7 = arith.constant 9.99999974E-6 : f32
    %12 = vector.broadcast %cst_7 : f32 to vector<64x1xf32>
    %13 = arith.addf %11, %12 : vector<64x1xf32>
    %14 = math.rsqrt %13 : vector<64x1xf32>
    %c0_8 = arith.constant 0 : index
    %c0_9 = arith.constant 0 : index
    %15 = vector.load %arg3[%c0_8, %c0_9] : memref<64x1xf32, #tpu.memory_space<vmem>>, vector<64x1xf32>
    %16 = arith.mulf %14, %15 : vector<64x1xf32>
    %17 = vector.broadcast %16 : vector<64x1xf32> to vector<64x256xf32>
    %18 = arith.mulf %7, %17 : vector<64x256xf32>
    %c0_10 = arith.constant 0 : index
    %c0_11 = arith.constant 0 : index
    %19 = vector.load %arg4[%c0_10, %c0_11] : memref<64x1xf32, #tpu.memory_space<vmem>>, vector<64x1xf32>
    %20 = vector.broadcast %19 : vector<64x1xf32> to vector<64x256xf32>
    %21 = arith.addf %18, %20 : vector<64x256xf32>
    %22 = arith.truncf %21 : vector<64x256xf32> to vector<64x256xbf16>
    %c0_12 = arith.constant 0 : index
    %c0_13 = arith.constant 0 : index
    %23 = vector.load %arg5[%c0_12, %c0_13] : memref<192x64xbf16, #tpu.memory_space<vmem>>, vector<192x64xbf16>
    %cst_14 = arith.constant dense<0.000000e+00> : vector<192x256xf32>
    %24 = tpu.matmul %23, %22, %cst_14 {dimension_numbers = #tpu.dot_dimension_numbers<[1], [0], [0], [1], [0, 0, 1, 1], [], []>} : vector<192x64xbf16>, vector<64x256xbf16>, vector<192x256xf32> -> vector<192x256xf32>
    %c0_15 = arith.constant 0 : index
    %c0_16 = arith.constant 0 : index
    %25 = vector.load %arg6[%c0_15, %c0_16] : memref<192x1xf32, #tpu.memory_space<vmem>>, vector<192x1xf32>
    %26 = vector.broadcast %25 : vector<192x1xf32> to vector<192x256xf32>
    %27 = arith.addf %24, %26 : vector<192x256xf32>
    %28 = arith.truncf %27 : vector<192x256xf32> to vector<192x256xbf16>
    %c0_17 = arith.constant 0 : index
    %c0_18 = arith.constant 0 : index
    %c0_19 = arith.constant 0 : index
    %29 = vector.load %arg7[%c0_17, %c0_18, %c0_19] : memref<1x192x256xbf16, #tpu.memory_space<vmem>>, vector<1x192x256xbf16>
    %30 = vector.shape_cast %29 : vector<1x192x256xbf16> to vector<192x256xbf16>
    %31 = vector.shape_cast %28 : vector<192x256xbf16> to vector<1x192x256xbf16>
    tpu.vector_store %arg7[%c0_17, %c0_18, %c0_19], %31 {strides = array<i32>} : memref<1x192x256xbf16, #tpu.memory_space<vmem>>, vector<1x192x256xbf16>,
    return
  }
  func.func @transform_0(%arg0: i32) -> (i32, i32, i32) {
    %c0_i32 = arith.constant 0 : i32
    %c0_i32_0 = arith.constant 0 : i32
    %c0_i32_1 = arith.constant 0 : i32
    return %arg0, %c0_i32, %c0_i32_0 : i32, i32, i32
  }
  func.func @transform_1(%arg0: i32) -> (i32, i32) {
    %c0_i32 = arith.constant 0 : i32
    %c0_i32_0 = arith.constant 0 : i32
    %c0_i32_1 = arith.constant 0 : i32
    return %c0_i32, %c0_i32_0 : i32, i32
  }
  func.func @transform_2(%arg0: i32) -> (i32, i32) {
    %c0_i32 = arith.constant 0 : i32
    %c0_i32_0 = arith.constant 0 : i32
    %c0_i32_1 = arith.constant 0 : i32
    return %c0_i32, %c0_i32_0 : i32, i32
  }
  func.func @transform_3(%arg0: i32) -> (i32, i32) {
    %c0_i32 = arith.constant 0 : i32
    %c0_i32_0 = arith.constant 0 : i32
    %c0_i32_1 = arith.constant 0 : i32
    return %c0_i32, %c0_i32_0 : i32, i32
  }
  func.func @transform_4(%arg0: i32) -> (i32, i32) {
    %c0_i32 = arith.constant 0 : i32
    %c0_i32_0 = arith.constant 0 : i32
    %c0_i32_1 = arith.constant 0 : i32
    return %c0_i32, %c0_i32_0 : i32, i32
  }
  func.func @transform_5(%arg0: i32) -> (i32, i32) {
    %c0_i32 = arith.constant 0 : i32
    %c0_i32_0 = arith.constant 0 : i32
    %c0_i32_1 = arith.constant 0 : i32
    return %c0_i32, %c0_i32_0 : i32, i32
  }
  func.func @transform_6(%arg0: i32) -> (i32, i32, i32) {
    %c0_i32 = arith.constant 0 : i32
    %c0_i32_0 = arith.constant 0 : i32
    %c0_i32_1 = arith.constant 0 : i32
    return %arg0, %c0_i32, %c0_i32_0 : i32, i32, i32
  }
}

module attributes {stable_mosaic.version = 11 : i64} {
  func.func @_flash_attn_kernel(%arg0: i32, %arg1: i32, %arg2: i32, %arg3: memref<1x64x128xf32, #tpu.memory_space<vmem>>, %arg4: memref<1x64x128xbf16, #tpu.memory_space<vmem>>, %arg5: memref<1x64x128xbf16, #tpu.memory_space<vmem>>, %arg6: memref<1x64x128xbf16, #tpu.memory_space<vmem>>, %arg7: memref<128x128xbf16, #tpu.memory_space<vmem>>, %arg8: memref<1x128xf32, #tpu.memory_space<vmem>>, %arg9: memref<1x64x128xf32, #tpu.memory_space<vmem>>, %arg10: memref<1x128xf32, #tpu.memory_space<vmem>>, %arg11: memref<1x128xf32, #tpu.memory_space<vmem>>, %arg12: memref<64x128xf32, #tpu.memory_space<vmem>>) attributes {dimension_semantics = [#tpu.dimension_semantics<parallel>, #tpu.dimension_semantics<parallel>, #tpu.dimension_semantics<arbitrary>], iteration_bounds = array<i64: 2, 2, 2>, scalar_prefetch = 0 : i64, scratch_operands = 3 : i64, tpu.core_type = #tpu.core_type<tc>, window_params = [{transform_indices = @transform_0, window_bounds = array<i64: 1, 64, 128>}, {transform_indices = @transform_1, window_bounds = array<i64: 1, 64, 128>}, {transform_indices = @transform_2, window_bounds = array<i64: 1, 64, 128>}, {transform_indices = @transform_3, window_bounds = array<i64: 1, 64, 128>}, {pipeline_mode = #tpu.pipeline_mode<synchronous>, transform_indices = @transform_4, window_bounds = array<i64: 128, 128>}, {pipeline_mode = #tpu.pipeline_mode<synchronous>, transform_indices = @transform_5, window_bounds = array<i64: 1, 128>}, {transform_indices = @transform_6, window_bounds = array<i64: 1, 64, 128>}]} {
    %c0_i32 = arith.constant 0 : i32
    %0 = arith.cmpi eq, %arg2, %c0_i32 : i32
    %1 = arith.extui %0 : i1 to i32
    %c0_i32_0 = arith.constant 0 : i32
    %2 = arith.cmpi ne, %1, %c0_i32_0 : i32
    scf.if %2 {
      %cst_27 = arith.constant 0xFF800000 : f32
      %37 = vector.broadcast %cst_27 : f32 to vector<1x128xf32>
      %c0_28 = arith.constant 0 : index
      %c0_29 = arith.constant 0 : index
      %38 = vector.load %arg10[%c0_28, %c0_29] : memref<1x128xf32, #tpu.memory_space<vmem>>, vector<1x128xf32>
      tpu.vector_store %arg10[%c0_28, %c0_29], %37 {strides = array<i32>} : memref<1x128xf32, #tpu.memory_space<vmem>>, vector<1x128xf32>,
      %cst_30 = arith.constant 0.000000e+00 : f32
      %39 = vector.broadcast %cst_30 : f32 to vector<1x128xf32>
      %c0_31 = arith.constant 0 : index
      %c0_32 = arith.constant 0 : index
      %40 = vector.load %arg11[%c0_31, %c0_32] : memref<1x128xf32, #tpu.memory_space<vmem>>, vector<1x128xf32>
      tpu.vector_store %arg11[%c0_31, %c0_32], %39 {strides = array<i32>} : memref<1x128xf32, #tpu.memory_space<vmem>>, vector<1x128xf32>,
      %cst_33 = arith.constant 0.000000e+00 : f32
      %41 = vector.broadcast %cst_33 : f32 to vector<64x128xf32>
      %c0_34 = arith.constant 0 : index
      %c0_35 = arith.constant 0 : index
      %42 = vector.load %arg12[%c0_34, %c0_35] : memref<64x128xf32, #tpu.memory_space<vmem>>, vector<64x128xf32>
      tpu.vector_store %arg12[%c0_34, %c0_35], %41 {strides = array<i32>} : memref<64x128xf32, #tpu.memory_space<vmem>>, vector<64x128xf32>,
    } else {
    }
    %c0 = arith.constant 0 : index
    %c0_1 = arith.constant 0 : index
    %c0_2 = arith.constant 0 : index
    %3 = vector.load %arg4[%c0, %c0_1, %c0_2] : memref<1x64x128xbf16, #tpu.memory_space<vmem>>, vector<1x64x128xbf16>
    %4 = vector.shape_cast %3 : vector<1x64x128xbf16> to vector<64x128xbf16>
    %c0_3 = arith.constant 0 : index
    %c0_4 = arith.constant 0 : index
    %c0_5 = arith.constant 0 : index
    %5 = vector.load %arg5[%c0_3, %c0_4, %c0_5] : memref<1x64x128xbf16, #tpu.memory_space<vmem>>, vector<1x64x128xbf16>
    %6 = vector.shape_cast %5 : vector<1x64x128xbf16> to vector<64x128xbf16>
    %c0_6 = arith.constant 0 : index
    %c0_7 = arith.constant 0 : index
    %c0_8 = arith.constant 0 : index
    %7 = vector.load %arg6[%c0_6, %c0_7, %c0_8] : memref<1x64x128xbf16, #tpu.memory_space<vmem>>, vector<1x64x128xbf16>
    %8 = vector.shape_cast %7 : vector<1x64x128xbf16> to vector<64x128xbf16>
    %cst = arith.constant dense<0.000000e+00> : vector<128x128xf32>
    %9 = tpu.matmul %6, %4, %cst {dimension_numbers = #tpu.dot_dimension_numbers<[0], [0], [1], [1], [0, 1, 1, 1], [], []>} : vector<64x128xbf16>, vector<64x128xbf16>, vector<128x128xf32> -> vector<128x128xf32>
    %c0_9 = arith.constant 0 : index
    %c0_10 = arith.constant 0 : index
    %10 = vector.load %arg10[%c0_9, %c0_10] : memref<1x128xf32, #tpu.memory_space<vmem>>, vector<1x128xf32>
    %cst_11 = arith.constant dense<0xFF800000> : vector<128xf32>
    %11 = vector.multi_reduction <maximumf>, %9, %cst_11 [0] : vector<128x128xf32> to vector<128xf32>
    %12 = vector.shape_cast %11 : vector<128xf32> to vector<1x128xf32>
    %13 = arith.maximumf %10, %12 : vector<1x128xf32>
    %c0_12 = arith.constant 0 : index
    %c0_13 = arith.constant 0 : index
    %14 = vector.load %arg10[%c0_12, %c0_13] : memref<1x128xf32, #tpu.memory_space<vmem>>, vector<1x128xf32>
    %15 = arith.subf %14, %13 : vector<1x128xf32>
    %16 = math.exp %15 : vector<1x128xf32>
    %17 = vector.broadcast %13 : vector<1x128xf32> to vector<128x128xf32>
    %18 = arith.subf %9, %17 : vector<128x128xf32>
    %19 = math.exp %18 : vector<128x128xf32>
    %c0_14 = arith.constant 0 : index
    %c0_15 = arith.constant 0 : index
    %20 = vector.load %arg11[%c0_14, %c0_15] : memref<1x128xf32, #tpu.memory_space<vmem>>, vector<1x128xf32>
    %21 = arith.mulf %16, %20 : vector<1x128xf32>
    %cst_16 = arith.constant dense<0.000000e+00> : vector<128xf32>
    %22 = vector.multi_reduction <add>, %19, %cst_16 [0] : vector<128x128xf32> to vector<128xf32>
    %23 = vector.shape_cast %22 : vector<128xf32> to vector<1x128xf32>
    %24 = arith.addf %21, %23 : vector<1x128xf32>
    %c0_17 = arith.constant 0 : index
    %c0_18 = arith.constant 0 : index
    %25 = vector.load %arg11[%c0_17, %c0_18] : memref<1x128xf32, #tpu.memory_space<vmem>>, vector<1x128xf32>
    tpu.vector_store %arg11[%c0_17, %c0_18], %24 {strides = array<i32>} : memref<1x128xf32, #tpu.memory_space<vmem>>, vector<1x128xf32>,
    %c0_19 = arith.constant 0 : index
    %c0_20 = arith.constant 0 : index
    %26 = vector.load %arg12[%c0_19, %c0_20] : memref<64x128xf32, #tpu.memory_space<vmem>>, vector<64x128xf32>
    %27 = vector.broadcast %16 : vector<1x128xf32> to vector<64x128xf32>
    %28 = arith.mulf %27, %26 : vector<64x128xf32>
    %29 = arith.truncf %19 : vector<128x128xf32> to vector<128x128xbf16>
    %cst_21 = arith.constant dense<0.000000e+00> : vector<64x128xf32>
    %30 = tpu.matmul %8, %29, %cst_21 {dimension_numbers = #tpu.dot_dimension_numbers<[1], [0], [0], [1], [0, 0, 1, 1], [], []>} : vector<64x128xbf16>, vector<128x128xbf16>, vector<64x128xf32> -> vector<64x128xf32>
    %31 = arith.addf %28, %30 : vector<64x128xf32>
    %c0_22 = arith.constant 0 : index
    %c0_23 = arith.constant 0 : index
    %32 = vector.load %arg12[%c0_22, %c0_23] : memref<64x128xf32, #tpu.memory_space<vmem>>, vector<64x128xf32>
    tpu.vector_store %arg12[%c0_22, %c0_23], %31 {strides = array<i32>} : memref<64x128xf32, #tpu.memory_space<vmem>>, vector<64x128xf32>,
    %c0_24 = arith.constant 0 : index
    %c0_25 = arith.constant 0 : index
    %33 = vector.load %arg10[%c0_24, %c0_25] : memref<1x128xf32, #tpu.memory_space<vmem>>, vector<1x128xf32>
    tpu.vector_store %arg10[%c0_24, %c0_25], %13 {strides = array<i32>} : memref<1x128xf32, #tpu.memory_space<vmem>>, vector<1x128xf32>,
    %c1_i32 = arith.constant 1 : i32
    %34 = arith.cmpi eq, %arg2, %c1_i32 : i32
    %35 = arith.extui %34 : i1 to i32
    %c0_i32_26 = arith.constant 0 : i32
    %36 = arith.cmpi ne, %35, %c0_i32_26 : i32
    scf.if %36 {
      %c0_27 = arith.constant 0 : index
      %c0_28 = arith.constant 0 : index
      %37 = vector.load %arg11[%c0_27, %c0_28] : memref<1x128xf32, #tpu.memory_space<vmem>>, vector<1x128xf32>
      %38 = tpu.reciprocal %37 {approx = true} : vector<1x128xf32> -> vector<1x128xf32>
      %c0_29 = arith.constant 0 : index
      %c0_30 = arith.constant 0 : index
      %39 = vector.load %arg12[%c0_29, %c0_30] : memref<64x128xf32, #tpu.memory_space<vmem>>, vector<64x128xf32>
      %40 = vector.broadcast %38 : vector<1x128xf32> to vector<64x128xf32>
      %41 = arith.mulf %39, %40 : vector<64x128xf32>
      %42 = arith.truncf %41 : vector<64x128xf32> to vector<64x128xbf16>
      %c0_31 = arith.constant 0 : index
      %c0_32 = arith.constant 0 : index
      %43 = vector.load %arg7[%c0_31, %c0_32] : memref<128x128xbf16, #tpu.memory_space<vmem>>, vector<128x128xbf16>
      %c0_33 = arith.constant 0 : index
      %c0_34 = arith.constant 0 : index
      %44 = vector.load %arg8[%c0_33, %c0_34] : memref<1x128xf32, #tpu.memory_space<vmem>>, vector<1x128xf32>
      %cst_35 = arith.constant dense<0.000000e+00> : vector<64x128xf32>
      %45 = tpu.matmul %42, %43, %cst_35 {dimension_numbers = #tpu.dot_dimension_numbers<[1], [0], [0], [1], [0, 0, 1, 1], [], []>} : vector<64x128xbf16>, vector<128x128xbf16>, vector<64x128xf32> -> vector<64x128xf32>
      %46 = vector.broadcast %44 : vector<1x128xf32> to vector<64x128xf32>
      %47 = arith.addf %45, %46 : vector<64x128xf32>
      %c0_36 = arith.constant 0 : index
      %c0_37 = arith.constant 0 : index
      %c0_38 = arith.constant 0 : index
      %48 = vector.load %arg3[%c0_36, %c0_37, %c0_38] : memref<1x64x128xf32, #tpu.memory_space<vmem>>, vector<1x64x128xf32>
      %49 = vector.shape_cast %48 : vector<1x64x128xf32> to vector<64x128xf32>
      %50 = arith.addf %49, %47 : vector<64x128xf32>
      %c0_39 = arith.constant 0 : index
      %c0_40 = arith.constant 0 : index
      %c0_41 = arith.constant 0 : index
      %51 = vector.load %arg9[%c0_39, %c0_40, %c0_41] : memref<1x64x128xf32, #tpu.memory_space<vmem>>, vector<1x64x128xf32>
      %52 = vector.shape_cast %51 : vector<1x64x128xf32> to vector<64x128xf32>
      %53 = vector.shape_cast %50 : vector<64x128xf32> to vector<1x64x128xf32>
      tpu.vector_store %arg9[%c0_39, %c0_40, %c0_41], %53 {strides = array<i32>} : memref<1x64x128xf32, #tpu.memory_space<vmem>>, vector<1x64x128xf32>,
    } else {
    }
    return
  }
  func.func @transform_0(%arg0: i32, %arg1: i32, %arg2: i32) -> (i32, i32, i32) {
    %c0_i32 = arith.constant 0 : i32
    %c0_i32_0 = arith.constant 0 : i32
    return %arg0, %c0_i32, %arg1 : i32, i32, i32
  }
  func.func @transform_1(%arg0: i32, %arg1: i32, %arg2: i32) -> (i32, i32, i32) {
    %c0_i32 = arith.constant 0 : i32
    %c0_i32_0 = arith.constant 0 : i32
    return %arg0, %c0_i32, %arg1 : i32, i32, i32
  }
  func.func @transform_2(%arg0: i32, %arg1: i32, %arg2: i32) -> (i32, i32, i32) {
    %c1_i32 = arith.constant 1 : i32
    %c0_i32 = arith.constant 0 : i32
    return %arg0, %c1_i32, %arg2 : i32, i32, i32
  }
  func.func @transform_3(%arg0: i32, %arg1: i32, %arg2: i32) -> (i32, i32, i32) {
    %c2_i32 = arith.constant 2 : i32
    %c0_i32 = arith.constant 0 : i32
    return %arg0, %c2_i32, %arg2 : i32, i32, i32
  }
  func.func @transform_4(%arg0: i32, %arg1: i32, %arg2: i32) -> (i32, i32) {
    %c0_i32 = arith.constant 0 : i32
    %c0_i32_0 = arith.constant 0 : i32
    %c0_i32_1 = arith.constant 0 : i32
    return %c0_i32, %c0_i32_0 : i32, i32
  }
  func.func @transform_5(%arg0: i32, %arg1: i32, %arg2: i32) -> (i32, i32) {
    %c0_i32 = arith.constant 0 : i32
    %c0_i32_0 = arith.constant 0 : i32
    %c0_i32_1 = arith.constant 0 : i32
    return %c0_i32, %c0_i32_0 : i32, i32
  }
  func.func @transform_6(%arg0: i32, %arg1: i32, %arg2: i32) -> (i32, i32, i32) {
    %c0_i32 = arith.constant 0 : i32
    %c0_i32_0 = arith.constant 0 : i32
    return %arg0, %c0_i32, %arg1 : i32, i32, i32
  }
}

</mosaic_0001>

<llo_original>
// kernel: attn_block.2
$region0: #{attn_block.2}
  #allocation0 [shape = 'u32[]', space=smem, size = 0x4, offset = 0x4, fixed_abs, tag = 'smem constant byte address 0x4 - core index']
  #allocation1 [shape = 'u32[144,128]{1,0:T(1,128)}', space=vmem, size = 0x12000, scoped, tag = 'internal scratch']
  %s0 = inlined_call_operand.vmem [shape: f32[2,64,256], index: 0, kind: input, shape index: {}]
  %s1 = inlined_call_operand.vmem [shape: f32[64,64], index: 1, kind: input, shape index: {}]
  %s2 = inlined_call_operand.vmem [shape: f32[64,1], index: 2, kind: input, shape index: {}]
  %s3 = inlined_call_operand.vmem [shape: f32[64,1], index: 3, kind: input, shape index: {}]
  %s4 = inlined_call_operand.vmem [shape: bf16[192,64], index: 4, kind: input, shape index: {}]
  %s5 = inlined_call_operand.vmem [shape: f32[192,1], index: 5, kind: input, shape index: {}]
  %s6 = inlined_call_operand.vmem [shape: bf16[2,192,256], index: 6, kind: output, shape index: {}]
  %s7 = sld [smem:[#allocation0]]
  $region57: #{attn_block.2} parent=0
    _
  %s9 = ssub.s32 1, %s7
  %s10 = scalar_select 0, %s9, %s7
  loop: start=0, step=1, limit=4
  $region2: #{attn_block.2} parent=0 // loop_pre_header
    _
  $region3: #{attn_block.2} parent=0 // loop_header
    %s12 = sphi 0, %s16
    %p13 = scmp.ge.s32.totalorder %s12, 4
    %s22 = sphi 0, %s24
    %s25 = sphi 0, %s22
    %s26 = sphi 0, %s25
    %s42 = sphi 0, %s26
    %s46 = sphi 0, %s46
    %s48 = sphi 0, %s46
    %s49 = sphi 0, %s48
    %s63 = sphi 0, %s49
    %s67 = sphi 0, %s67
    %s69 = sphi 0, %s67
    %s70 = sphi 0, %s69
    %s84 = sphi 0, %s70
    %s88 = sphi 0, %s88
    %s90 = sphi 0, %s88
    %s91 = sphi 0, %s90
    %s105 = sphi 0, %s91
    %s109 = sphi 0, %s109
    %s111 = sphi 0, %s109
    %s112 = sphi 0, %s111
    %s126 = sphi 0, %s112
    %s130 = sphi 0, %s130
    %s132 = sphi 0, %s130
    %s133 = sphi 0, %s132
    %s147 = sphi 0, %s133
    %s153 = sphi 0, %s155
    %s156 = sphi 0, %s153
    %s157 = sphi 0, %s156
    %s173 = sphi 0, %s157
  $region4: #{attn_block.2} parent=0 // loop_header_branch
    %15 = sbr.rel (%p13) target = $region8
  $region5: #{attn_block.2} parent=0 // loop_body
    %s17 = ssub.s32 %s12, 1
    %s18 = ssub.s32 %s12, 2
    %s19 = sadd.s32 %s12, 1
    %s20 = ssub.s32 %s12, %s19
    %p21 = scmp.eq.s32.totalorder %s20, 0
    %s23 = sadd.s32 %s22, 1
    %s24 = scalar_select %p21, %s22, %s23
    %p27 = pneg %p21
    %p28 = scmp.eq.s32.totalorder %s12, 1
    %p29 = por %p27, %p28
    %p30 = scmp.ne.s32.totalorder %s22, %s25
    %p31 = scmp.eq.s32.totalorder %s12, 0
    %p32 = por %p30, %p31
    %p33 = scmp.ne.s32.totalorder %s22, %s25
    %p34 = scmp.eq.s32.totalorder %s17, 1
    %p35 = por %p33, %p34
    %p36 = scmp.ne.s32.totalorder %s25, %s26
    %p37 = scmp.eq.s32.totalorder %s17, 0
    %p38 = por %p36, %p37
    %p39 = scmp.ne.s32.totalorder %s25, %s26
    %p40 = scmp.eq.s32.totalorder %s18, 1
    %p41 = por %p39, %p40
    %p43 = scmp.ne.s32.totalorder %s26, %s42
    %p44 = scmp.eq.s32.totalorder %s18, 0
    %p45 = por %p43, %p44
    %s47 = sadd.s32 %s46, 1
    %p50 = scmp.eq.s32.totalorder %s12, 1
    %p51 = scmp.ne.s32.totalorder %s46, %s48
    %p52 = scmp.eq.s32.totalorder %s12, 0
    %p53 = por %p51, %p52
    %p54 = scmp.ne.s32.totalorder %s46, %s48
    %p55 = scmp.eq.s32.totalorder %s17, 1
    %p56 = por %p54, %p55
    %p57 = scmp.ne.s32.totalorder %s48, %s49
    %p58 = scmp.eq.s32.totalorder %s17, 0
    %p59 = por %p57, %p58
    %p60 = scmp.ne.s32.totalorder %s48, %s49
    %p61 = scmp.eq.s32.totalorder %s18, 1
    %p62 = por %p60, %p61
    %p64 = scmp.ne.s32.totalorder %s49, %s63
    %p65 = scmp.eq.s32.totalorder %s18, 0
    %p66 = por %p64, %p65
    %s68 = sadd.s32 %s67, 1
    %p71 = scmp.eq.s32.totalorder %s12, 1
    %p72 = scmp.ne.s32.totalorder %s67, %s69
    %p73 = scmp.eq.s32.totalorder %s12, 0
    %p74 = por %p72, %p73
    %p75 = scmp.ne.s32.totalorder %s67, %s69
    %p76 = scmp.eq.s32.totalorder %s17, 1
    %p77 = por %p75, %p76
    %p78 = scmp.ne.s32.totalorder %s69, %s70
    %p79 = scmp.eq.s32.totalorder %s17, 0
    %p80 = por %p78, %p79
    %p81 = scmp.ne.s32.totalorder %s69, %s70
    %p82 = scmp.eq.s32.totalorder %s18, 1
    %p83 = por %p81, %p82
    %p85 = scmp.ne.s32.totalorder %s70, %s84
    %p86 = scmp.eq.s32.totalorder %s18, 0
    %p87 = por %p85, %p86
    %s89 = sadd.s32 %s88, 1
    %p92 = scmp.eq.s32.totalorder %s12, 1
    %p93 = scmp.ne.s32.totalorder %s88, %s90
    %p94 = scmp.eq.s32.totalorder %s12, 0
    %p95 = por %p93, %p94
    %p96 = scmp.ne.s32.totalorder %s88, %s90
    %p97 = scmp.eq.s32.totalorder %s17, 1
    %p98 = por %p96, %p97
    %p99 = scmp.ne.s32.totalorder %s90, %s91
    %p100 = scmp.eq.s32.totalorder %s17, 0
    %p101 = por %p99, %p100
    %p102 = scmp.ne.s32.totalorder %s90, %s91
    %p103 = scmp.eq.s32.totalorder %s18, 1
    %p104 = por %p102, %p103
    %p106 = scmp.ne.s32.totalorder %s91, %s105
    %p107 = scmp.eq.s32.totalorder %s18, 0
    %p108 = por %p106, %p107
    %s110 = sadd.s32 %s109, 1
    %p113 = scmp.eq.s32.totalorder %s12, 1
    %p114 = scmp.ne.s32.totalorder %s109, %s111
    %p115 = scmp.eq.s32.totalorder %s12, 0
    %p116 = por %p114, %p115
    %p117 = scmp.ne.s32.totalorder %s109, %s111
    %p118 = scmp.eq.s32.totalorder %s17, 1
    %p119 = por %p117, %p118
    %p120 = scmp.ne.s32.totalorder %s111, %s112
    %p121 = scmp.eq.s32.totalorder %s17, 0
    %p122 = por %p120, %p121
    %p123 = scmp.ne.s32.totalorder %s111, %s112
    %p124 = scmp.eq.s32.totalorder %s18, 1
    %p125 = por %p123, %p124
    %p127 = scmp.ne.s32.totalorder %s112, %s126
    %p128 = scmp.eq.s32.totalorder %s18, 0
    %p129 = por %p127, %p128
    %s131 = sadd.s32 %s130, 1
    %p134 = scmp.eq.s32.totalorder %s12, 1
    %p135 = scmp.ne.s32.totalorder %s130, %s132
    %p136 = scmp.eq.s32.totalorder %s12, 0
    %p137 = por %p135, %p136
    %p138 = scmp.ne.s32.totalorder %s130, %s132
    %p139 = scmp.eq.s32.totalorder %s17, 1
    %p140 = por %p138, %p139
    %p141 = scmp.ne.s32.totalorder %s132, %s133
    %p142 = scmp.eq.s32.totalorder %s17, 0
    %p143 = por %p141, %p142
    %p144 = scmp.ne.s32.totalorder %s132, %s133
    %p145 = scmp.eq.s32.totalorder %s18, 1
    %p146 = por %p144, %p145
    %p148 = scmp.ne.s32.totalorder %s133, %s147
    %p149 = scmp.eq.s32.totalorder %s18, 0
    %p150 = por %p148, %p149
    %s151 = ssub.s32 %s12, %s19
    %p152 = scmp.eq.s32.totalorder %s151, 0
    %s154 = sadd.s32 %s153, 1
    %s155 = scalar_select %p152, %s153, %s154
    %p158 = pneg %p152
    %p159 = scmp.eq.s32.totalorder %s12, 1
    %p160 = por %p158, %p159
    %p161 = scmp.ne.s32.totalorder %s153, %s156
    %p162 = scmp.eq.s32.totalorder %s12, 0
    %p163 = por %p161, %p162
    %p164 = scmp.ne.s32.totalorder %s153, %s156
    %p165 = scmp.eq.s32.totalorder %s17, 1
    %p166 = por %p164, %p165
    %p167 = scmp.ne.s32.totalorder %s156, %s157
    %p168 = scmp.eq.s32.totalorder %s17, 0
    %p169 = por %p167, %p168
    %p170 = scmp.ne.s32.totalorder %s156, %s157
    %p171 = scmp.eq.s32.totalorder %s18, 1
    %p172 = por %p170, %p171
    %p174 = scmp.ne.s32.totalorder %s157, %s173
    %p175 = scmp.eq.s32.totalorder %s18, 0
    %p176 = por %p174, %p175
    %p177 = scmp.le.s32.totalorder 1, %s12
    %p178 = scmp.lt.s32.totalorder %s12, 3
    %p179 = pnand %p177, %p178
    %p180 = pneg %p179
    // Predicated region
    $region9: #{attn_block.2} parent=5 // pred_check
      _
    $region10: #{attn_block.2} parent=5 // pred_check_branch
      %182 = sbr.rel (%p179) target = $region12
    $region11: #{attn_block.2} parent=5 // pred_region
      %s183 = ssub.s32 %s12, 1
      // Predicated region
      $region13: #{attn_block.2} parent=11 // pred_check
        %p184 = pneg %p59
      $region14: #{attn_block.2} parent=11 // pred_check_branch
        %186 = sbr.rel (%p184) target = $region16
      $region15: #{attn_block.2} parent=11 // pred_region
        _
      $region16: #{attn_block.2} parent=11 // pred_fallthru
        _
      // Predicated region
      $region17: #{attn_block.2} parent=11 // pred_check
        %p187 = pneg %p80
      $region18: #{attn_block.2} parent=11 // pred_check_branch
        %189 = sbr.rel (%p187) target = $region20
      $region19: #{attn_block.2} parent=11 // pred_region
        _
      $region20: #{attn_block.2} parent=11 // pred_fallthru
        _
      // Predicated region
      $region21: #{attn_block.2} parent=11 // pred_check
        %p190 = pneg %p101
      $region22: #{attn_block.2} parent=11 // pred_check_branch
        %192 = sbr.rel (%p190) target = $region24
      $region23: #{attn_block.2} parent=11 // pred_region
        _
      $region24: #{attn_block.2} parent=11 // pred_fallthru
        _
      // Predicated region
      $region25: #{attn_block.2} parent=11 // pred_check
        %p193 = pneg %p122
      $region26: #{attn_block.2} parent=11 // pred_check_branch
        %195 = sbr.rel (%p193) target = $region28
      $region27: #{attn_block.2} parent=11 // pred_region
        _
      $region28: #{attn_block.2} parent=11 // pred_fallthru
        _
      // Predicated region
      $region29: #{attn_block.2} parent=11 // pred_check
        %p196 = pneg %p143
      $region30: #{attn_block.2} parent=11 // pred_check_branch
        %198 = sbr.rel (%p196) target = $region32
      $region31: #{attn_block.2} parent=11 // pred_region
        _
      $region32: #{attn_block.2} parent=11 // pred_fallthru
        _
    $region12: #{attn_block.2} parent=5 // pred_fallthru
      _
    %p199 = scmp.lt.s32.totalorder %s12, 2
    // Predicated region
    $region33: #{attn_block.2} parent=5 // pred_check
      %p200 = pneg %p199
    $region34: #{attn_block.2} parent=5 // pred_check_branch
      %202 = sbr.rel (%p200) target = $region36
    $region35: #{attn_block.2} parent=5 // pred_region
      // Predicated region
      $region37: #{attn_block.2} parent=35 // pred_check
        %p203 = pneg %p32
      $region38: #{attn_block.2} parent=35 // pred_check_branch
        %205 = sbr.rel (%p203) target = $region40
      $region39: #{attn_block.2} parent=35 // pred_region
        %p206 = scmp.lt.s32.totalorder %s12, 1
        %s207 = scalar_select %p206, %s12, 1
        %s208 = smul.addr %s207, 16
        %s209 = smul.addr %s208, 8
        %s210 = scalar_lea.vmem %s0, %s209
      $region40: #{attn_block.2} parent=35 // pred_fallthru
        _
    $region36: #{attn_block.2} parent=5 // pred_fallthru
      _
    %p211 = scmp.le.s32.totalorder 1, %s12
    %p212 = scmp.lt.s32.totalorder %s12, 3
    %p213 = pnand %p211, %p212
    %p214 = pneg %p213
    // Predicated region
    $region41: #{attn_block.2} parent=5 // pred_check
      _
    $region42: #{attn_block.2} parent=5 // pred_check_branch
      %216 = sbr.rel (%p213) target = $region44
    $region43: #{attn_block.2} parent=5 // pred_region
      %s217 = ssub.s32 %s12, 1
      %p218 = scmp.lt.s32.totalorder %s17, 1
      %s219 = scalar_select %p218, %s17, 1
      %s220 = smul.addr %s219, 16
      %s221 = smul.addr %s220, 8
      %s222 = scalar_lea.vmem %s0, %s221
      %p223 = pneg %p38
      %p224 = pneg %p35
      %p225 = pneg %p59
      %p226 = pneg %p56
      %p227 = pneg %p80
      %p228 = pneg %p77
      %p229 = pneg %p101
      %p230 = pneg %p98
      %p231 = pneg %p122
      %p232 = pneg %p119
      %p233 = pneg %p143
      %p234 = pneg %p140
      %p235 = pneg %p169
      %p236 = pneg %p166
      %p237 = scmp.lt.s32.totalorder %s17, 1
      %s238 = scalar_select %p237, %s17, 1
      %s239 = smul.addr %s238, 48
      %s240 = smul.addr %s239, 4
      %s241 = scalar_lea.vmem %s6, %s240
      %p242 = scmp.lt.s32.totalorder %s17, 1
      %s243 = scalar_select %p242, %s17, 1
      %s244 = smul.addr %s243, 16
      %s245 = smul.addr %s244, 8
      %s246 = scalar_lea.vmem %s0, %s245
      %p247 = scmp.lt.s32.totalorder %s17, 1
      %s248 = scalar_select %p247, %s17, 1
      %s249 = smul.addr %s248, 48
      %s250 = smul.addr %s249, 4
      %s251 = scalar_lea.vmem %s6, %s250
      %v253 = vld [vmem:[%s246] sm:$0xff]
      %v254 = vld [vmem:[%s246 + $0x8] sm:$0xff]
      %v255 = vld [vmem:[%s246 + $0x10] sm:$0xff]
      %v256 = vld [vmem:[%s246 + $0x18] sm:$0xff]
      %v257 = vld [vmem:[%s246 + $0x20] sm:$0xff]
      %v258 = vld [vmem:[%s246 + $0x28] sm:$0xff]
      %v259 = vld [vmem:[%s246 + $0x30] sm:$0xff]
      %v260 = vld [vmem:[%s246 + $0x38] sm:$0xff]
      %v261 = vld [vmem:[%s246 + $0x40] sm:$0xff]
      %v262 = vld [vmem:[%s246 + $0x48] sm:$0xff]
      %v263 = vld [vmem:[%s246 + $0x50] sm:$0xff]
      %v264 = vld [vmem:[%s246 + $0x58] sm:$0xff]
      %v265 = vld [vmem:[%s246 + $0x60] sm:$0xff]
      %v266 = vld [vmem:[%s246 + $0x68] sm:$0xff]
      %v267 = vld [vmem:[%s246 + $0x70] sm:$0xff]
      %v268 = vld [vmem:[%s246 + $0x78] sm:$0xff]
      %v269 = vld [vmem:[%s1] sm:$0xff]
      %v270 = vld [vmem:[%s1 + $0x8] sm:$0xff]
      %v271 = vld [vmem:[%s1 + $0x10] sm:$0xff]
      %v272 = vld [vmem:[%s1 + $0x18] sm:$0xff]
      %v273 = vld [vmem:[%s1 + $0x20] sm:$0xff]
      %v274 = vld [vmem:[%s1 + $0x28] sm:$0xff]
      %v275 = vld [vmem:[%s1 + $0x30] sm:$0xff]
      %v276 = vld [vmem:[%s1 + $0x38] sm:$0xff]
      %v277 = vadd.f32 %v253, %v254
      %278 = vadd.xlane.f32.xlu0 %v277
      %v279 = vpop.xlane.xlu0 %278
      %v280 = vadd.f32 %v255, %v256
      %281 = vadd.xlane.f32.xlu0 %v280
      %v282 = vpop.xlane.xlu0 %281
      %v283 = vadd.f32 %v257, %v258
      %284 = vadd.xlane.f32.xlu0 %v283
      %v285 = vpop.xlane.xlu0 %284
      %v286 = vadd.f32 %v259, %v260
      %287 = vadd.xlane.f32.xlu0 %v286
      %v288 = vpop.xlane.xlu0 %287
      %v289 = vadd.f32 %v261, %v262
      %290 = vadd.xlane.f32.xlu0 %v289
      %v291 = vpop.xlane.xlu0 %290
      %v292 = vadd.f32 %v263, %v264
      %293 = vadd.xlane.f32.xlu0 %v292
      %v294 = vpop.xlane.xlu0 %293
      %v295 = vadd.f32 %v265, %v266
      %296 = vadd.xlane.f32.xlu0 %v295
      %v297 = vpop.xlane.xlu0 %296
      %v298 = vadd.f32 %v267, %v268
      %299 = vadd.xlane.f32.xlu0 %v298
      %v300 = vpop.xlane.xlu0 %299
      %vm301 = vcmask 523264
      %v303 = vsel %vm301, %v269, 0
      %v306 = vsel %vm301, %v270, 0
      %v309 = vsel %vm301, %v271, 0
      %v312 = vsel %vm301, %v272, 0
      %v315 = vsel %vm301, %v273, 0
      %v318 = vsel %vm301, %v274, 0
      %v321 = vsel %vm301, %v275, 0
      %v324 = vsel %vm301, %v276, 0
      %326 = vmatprep.subr.mxu0 0.0
      %327 = vmatpush1.msra.mxu0 0.0
      %328 = vmatprep.subr.mxu0 0.0
      %329 = vmatpush1.msra.mxu0 0.0
      %330 = vmatprep.subr.mxu0 0.0
      %331 = vmatpush1.msra.mxu0 0.0
      %332 = vmatprep.subr.mxu0 0.0
      %333 = vmatpush1.msra.mxu0 0.0
      %334 = vmatprep.subr.mxu0 0.0
      %335 = vmatpush1.msra.mxu0 0.0
      %336 = vmatprep.subr.mxu0 0.0
      %337 = vmatpush1.msra.mxu0 0.0
      %338 = vmatprep.subr.mxu0 0.0
      %339 = vmatpush1.msra.mxu0 0.0
      %340 = vmatprep.subr.mxu0 0.0
      %341 = vmatpush1.msra.mxu0 0.0
      %342 = vmatprep.subr.mxu0 0.0
      %343 = vmatpush1.msra.mxu0 %v300
      %344 = vmatprep.subr.mxu0 0.0
      %345 = vmatpush1.msra.mxu0 %v297
      %346 = vmatprep.subr.mxu0 0.0
      %347 = vmatpush1.msra.mxu0 %v294
      %348 = vmatprep.subr.mxu0 0.0
      %349 = vmatpush1.msra.mxu0 %v291
      %350 = vmatprep.subr.mxu0 0.0
      %351 = vmatpush1.msra.mxu0 %v288
      %352 = vmatprep.subr.mxu0 0.0
      %353 = vmatpush1.msra.mxu0 %v285
      %354 = vmatprep.subr.mxu0 0.0
      %355 = vmatpush1.msra.mxu0 %v282
      %356 = vmatprep.subr.mxu0 0.0
      %357 = vmatpush1.msra.mxu0 %v279
      %358 = vmatprep.subr.mxu0 0.0
      %359 = vmatpush2.msra.mxu0 0.0
      %360 = vmatprep.subr.mxu0 0.0
      %361 = vmatpush2.msra.mxu0 0.0
      %362 = vmatprep.subr.mxu0 0.0
      %363 = vmatpush2.msra.mxu0 0.0
      %364 = vmatprep.subr.mxu0 0.0
      %365 = vmatpush2.msra.mxu0 0.0
      %366 = vmatprep.subr.mxu0 0.0
      %367 = vmatpush2.msra.mxu0 0.0
      %368 = vmatprep.subr.mxu0 0.0
      %369 = vmatpush2.msra.mxu0 0.0
      %370 = vmatprep.subr.mxu0 0.0
      %371 = vmatpush2.msra.mxu0 0.0
      %372 = vmatprep.subr.mxu0 0.0
      %373 = vmatpush2.msra.mxu0 0.0
      %374 = vmatprep.subr.mxu0 0.0
      %375 = vmatpush2.msra.mxu0 0.0
      %376 = vmatprep.subr.mxu0 0.0
      %377 = vmatpush2.msra.mxu0 0.0
      %378 = vmatprep.subr.mxu0 0.0
      %379 = vmatpush2.msra.mxu0 0.0
      %380 = vmatprep.subr.mxu0 0.0
      %381 = vmatpush2.msra.mxu0 0.0
      %382 = vmatprep.subr.mxu0 0.0
      %383 = vmatpush2.msra.mxu0 0.0
      %384 = vmatprep.subr.mxu0 0.0
      %385 = vmatpush2.msra.mxu0 0.0
      %386 = vmatprep.subr.mxu0 0.0
      %387 = vmatpush2.msra.mxu0 0.0
      %388 = vmatprep.subr.mxu0 0.0
      %389 = vmatpush2.msra.mxu0 0.0
      %390 = vmatprep.mubr.f32.mxu0 0.0
      %391 = vmatmul.mubr.f32.gmra.mxu0 %v303
      %v392 = vpop.f32.mrf.mxu0
      %v393 = vadd.f32 0.0, %v392
      %v394 = vpop.f32.mrf.mxu0
      %395 = vmatprep.mubr.f32.mxu0 0.0
      %396 = vmatmul.mubr.f32.gmra.mxu0 %v306
      %v397 = vpop.f32.mrf.mxu0
      %v398 = vadd.f32 0.0, %v397
      %v399 = vpop.f32.mrf.mxu0
      %400 = vmatprep.mubr.f32.mxu0 0.0
      %401 = vmatmul.mubr.f32.gmra.mxu0 %v309
      %v402 = vpop.f32.mrf.mxu0
      %v403 = vadd.f32 0.0, %v402
      %v404 = vpop.f32.mrf.mxu0
      %405 = vmatprep.mubr.f32.mxu0 0.0
      %406 = vmatmul.mubr.f32.gmra.mxu0 %v312
      %v407 = vpop.f32.mrf.mxu0
      %v408 = vadd.f32 0.0, %v407
      %v409 = vpop.f32.mrf.mxu0
      %410 = vmatprep.mubr.f32.mxu0 0.0
      %411 = vmatmul.mubr.f32.gmra.mxu0 %v315
      %v412 = vpop.f32.mrf.mxu0
      %v413 = vadd.f32 0.0, %v412
      %v414 = vpop.f32.mrf.mxu0
      %415 = vmatprep.mubr.f32.mxu0 0.0
      %416 = vmatmul.mubr.f32.gmra.mxu0 %v318
      %v417 = vpop.f32.mrf.mxu0
      %v418 = vadd.f32 0.0, %v417
      %v419 = vpop.f32.mrf.mxu0
      %420 = vmatprep.mubr.f32.mxu0 0.0
      %421 = vmatmul.mubr.f32.gmra.mxu0 %v321
      %v422 = vpop.f32.mrf.mxu0
      %v423 = vadd.f32 0.0, %v422
      %v424 = vpop.f32.mrf.mxu0
      %425 = vmatprep.mubr.f32.mxu0 0.0
      %426 = vmatmul.mubr.f32.gmra.mxu0 %v324
      %v427 = vpop.f32.mrf.mxu0
      %v428 = vadd.f32 0.0, %v427
      %v429 = vpop.f32.mrf.mxu0
      %430 = vdwg.mxu0
      %432 = vset.pattern.permute.xlu0 0
      %433 = vperm.xlu0 %432, %v393
      %v434 = vpop.permute.xlu0 %433
      %437 = vset.pattern.permute.xlu0 0
      %438 = vperm.xlu0 %437, %v398
      %v439 = vpop.permute.xlu0 %438
      %442 = vset.pattern.permute.xlu0 0
      %443 = vperm.xlu0 %442, %v403
      %v444 = vpop.permute.xlu0 %443
      %447 = vset.pattern.permute.xlu0 0
      %448 = vperm.xlu0 %447, %v408
      %v449 = vpop.permute.xlu0 %448
      %452 = vset.pattern.permute.xlu0 0
      %453 = vperm.xlu0 %452, %v413
      %v454 = vpop.permute.xlu0 %453
      %457 = vset.pattern.permute.xlu0 0
      %458 = vperm.xlu0 %457, %v418
      %v459 = vpop.permute.xlu0 %458
      %462 = vset.pattern.permute.xlu0 0
      %463 = vperm.xlu0 %462, %v423
      %v464 = vpop.permute.xlu0 %463
      %467 = vset.pattern.permute.xlu0 0
      %468 = vperm.xlu0 %467, %v428
      %v469 = vpop.permute.xlu0 %468
      %v471 = vsub.f32 %v253, %v434
      %v472 = vsub.f32 %v254, %v434
      %v473 = vsub.f32 %v255, %v439
      %v474 = vsub.f32 %v256, %v439
      %v475 = vsub.f32 %v257, %v444
      %v476 = vsub.f32 %v258, %v444
      %v477 = vsub.f32 %v259, %v449
      %v478 = vsub.f32 %v260, %v449
      %v479 = vsub.f32 %v261, %v454
      %v480 = vsub.f32 %v262, %v454
      %v481 = vsub.f32 %v263, %v459
      %v482 = vsub.f32 %v264, %v459
      %v483 = vsub.f32 %v265, %v464
      %v484 = vsub.f32 %v266, %v464
      %v485 = vsub.f32 %v267, %v469
      %v486 = vsub.f32 %v268, %v469
      %v487 = vmul.f32 %v471, %v471
      %v488 = vmul.f32 %v472, %v472
      %v489 = vmul.f32 %v473, %v473
      %v490 = vmul.f32 %v474, %v474
      %v491 = vmul.f32 %v475, %v475
      %v492 = vmul.f32 %v476, %v476
      %v493 = vmul.f32 %v477, %v477
      %v494 = vmul.f32 %v478, %v478
      %v495 = vmul.f32 %v479, %v479
      %v496 = vmul.f32 %v480, %v480
      %v497 = vmul.f32 %v481, %v481
      %v498 = vmul.f32 %v482, %v482
      %v499 = vmul.f32 %v483, %v483
      %v500 = vmul.f32 %v484, %v484
      %v501 = vmul.f32 %v485, %v485
      %v502 = vmul.f32 %v486, %v486
      %v503 = vadd.f32 %v487, %v488
      %504 = vadd.xlane.f32.xlu0 %v503
      %v505 = vpop.xlane.xlu0 %504
      %v506 = vadd.f32 %v489, %v490
      %507 = vadd.xlane.f32.xlu0 %v506
      %v508 = vpop.xlane.xlu0 %507
      %v509 = vadd.f32 %v491, %v492
      %510 = vadd.xlane.f32.xlu0 %v509
      %v511 = vpop.xlane.xlu0 %510
      %v512 = vadd.f32 %v493, %v494
      %513 = vadd.xlane.f32.xlu0 %v512
      %v514 = vpop.xlane.xlu0 %513
      %v515 = vadd.f32 %v495, %v496
      %516 = vadd.xlane.f32.xlu0 %v515
      %v517 = vpop.xlane.xlu0 %516
      %v518 = vadd.f32 %v497, %v498
      %519 = vadd.xlane.f32.xlu0 %v518
      %v520 = vpop.xlane.xlu0 %519
      %v521 = vadd.f32 %v499, %v500
      %522 = vadd.xlane.f32.xlu0 %v521
      %v523 = vpop.xlane.xlu0 %522
      %v524 = vadd.f32 %v501, %v502
      %525 = vadd.xlane.f32.xlu0 %v524
      %v526 = vpop.xlane.xlu0 %525
      %527 = vmatprep.subr.mxu0 0.0
      %528 = vmatpush1.msra.mxu0 0.0
      %529 = vmatprep.subr.mxu0 0.0
      %530 = vmatpush1.msra.mxu0 0.0
      %531 = vmatprep.subr.mxu0 0.0
      %532 = vmatpush1.msra.mxu0 0.0
      %533 = vmatprep.subr.mxu0 0.0
      %534 = vmatpush1.msra.mxu0 0.0
      %535 = vmatprep.subr.mxu0 0.0
      %536 = vmatpush1.msra.mxu0 0.0
      %537 = vmatprep.subr.mxu0 0.0
      %538 = vmatpush1.msra.mxu0 0.0
      %539 = vmatprep.subr.mxu0 0.0
      %540 = vmatpush1.msra.mxu0 0.0
      %541 = vmatprep.subr.mxu0 0.0
      %542 = vmatpush1.msra.mxu0 0.0
      %543 = vmatprep.subr.mxu0 0.0
      %544 = vmatpush1.msra.mxu0 %v526
      %545 = vmatprep.subr.mxu0 0.0
      %546 = vmatpush1.msra.mxu0 %v523
      %547 = vmatprep.subr.mxu0 0.0
      %548 = vmatpush1.msra.mxu0 %v520
      %549 = vmatprep.subr.mxu0 0.0
      %550 = vmatpush1.msra.mxu0 %v517
      %551 = vmatprep.subr.mxu0 0.0
      %552 = vmatpush1.msra.mxu0 %v514
      %553 = vmatprep.subr.mxu0 0.0
      %554 = vmatpush1.msra.mxu0 %v511
      %555 = vmatprep.subr.mxu0 0.0
      %556 = vmatpush1.msra.mxu0 %v508
      %557 = vmatprep.subr.mxu0 0.0
      %558 = vmatpush1.msra.mxu0 %v505
      %559 = vmatprep.subr.mxu0 0.0
      %560 = vmatpush2.msra.mxu0 0.0
      %561 = vmatprep.subr.mxu0 0.0
      %562 = vmatpush2.msra.mxu0 0.0
      %563 = vmatprep.subr.mxu0 0.0
      %564 = vmatpush2.msra.mxu0 0.0
      %565 = vmatprep.subr.mxu0 0.0
      %566 = vmatpush2.msra.mxu0 0.0
      %567 = vmatprep.subr.mxu0 0.0
      %568 = vmatpush2.msra.mxu0 0.0
      %569 = vmatprep.subr.mxu0 0.0
      %570 = vmatpush2.msra.mxu0 0.0
      %571 = vmatprep.subr.mxu0 0.0
      %572 = vmatpush2.msra.mxu0 0.0
      %573 = vmatprep.subr.mxu0 0.0
      %574 = vmatpush2.msra.mxu0 0.0
      %575 = vmatprep.subr.mxu0 0.0
      %576 = vmatpush2.msra.mxu0 0.0
      %577 = vmatprep.subr.mxu0 0.0
      %578 = vmatpush2.msra.mxu0 0.0
      %579 = vmatprep.subr.mxu0 0.0
      %580 = vmatpush2.msra.mxu0 0.0
      %581 = vmatprep.subr.mxu0 0.0
      %582 = vmatpush2.msra.mxu0 0.0
      %583 = vmatprep.subr.mxu0 0.0
      %584 = vmatpush2.msra.mxu0 0.0
      %585 = vmatprep.subr.mxu0 0.0
      %586 = vmatpush2.msra.mxu0 0.0
      %587 = vmatprep.subr.mxu0 0.0
      %588 = vmatpush2.msra.mxu0 0.0
      %589 = vmatprep.subr.mxu0 0.0
      %590 = vmatpush2.msra.mxu0 0.0
      %591 = vmatprep.mubr.f32.mxu0 0.0
      %592 = vmatmul.mubr.f32.gmra.mxu0 %v303
      %v593 = vpop.f32.mrf.mxu0
      %v594 = vadd.f32 1e-05, %v593
      %v595 = vpop.f32.mrf.mxu0
      %596 = vmatprep.mubr.f32.mxu0 0.0
      %597 = vmatmul.mubr.f32.gmra.mxu0 %v306
      %v598 = vpop.f32.mrf.mxu0
      %v599 = vadd.f32 1e-05, %v598
      %v600 = vpop.f32.mrf.mxu0
      %601 = vmatprep.mubr.f32.mxu0 0.0
      %602 = vmatmul.mubr.f32.gmra.mxu0 %v309
      %v603 = vpop.f32.mrf.mxu0
      %v604 = vadd.f32 1e-05, %v603
      %v605 = vpop.f32.mrf.mxu0
      %606 = vmatprep.mubr.f32.mxu0 0.0
      %607 = vmatmul.mubr.f32.gmra.mxu0 %v312
      %v608 = vpop.f32.mrf.mxu0
      %v609 = vadd.f32 1e-05, %v608
      %v610 = vpop.f32.mrf.mxu0
      %611 = vmatprep.mubr.f32.mxu0 0.0
      %612 = vmatmul.mubr.f32.gmra.mxu0 %v315
      %v613 = vpop.f32.mrf.mxu0
      %v614 = vadd.f32 1e-05, %v613
      %v615 = vpop.f32.mrf.mxu0
      %616 = vmatprep.mubr.f32.mxu0 0.0
      %617 = vmatmul.mubr.f32.gmra.mxu0 %v318
      %v618 = vpop.f32.mrf.mxu0
      %v619 = vadd.f32 1e-05, %v618
      %v620 = vpop.f32.mrf.mxu0
      %621 = vmatprep.mubr.f32.mxu0 0.0
      %622 = vmatmul.mubr.f32.gmra.mxu0 %v321
      %v623 = vpop.f32.mrf.mxu0
      %v624 = vadd.f32 1e-05, %v623
      %v625 = vpop.f32.mrf.mxu0
      %626 = vmatprep.mubr.f32.mxu0 0.0
      %627 = vmatmul.mubr.f32.gmra.mxu0 %v324
      %v628 = vpop.f32.mrf.mxu0
      %v629 = vadd.f32 1e-05, %v628
      %v630 = vpop.f32.mrf.mxu0
      %631 = vdwg.mxu0
      %v632 = vrsqrt.pop %v594
      %v633 = vrsqrt.pop %v599
      %v634 = vrsqrt.pop %v604
      %v635 = vrsqrt.pop %v609
      %v636 = vrsqrt.pop %v614
      %v637 = vrsqrt.pop %v619
      %v638 = vrsqrt.pop %v624
      %v639 = vrsqrt.pop %v629
      %v640 = vld [vmem:[%s2] sm:$0xff]
      %v641 = vld [vmem:[%s2 + $0x8] sm:$0xff]
      %v642 = vld [vmem:[%s2 + $0x10] sm:$0xff]
      %v643 = vld [vmem:[%s2 + $0x18] sm:$0xff]
      %v644 = vld [vmem:[%s2 + $0x20] sm:$0xff]
      %v645 = vld [vmem:[%s2 + $0x28] sm:$0xff]
      %v646 = vld [vmem:[%s2 + $0x30] sm:$0xff]
      %v647 = vld [vmem:[%s2 + $0x38] sm:$0xff]
      %v648 = vmul.f32 %v632, %v640
      %v649 = vmul.f32 %v633, %v641
      %v650 = vmul.f32 %v634, %v642
      %v651 = vmul.f32 %v635, %v643
      %v652 = vmul.f32 %v636, %v644
      %v653 = vmul.f32 %v637, %v645
      %v654 = vmul.f32 %v638, %v646
      %v655 = vmul.f32 %v639, %v647
      %657 = vset.pattern.permute.xlu0 0
      %658 = vperm.xlu0 %657, %v648
      %v659 = vpop.permute.xlu0 %658
      %662 = vset.pattern.permute.xlu0 0
      %663 = vperm.xlu0 %662, %v649
      %v664 = vpop.permute.xlu0 %663
      %667 = vset.pattern.permute.xlu0 0
      %668 = vperm.xlu0 %667, %v650
      %v669 = vpop.permute.xlu0 %668
      %672 = vset.pattern.permute.xlu0 0
      %673 = vperm.xlu0 %672, %v651
      %v674 = vpop.permute.xlu0 %673
      %677 = vset.pattern.permute.xlu0 0
      %678 = vperm.xlu0 %677, %v652
      %v679 = vpop.permute.xlu0 %678
      %682 = vset.pattern.permute.xlu0 0
      %683 = vperm.xlu0 %682, %v653
      %v684 = vpop.permute.xlu0 %683
      %687 = vset.pattern.permute.xlu0 0
      %688 = vperm.xlu0 %687, %v654
      %v689 = vpop.permute.xlu0 %688
      %692 = vset.pattern.permute.xlu0 0
      %693 = vperm.xlu0 %692, %v655
      %v694 = vpop.permute.xlu0 %693
      %v696 = vmul.f32 %v471, %v659
      %v697 = vmul.f32 %v472, %v659
      %v698 = vmul.f32 %v473, %v664
      %v699 = vmul.f32 %v474, %v664
      %v700 = vmul.f32 %v475, %v669
      %v701 = vmul.f32 %v476, %v669
      %v702 = vmul.f32 %v477, %v674
      %v703 = vmul.f32 %v478, %v674
      %v704 = vmul.f32 %v479, %v679
      %v705 = vmul.f32 %v480, %v679
      %v706 = vmul.f32 %v481, %v684
      %v707 = vmul.f32 %v482, %v684
      %v708 = vmul.f32 %v483, %v689
      %v709 = vmul.f32 %v484, %v689
      %v710 = vmul.f32 %v485, %v694
      %v711 = vmul.f32 %v486, %v694
      %v712 = vld [vmem:[%s3] sm:$0xff]
      %v713 = vld [vmem:[%s3 + $0x8] sm:$0xff]
      %v714 = vld [vmem:[%s3 + $0x10] sm:$0xff]
      %v715 = vld [vmem:[%s3 + $0x18] sm:$0xff]
      %v716 = vld [vmem:[%s3 + $0x20] sm:$0xff]
      %v717 = vld [vmem:[%s3 + $0x28] sm:$0xff]
      %v718 = vld [vmem:[%s3 + $0x30] sm:$0xff]
      %v719 = vld [vmem:[%s3 + $0x38] sm:$0xff]
      %721 = vset.pattern.permute.xlu0 0
      %722 = vperm.xlu0 %721, %v712
      %v723 = vpop.permute.xlu0 %722
      %726 = vset.pattern.permute.xlu0 0
      %727 = vperm.xlu0 %726, %v713
      %v728 = vpop.permute.xlu0 %727
      %731 = vset.pattern.permute.xlu0 0
      %732 = vperm.xlu0 %731, %v714
      %v733 = vpop.permute.xlu0 %732
      %736 = vset.pattern.permute.xlu0 0
      %737 = vperm.xlu0 %736, %v715
      %v738 = vpop.permute.xlu0 %737
      %741 = vset.pattern.permute.xlu0 0
      %742 = vperm.xlu0 %741, %v716
      %v743 = vpop.permute.xlu0 %742
      %746 = vset.pattern.permute.xlu0 0
      %747 = vperm.xlu0 %746, %v717
      %v748 = vpop.permute.xlu0 %747
      %751 = vset.pattern.permute.xlu0 0
      %752 = vperm.xlu0 %751, %v718
      %v753 = vpop.permute.xlu0 %752
      %756 = vset.pattern.permute.xlu0 0
      %757 = vperm.xlu0 %756, %v719
      %v758 = vpop.permute.xlu0 %757
      %v760 = vadd.f32 %v696, %v723
      %v761 = vadd.f32 %v697, %v723
      %v762 = vadd.f32 %v698, %v728
      %v763 = vadd.f32 %v699, %v728
      %v764 = vadd.f32 %v700, %v733
      %v765 = vadd.f32 %v701, %v733
      %v766 = vadd.f32 %v702, %v738
      %v767 = vadd.f32 %v703, %v738
      %v768 = vadd.f32 %v704, %v743
      %v769 = vadd.f32 %v705, %v743
      %v770 = vadd.f32 %v706, %v748
      %v771 = vadd.f32 %v707, %v748
      %v772 = vadd.f32 %v708, %v753
      %v773 = vadd.f32 %v709, %v753
      %v774 = vadd.f32 %v710, %v758
      %v775 = vadd.f32 %v711, %v758
      %v776 = vpack.c.bf16 %v762, %v760
      %v777 = vpack.c.bf16 %v763, %v761
      %v778 = vpack.c.bf16 %v766, %v764
      %v779 = vpack.c.bf16 %v767, %v765
      %v780 = vpack.c.bf16 %v770, %v768
      %v781 = vpack.c.bf16 %v771, %v769
      %v782 = vpack.c.bf16 %v774, %v772
      %v783 = vpack.c.bf16 %v775, %v773
      %v784 = vld [vmem:[%s4] sm:$0xf]
      %v785 = vld [vmem:[%s4 + $0x4] sm:$0xf]
      %v786 = vld [vmem:[%s4 + $0x8] sm:$0xf]
      %v787 = vld [vmem:[%s4 + $0xc] sm:$0xf]
      %v788 = vld [vmem:[%s4 + $0x10] sm:$0xf]
      %v789 = vld [vmem:[%s4 + $0x14] sm:$0xf]
      %v790 = vld [vmem:[%s4 + $0x18] sm:$0xf]
      %v791 = vld [vmem:[%s4 + $0x1c] sm:$0xf]
      %v792 = vld [vmem:[%s4 + $0x20] sm:$0xf]
      %v793 = vld [vmem:[%s4 + $0x24] sm:$0xf]
      %v794 = vld [vmem:[%s4 + $0x28] sm:$0xf]
      %v795 = vld [vmem:[%s4 + $0x2c] sm:$0xf]
      %v796 = vld [vmem:[%s4 + $0x30] sm:$0xf]
      %v797 = vld [vmem:[%s4 + $0x34] sm:$0xf]
      %v798 = vld [vmem:[%s4 + $0x38] sm:$0xf]
      %v799 = vld [vmem:[%s4 + $0x3c] sm:$0xf]
      %v800 = vld [vmem:[%s4 + $0x40] sm:$0xf]
      %v801 = vld [vmem:[%s4 + $0x44] sm:$0xf]
      %v802 = vld [vmem:[%s4 + $0x48] sm:$0xf]
      %v803 = vld [vmem:[%s4 + $0x4c] sm:$0xf]
      %v804 = vld [vmem:[%s4 + $0x50] sm:$0xf]
      %v805 = vld [vmem:[%s4 + $0x54] sm:$0xf]
      %v806 = vld [vmem:[%s4 + $0x58] sm:$0xf]
      %v807 = vld [vmem:[%s4 + $0x5c] sm:$0xf]
      %v808 = vld [vmem:[%s5] sm:$0xff]
      %v809 = vld [vmem:[%s5 + $0x8] sm:$0xff]
      %v810 = vld [vmem:[%s5 + $0x10] sm:$0xff]
      %v811 = vld [vmem:[%s5 + $0x18] sm:$0xff]
      %v812 = vld [vmem:[%s5 + $0x20] sm:$0xff]
      %v813 = vld [vmem:[%s5 + $0x28] sm:$0xff]
      %v814 = vld [vmem:[%s5 + $0x30] sm:$0xff]
      %v815 = vld [vmem:[%s5 + $0x38] sm:$0xff]
      %v816 = vld [vmem:[%s5 + $0x40] sm:$0xff]
      %v817 = vld [vmem:[%s5 + $0x48] sm:$0xff]
      %v818 = vld [vmem:[%s5 + $0x50] sm:$0xff]
      %v819 = vld [vmem:[%s5 + $0x58] sm:$0xff]
      %v820 = vld [vmem:[%s5 + $0x60] sm:$0xff]
      %v821 = vld [vmem:[%s5 + $0x68] sm:$0xff]
      %v822 = vld [vmem:[%s5 + $0x70] sm:$0xff]
      %v823 = vld [vmem:[%s5 + $0x78] sm:$0xff]
      %v824 = vld [vmem:[%s5 + $0x80] sm:$0xff]
      %v825 = vld [vmem:[%s5 + $0x88] sm:$0xff]
      %v826 = vld [vmem:[%s5 + $0x90] sm:$0xff]
      %v827 = vld [vmem:[%s5 + $0x98] sm:$0xff]
      %v828 = vld [vmem:[%s5 + $0xa0] sm:$0xff]
      %v829 = vld [vmem:[%s5 + $0xa8] sm:$0xff]
      %v830 = vld [vmem:[%s5 + $0xb0] sm:$0xff]
      %v831 = vld [vmem:[%s5 + $0xb8] sm:$0xff]
      %833 = vset.pattern.permute.xlu0 0
      %834 = vperm.xlu0 %833, %v808
      %v835 = vpop.permute.xlu0 %834
      %838 = vset.pattern.permute.xlu0 0
      %839 = vperm.xlu0 %838, %v809
      %v840 = vpop.permute.xlu0 %839
      %843 = vset.pattern.permute.xlu0 0
      %844 = vperm.xlu0 %843, %v810
      %v845 = vpop.permute.xlu0 %844
      %848 = vset.pattern.permute.xlu0 0
      %849 = vperm.xlu0 %848, %v811
      %v850 = vpop.permute.xlu0 %849
      %853 = vset.pattern.permute.xlu0 0
      %854 = vperm.xlu0 %853, %v812
      %v855 = vpop.permute.xlu0 %854
      %858 = vset.pattern.permute.xlu0 0
      %859 = vperm.xlu0 %858, %v813
      %v860 = vpop.permute.xlu0 %859
      %863 = vset.pattern.permute.xlu0 0
      %864 = vperm.xlu0 %863, %v814
      %v865 = vpop.permute.xlu0 %864
      %868 = vset.pattern.permute.xlu0 0
      %869 = vperm.xlu0 %868, %v815
      %v870 = vpop.permute.xlu0 %869
      %873 = vset.pattern.permute.xlu0 0
      %874 = vperm.xlu0 %873, %v816
      %v875 = vpop.permute.xlu0 %874
      %878 = vset.pattern.permute.xlu0 0
      %879 = vperm.xlu0 %878, %v817
      %v880 = vpop.permute.xlu0 %879
      %883 = vset.pattern.permute.xlu0 0
      %884 = vperm.xlu0 %883, %v818
      %v885 = vpop.permute.xlu0 %884
      %888 = vset.pattern.permute.xlu0 0
      %889 = vperm.xlu0 %888, %v819
      %v890 = vpop.permute.xlu0 %889
      %893 = vset.pattern.permute.xlu0 0
      %894 = vperm.xlu0 %893, %v820
      %v895 = vpop.permute.xlu0 %894
      %898 = vset.pattern.permute.xlu0 0
      %899 = vperm.xlu0 %898, %v821
      %v900 = vpop.permute.xlu0 %899
      %903 = vset.pattern.permute.xlu0 0
      %904 = vperm.xlu0 %903, %v822
      %v905 = vpop.permute.xlu0 %904
      %908 = vset.pattern.permute.xlu0 0
      %909 = vperm.xlu0 %908, %v823
      %v910 = vpop.permute.xlu0 %909
      %913 = vset.pattern.permute.xlu0 0
      %914 = vperm.xlu0 %913, %v824
      %v915 = vpop.permute.xlu0 %914
      %918 = vset.pattern.permute.xlu0 0
      %919 = vperm.xlu0 %918, %v825
      %v920 = vpop.permute.xlu0 %919
      %923 = vset.pattern.permute.xlu0 0
      %924 = vperm.xlu0 %923, %v826
      %v925 = vpop.permute.xlu0 %924
      %928 = vset.pattern.permute.xlu0 0
      %929 = vperm.xlu0 %928, %v827
      %v930 = vpop.permute.xlu0 %929
      %933 = vset.pattern.permute.xlu0 0
      %934 = vperm.xlu0 %933, %v828
      %v935 = vpop.permute.xlu0 %934
      %938 = vset.pattern.permute.xlu0 0
      %939 = vperm.xlu0 %938, %v829
      %v940 = vpop.permute.xlu0 %939
      %943 = vset.pattern.permute.xlu0 0
      %944 = vperm.xlu0 %943, %v830
      %v945 = vpop.permute.xlu0 %944
      %948 = vset.pattern.permute.xlu0 0
      %949 = vperm.xlu0 %948, %v831
      %v950 = vpop.permute.xlu0 %949
      %v976 = vunpack.c.l.b16 %v784
      %v977 = vunpack.c.l.b16 %v785
      %v978 = vunpack.c.l.b16 %v786
      %v979 = vunpack.c.l.b16 %v787
      %v980 = vunpack.c.l.b16 %v788
      %v981 = vunpack.c.l.b16 %v789
      %v982 = vunpack.c.l.b16 %v790
      %v983 = vunpack.c.l.b16 %v791
      %v984 = vunpack.c.l.b16 %v792
      %v985 = vunpack.c.l.b16 %v793
      %v986 = vunpack.c.l.b16 %v794
      %v987 = vunpack.c.l.b16 %v795
      %v988 = vunpack.c.l.b16 %v796
      %v989 = vunpack.c.l.b16 %v797
      %v990 = vunpack.c.l.b16 %v798
      %v991 = vunpack.c.l.b16 %v799
      %v992 = vunpack.c.l.b16 %v800
      %v993 = vunpack.c.l.b16 %v801
      %v994 = vunpack.c.l.b16 %v802
      %v995 = vunpack.c.l.b16 %v803
      %v996 = vunpack.c.l.b16 %v804
      %v997 = vunpack.c.l.b16 %v805
      %v998 = vunpack.c.l.b16 %v806
      %v999 = vunpack.c.l.b16 %v807
      %v1000 = vpack.c.b16 %v977, %v976
      %v1001 = vpack.c.b16 %v979, %v978
      %v1002 = vpack.c.b16 %v981, %v980
      %v1003 = vpack.c.b16 %v983, %v982
      %v1004 = vpack.c.b16 %v985, %v984
      %v1005 = vpack.c.b16 %v987, %v986
      %v1006 = vpack.c.b16 %v989, %v988
      %v1007 = vpack.c.b16 %v991, %v990
      %v1008 = vpack.c.b16 %v993, %v992
      %v1009 = vpack.c.b16 %v995, %v994
      %v1010 = vpack.c.b16 %v997, %v996
      %v1011 = vpack.c.b16 %v999, %v998
      %v1013 = vsel %vm301, %v1000, 0
      %v1016 = vsel %vm301, %v1001, 0
      %v1019 = vsel %vm301, %v1002, 0
      %v1022 = vsel %vm301, %v1003, 0
      %v1025 = vsel %vm301, %v1004, 0
      %v1028 = vsel %vm301, %v1005, 0
      %v1031 = vsel %vm301, %v1006, 0
      %v1034 = vsel %vm301, %v1007, 0
      %v1037 = vsel %vm301, %v1008, 0
      %v1040 = vsel %vm301, %v1009, 0
      %v1043 = vsel %vm301, %v1010, 0
      %v1046 = vsel %vm301, %v1011, 0
      %1048 = vmatprep.subr.bf16.mxu0 0
      %1049 = vmatpush1.bf16.msra.mxu0 0
      %1050 = vmatprep.subr.bf16.mxu0 0
      %1051 = vmatpush1.bf16.msra.mxu0 0
      %1052 = vmatprep.subr.bf16.mxu0 0
      %1053 = vmatpush1.bf16.msra.mxu0 0
      %1054 = vmatprep.subr.bf16.mxu0 0
      %1055 = vmatpush1.bf16.msra.mxu0 0
      %1056 = vmatprep.subr.bf16.mxu0 %v783
      %1057 = vmatpush1.bf16.msra.mxu0 %v782
      %1058 = vmatprep.subr.bf16.mxu0 %v781
      %1059 = vmatpush1.bf16.msra.mxu0 %v780
      %1060 = vmatprep.subr.bf16.mxu0 %v779
      %1061 = vmatpush1.bf16.msra.mxu0 %v778
      %1062 = vmatprep.subr.bf16.mxu0 %v777
      %1063 = vmatpush1.bf16.msra.mxu0 %v776
      %1064 = vmatprep.subr.bf16.mxu0 0
      %1065 = vmatpush2.bf16.msra.mxu0 0
      %1066 = vmatprep.subr.bf16.mxu0 0
      %1067 = vmatpush2.bf16.msra.mxu0 0
      %1068 = vmatprep.subr.bf16.mxu0 0
      %1069 = vmatpush2.bf16.msra.mxu0 0
      %1070 = vmatprep.subr.bf16.mxu0 0
      %1071 = vmatpush2.bf16.msra.mxu0 0
      %1072 = vmatprep.subr.bf16.mxu0 0
      %1073 = vmatpush2.bf16.msra.mxu0 0
      %1074 = vmatprep.subr.bf16.mxu0 0
      %1075 = vmatpush2.bf16.msra.mxu0 0
      %1076 = vmatprep.subr.bf16.mxu0 0
      %1077 = vmatpush2.bf16.msra.mxu0 0
      %1078 = vmatprep.subr.bf16.mxu0 0
      %1079 = vmatpush2.bf16.msra.mxu0 0
      %1080 = vmatprep.mubr.bf16.mxu0 0
      %1081 = vmatmul.mubr.bf16.gmra.mxu0 %v1013
      %v1082 = vpop.f32.mrf.mxu0
      %v1083 = vadd.f32 %v835, %v1082
      %v1084 = vpop.f32.mrf.mxu0
      %v1085 = vadd.f32 %v835, %v1084
      %v1086 = vpop.f32.mrf.mxu0
      %v1087 = vadd.f32 %v840, %v1086
      %v1088 = vpop.f32.mrf.mxu0
      %v1089 = vadd.f32 %v840, %v1088
      %1090 = vmatprep.mubr.bf16.mxu0 0
      %1091 = vmatmul.mubr.bf16.gmra.mxu0 %v1016
      %v1092 = vpop.f32.mrf.mxu0
      %v1093 = vadd.f32 %v845, %v1092
      %v1094 = vpop.f32.mrf.mxu0
      %v1095 = vadd.f32 %v845, %v1094
      %v1096 = vpop.f32.mrf.mxu0
      %v1097 = vadd.f32 %v850, %v1096
      %v1098 = vpop.f32.mrf.mxu0
      %v1099 = vadd.f32 %v850, %v1098
      %1100 = vmatprep.mubr.bf16.mxu0 0
      %1101 = vmatmul.mubr.bf16.gmra.mxu0 %v1019
      %v1102 = vpop.f32.mrf.mxu0
      %v1103 = vadd.f32 %v855, %v1102
      %v1104 = vpop.f32.mrf.mxu0
      %v1105 = vadd.f32 %v855, %v1104
      %v1106 = vpop.f32.mrf.mxu0
      %v1107 = vadd.f32 %v860, %v1106
      %v1108 = vpop.f32.mrf.mxu0
      %v1109 = vadd.f32 %v860, %v1108
      %1110 = vmatprep.mubr.bf16.mxu0 0
      %1111 = vmatmul.mubr.bf16.gmra.mxu0 %v1022
      %v1112 = vpop.f32.mrf.mxu0
      %v1113 = vadd.f32 %v865, %v1112
      %v1114 = vpop.f32.mrf.mxu0
      %v1115 = vadd.f32 %v865, %v1114
      %v1116 = vpop.f32.mrf.mxu0
      %v1117 = vadd.f32 %v870, %v1116
      %v1118 = vpop.f32.mrf.mxu0
      %v1119 = vadd.f32 %v870, %v1118
      %1120 = vmatprep.mubr.bf16.mxu0 0
      %1121 = vmatmul.mubr.bf16.gmra.mxu0 %v1025
      %v1122 = vpop.f32.mrf.mxu0
      %v1123 = vadd.f32 %v875, %v1122
      %v1124 = vpop.f32.mrf.mxu0
      %v1125 = vadd.f32 %v875, %v1124
      %v1126 = vpop.f32.mrf.mxu0
      %v1127 = vadd.f32 %v880, %v1126
      %v1128 = vpop.f32.mrf.mxu0
      %v1129 = vadd.f32 %v880, %v1128
      %1130 = vmatprep.mubr.bf16.mxu0 0
      %1131 = vmatmul.mubr.bf16.gmra.mxu0 %v1028
      %v1132 = vpop.f32.mrf.mxu0
      %v1133 = vadd.f32 %v885, %v1132
      %v1134 = vpop.f32.mrf.mxu0
      %v1135 = vadd.f32 %v885, %v1134
      %v1136 = vpop.f32.mrf.mxu0
      %v1137 = vadd.f32 %v890, %v1136
      %v1138 = vpop.f32.mrf.mxu0
      %v1139 = vadd.f32 %v890, %v1138
      %1140 = vmatprep.mubr.bf16.mxu0 0
      %1141 = vmatmul.mubr.bf16.gmra.mxu0 %v1031
      %v1142 = vpop.f32.mrf.mxu0
      %v1143 = vadd.f32 %v895, %v1142
      %v1144 = vpop.f32.mrf.mxu0
      %v1145 = vadd.f32 %v895, %v1144
      %v1146 = vpop.f32.mrf.mxu0
      %v1147 = vadd.f32 %v900, %v1146
      %v1148 = vpop.f32.mrf.mxu0
      %v1149 = vadd.f32 %v900, %v1148
      %1150 = vmatprep.mubr.bf16.mxu0 0
      %1151 = vmatmul.mubr.bf16.gmra.mxu0 %v1034
      %v1152 = vpop.f32.mrf.mxu0
      %v1153 = vadd.f32 %v905, %v1152
      %v1154 = vpop.f32.mrf.mxu0
      %v1155 = vadd.f32 %v905, %v1154
      %v1156 = vpop.f32.mrf.mxu0
      %v1157 = vadd.f32 %v910, %v1156
      %v1158 = vpop.f32.mrf.mxu0
      %v1159 = vadd.f32 %v910, %v1158
      %1160 = vmatprep.mubr.bf16.mxu0 0
      %1161 = vmatmul.mubr.bf16.gmra.mxu0 %v1037
      %v1162 = vpop.f32.mrf.mxu0
      %v1163 = vadd.f32 %v915, %v1162
      %v1164 = vpop.f32.mrf.mxu0
      %v1165 = vadd.f32 %v915, %v1164
      %v1166 = vpop.f32.mrf.mxu0
      %v1167 = vadd.f32 %v920, %v1166
      %v1168 = vpop.f32.mrf.mxu0
      %v1169 = vadd.f32 %v920, %v1168
      %1170 = vmatprep.mubr.bf16.mxu0 0
      %1171 = vmatmul.mubr.bf16.gmra.mxu0 %v1040
      %v1172 = vpop.f32.mrf.mxu0
      %v1173 = vadd.f32 %v925, %v1172
      %v1174 = vpop.f32.mrf.mxu0
      %v1175 = vadd.f32 %v925, %v1174
      %v1176 = vpop.f32.mrf.mxu0
      %v1177 = vadd.f32 %v930, %v1176
      %v1178 = vpop.f32.mrf.mxu0
      %v1179 = vadd.f32 %v930, %v1178
      %1180 = vmatprep.mubr.bf16.mxu0 0
      %1181 = vmatmul.mubr.bf16.gmra.mxu0 %v1043
      %v1182 = vpop.f32.mrf.mxu0
      %v1183 = vadd.f32 %v935, %v1182
      %v1184 = vpop.f32.mrf.mxu0
      %v1185 = vadd.f32 %v935, %v1184
      %v1186 = vpop.f32.mrf.mxu0
      %v1187 = vadd.f32 %v940, %v1186
      %v1188 = vpop.f32.mrf.mxu0
      %v1189 = vadd.f32 %v940, %v1188
      %1190 = vmatprep.mubr.bf16.mxu0 0
      %1191 = vmatmul.mubr.bf16.gmra.mxu0 %v1046
      %v1192 = vpop.f32.mrf.mxu0
      %v1193 = vadd.f32 %v945, %v1192
      %v1194 = vpop.f32.mrf.mxu0
      %v1195 = vadd.f32 %v945, %v1194
      %v1196 = vpop.f32.mrf.mxu0
      %v1197 = vadd.f32 %v950, %v1196
      %v1198 = vpop.f32.mrf.mxu0
      %v1199 = vadd.f32 %v950, %v1198
      %1200 = vdwg.mxu0
      %v1201 = vpack.c.bf16 %v1087, %v1083
      %v1202 = vpack.c.bf16 %v1089, %v1085
      %v1203 = vpack.c.bf16 %v1097, %v1093
      %v1204 = vpack.c.bf16 %v1099, %v1095
      %v1205 = vpack.c.bf16 %v1107, %v1103
      %v1206 = vpack.c.bf16 %v1109, %v1105
      %v1207 = vpack.c.bf16 %v1117, %v1113
      %v1208 = vpack.c.bf16 %v1119, %v1115
      %v1209 = vpack.c.bf16 %v1127, %v1123
      %v1210 = vpack.c.bf16 %v1129, %v1125
      %v1211 = vpack.c.bf16 %v1137, %v1133
      %v1212 = vpack.c.bf16 %v1139, %v1135
      %v1213 = vpack.c.bf16 %v1147, %v1143
      %v1214 = vpack.c.bf16 %v1149, %v1145
      %v1215 = vpack.c.bf16 %v1157, %v1153
      %v1216 = vpack.c.bf16 %v1159, %v1155
      %v1217 = vpack.c.bf16 %v1167, %v1163
      %v1218 = vpack.c.bf16 %v1169, %v1165
      %v1219 = vpack.c.bf16 %v1177, %v1173
      %v1220 = vpack.c.bf16 %v1179, %v1175
      %v1221 = vpack.c.bf16 %v1187, %v1183
      %v1222 = vpack.c.bf16 %v1189, %v1185
      %v1223 = vpack.c.bf16 %v1197, %v1193
      %v1224 = vpack.c.bf16 %v1199, %v1195
      %v1249 = vunpack.c.l.b16 %v1201
      %v1250 = vunpack.c.l.b16 %v1202
      %v1251 = vunpack.c.h.b16 %v1201
      %v1252 = vunpack.c.h.b16 %v1202
      %v1253 = vunpack.c.l.b16 %v1203
      %v1254 = vunpack.c.l.b16 %v1204
      %v1255 = vunpack.c.h.b16 %v1203
      %v1256 = vunpack.c.h.b16 %v1204
      %v1257 = vunpack.c.l.b16 %v1205
      %v1258 = vunpack.c.l.b16 %v1206
      %v1259 = vunpack.c.h.b16 %v1205
      %v1260 = vunpack.c.h.b16 %v1206
      %v1261 = vunpack.c.l.b16 %v1207
      %v1262 = vunpack.c.l.b16 %v1208
      %v1263 = vunpack.c.h.b16 %v1207
      %v1264 = vunpack.c.h.b16 %v1208
      %v1265 = vunpack.c.l.b16 %v1209
      %v1266 = vunpack.c.l.b16 %v1210
      %v1267 = vunpack.c.h.b16 %v1209
      %v1268 = vunpack.c.h.b16 %v1210
      %v1269 = vunpack.c.l.b16 %v1211
      %v1270 = vunpack.c.l.b16 %v1212
      %v1271 = vunpack.c.h.b16 %v1211
      %v1272 = vunpack.c.h.b16 %v1212
      %v1273 = vunpack.c.l.b16 %v1213
      %v1274 = vunpack.c.l.b16 %v1214
      %v1275 = vunpack.c.h.b16 %v1213
      %v1276 = vunpack.c.h.b16 %v1214
      %v1277 = vunpack.c.l.b16 %v1215
      %v1278 = vunpack.c.l.b16 %v1216
      %v1279 = vunpack.c.h.b16 %v1215
      %v1280 = vunpack.c.h.b16 %v1216
      %v1281 = vunpack.c.l.b16 %v1217
      %v1282 = vunpack.c.l.b16 %v1218
      %v1283 = vunpack.c.h.b16 %v1217
      %v1284 = vunpack.c.h.b16 %v1218
      %v1285 = vunpack.c.l.b16 %v1219
      %v1286 = vunpack.c.l.b16 %v1220
      %v1287 = vunpack.c.h.b16 %v1219
      %v1288 = vunpack.c.h.b16 %v1220
      %v1289 = vunpack.c.l.b16 %v1221
      %v1290 = vunpack.c.l.b16 %v1222
      %v1291 = vunpack.c.h.b16 %v1221
      %v1292 = vunpack.c.h.b16 %v1222
      %v1293 = vunpack.c.l.b16 %v1223
      %v1294 = vunpack.c.l.b16 %v1224
      %v1295 = vunpack.c.h.b16 %v1223
      %v1296 = vunpack.c.h.b16 %v1224
      %v1297 = vpack.c.b16 %v1250, %v1249
      %v1298 = vpack.c.b16 %v1252, %v1251
      %v1299 = vpack.c.b16 %v1254, %v1253
      %v1300 = vpack.c.b16 %v1256, %v1255
      %v1301 = vpack.c.b16 %v1258, %v1257
      %v1302 = vpack.c.b16 %v1260, %v1259
      %v1303 = vpack.c.b16 %v1262, %v1261
      %v1304 = vpack.c.b16 %v1264, %v1263
      %v1305 = vpack.c.b16 %v1266, %v1265
      %v1306 = vpack.c.b16 %v1268, %v1267
      %v1307 = vpack.c.b16 %v1270, %v1269
      %v1308 = vpack.c.b16 %v1272, %v1271
      %v1309 = vpack.c.b16 %v1274, %v1273
      %v1310 = vpack.c.b16 %v1276, %v1275
      %v1311 = vpack.c.b16 %v1278, %v1277
      %v1312 = vpack.c.b16 %v1280, %v1279
      %v1313 = vpack.c.b16 %v1282, %v1281
      %v1314 = vpack.c.b16 %v1284, %v1283
      %v1315 = vpack.c.b16 %v1286, %v1285
      %v1316 = vpack.c.b16 %v1288, %v1287
      %v1317 = vpack.c.b16 %v1290, %v1289
      %v1318 = vpack.c.b16 %v1292, %v1291
      %v1319 = vpack.c.b16 %v1294, %v1293
      %v1320 = vpack.c.b16 %v1296, %v1295
      %1345 = vst [vmem:[%s251] sm:$0xff] %v1297
      %1346 = vst [vmem:[%s251 + $0x8] sm:$0xff] %v1298
      %1347 = vst [vmem:[%s251 + $0x10] sm:$0xff] %v1299
      %1348 = vst [vmem:[%s251 + $0x18] sm:$0xff] %v1300
      %1349 = vst [vmem:[%s251 + $0x20] sm:$0xff] %v1301
      %1350 = vst [vmem:[%s251 + $0x28] sm:$0xff] %v1302
      %1351 = vst [vmem:[%s251 + $0x30] sm:$0xff] %v1303
      %1352 = vst [vmem:[%s251 + $0x38] sm:$0xff] %v1304
      %1353 = vst [vmem:[%s251 + $0x40] sm:$0xff] %v1305
      %1354 = vst [vmem:[%s251 + $0x48] sm:$0xff] %v1306
      %1355 = vst [vmem:[%s251 + $0x50] sm:$0xff] %v1307
      %1356 = vst [vmem:[%s251 + $0x58] sm:$0xff] %v1308
      %1357 = vst [vmem:[%s251 + $0x60] sm:$0xff] %v1309
      %1358 = vst [vmem:[%s251 + $0x68] sm:$0xff] %v1310
      %1359 = vst [vmem:[%s251 + $0x70] sm:$0xff] %v1311
      %1360 = vst [vmem:[%s251 + $0x78] sm:$0xff] %v1312
      %1361 = vst [vmem:[%s251 + $0x80] sm:$0xff] %v1313
      %1362 = vst [vmem:[%s251 + $0x88] sm:$0xff] %v1314
      %1363 = vst [vmem:[%s251 + $0x90] sm:$0xff] %v1315
      %1364 = vst [vmem:[%s251 + $0x98] sm:$0xff] %v1316
      %1365 = vst [vmem:[%s251 + $0xa0] sm:$0xff] %v1317
      %1366 = vst [vmem:[%s251 + $0xa8] sm:$0xff] %v1318
      %1367 = vst [vmem:[%s251 + $0xb0] sm:$0xff] %v1319
      %1368 = vst [vmem:[%s251 + $0xb8] sm:$0xff] %v1320
      %p1369 = scmp.lt.s32.totalorder %s17, 1
      %s1370 = scalar_select %p1369, %s17, 1
      %s1371 = smul.addr %s1370, 48
      %s1372 = smul.addr %s1371, 4
      %s1373 = scalar_lea.vmem %s6, %s1372
      // Predicated region
      $region45: #{attn_block.2} parent=43 // pred_check
        %p1374 = pneg %p166
      $region46: #{attn_block.2} parent=43 // pred_check_branch
        %1376 = sbr.rel (%p1374) target = $region48
      $region47: #{attn_block.2} parent=43 // pred_region
        _
      $region48: #{attn_block.2} parent=43 // pred_fallthru
        _
    $region44: #{attn_block.2} parent=5 // pred_fallthru
      _
    %p1377 = scmp.le.s32.totalorder 2, %s12
    // Predicated region
    $region49: #{attn_block.2} parent=5 // pred_check
      %p1378 = pneg %p1377
    $region50: #{attn_block.2} parent=5 // pred_check_branch
      %1380 = sbr.rel (%p1378) target = $region52
    $region51: #{attn_block.2} parent=5 // pred_region
      %s1381 = ssub.s32 %s12, 2
      // Predicated region
      $region53: #{attn_block.2} parent=51 // pred_check
        %p1382 = pneg %p172
      $region54: #{attn_block.2} parent=51 // pred_check_branch
        %1384 = sbr.rel (%p1382) target = $region56
      $region55: #{attn_block.2} parent=51 // pred_region
        %p1385 = scmp.lt.s32.totalorder %s18, 1
        %s1386 = scalar_select %p1385, %s18, 1
        %s1387 = smul.addr %s1386, 48
        %s1388 = smul.addr %s1387, 4
        %s1389 = scalar_lea.vmem %s6, %s1388
      $region56: #{attn_block.2} parent=51 // pred_fallthru
        _
    $region52: #{attn_block.2} parent=5 // pred_fallthru
      _
  $region6: #{attn_block.2} parent=0 // loop_footer
    %s16 = sadd.s32 1, %s12
  $region7: #{attn_block.2} parent=0 // loop_footer_branch
    %11 = sbr.rel target = $region3
  $region8: #{attn_block.2} parent=0 // loop_exit
    _

// kernel: attn_block.3
$region0: #{attn_block.3}
  #allocation0 [shape = 'u32[]', space=smem, size = 0x4, offset = 0x4, fixed_abs, tag = 'smem constant byte address 0x4 - core index']
  #allocation1 [shape = 'u32[144,128]{1,0:T(1,128)}', space=vmem, size = 0x12000, scoped, tag = 'internal scratch']
  #allocation2 [shape = 'f32[1,128]{1,0:T(1,128)}', space=vmem, size = 0x200, scoped, tag = 'scratch operand']
  #allocation3 [shape = 'f32[1,128]{1,0:T(1,128)}', space=vmem, size = 0x200, scoped, tag = 'scratch operand']
  #allocation4 [shape = 'f32[64,128]{1,0:T(8,128)}', space=vmem, size = 0x8000, scoped, tag = 'scratch operand']
  %s0 = inlined_call_operand.vmem [shape: f32[2,64,256], index: 0, kind: input, shape index: {}]
  %s1 = inlined_call_operand.vmem [shape: bf16[2,192,256], index: 1, kind: input, shape index: {}, may-alias: {1,2,3}]
  %s2 = inlined_call_operand.vmem [shape: bf16[2,192,256], index: 2, kind: input, shape index: {}, may-alias: {1,2,3}]
  %s3 = inlined_call_operand.vmem [shape: bf16[2,192,256], index: 3, kind: input, shape index: {}, may-alias: {1,2,3}]
  %s4 = inlined_call_operand.vmem [shape: bf16[128,128], index: 4, kind: input, shape index: {}]
  %s5 = inlined_call_operand.vmem [shape: f32[1,128], index: 5, kind: input, shape index: {}]
  %s6 = inlined_call_operand.vmem [shape: f32[2,64,256], index: 6, kind: output, shape index: {}]
  %s7 = sld [smem:[#allocation0]]
  $region260: #{attn_block.3} parent=0
    _
  %s9 = ssub.s32 1, %s7
  %s10 = scalar_select 0, %s9, %s7
  $region1: #{attn_block.3} parent=0
    #allocation5 [shape = 'u8[65536]{0}', space=vmem, size = 0x10000, scoped, tag = 'input window, operand 0']
    #allocation6 [shape = 'u8[32768]{0}', space=vmem, size = 0x8000, scoped, tag = 'input window, operand 1']
    #allocation7 [shape = 'u8[32768]{0}', space=vmem, size = 0x8000, scoped, tag = 'input window, operand 2']
    #allocation8 [shape = 'u8[32768]{0}', space=vmem, size = 0x8000, scoped, tag = 'input window, operand 3']
    #allocation9 [shape = 'u8[65536]{0}', space=vmem, size = 0x10000, scoped, tag = 'output window, operand 0']
    loop: start=0, step=1, limit=10
    $region2: #{attn_block.3} parent=1 // loop_pre_header
      _
    $region3: #{attn_block.3} parent=1 // loop_header
      %s12 = sphi 0, %s16
      %p13 = scmp.ge.s32.totalorder %s12, 10
      %s19 = sphi 0, %s38
      %s20 = sphi 0, %s34
      %s21 = sphi 0, %s30
      %s22 = sphi 0, %s19
      %s23 = sphi 0, %s20
      %s24 = sphi 0, %s21
      %s25 = sphi 0, %s22
      %s26 = sphi 0, %s23
      %s27 = sphi 0, %s24
      %s43 = sphi 0, %s45
      %s46 = sphi 0, %s43
      %s47 = sphi 0, %s46
      %s63 = sphi 0, %s47
      %s71 = sphi 0, %s73
      %s74 = sphi 0, %s71
      %s75 = sphi 0, %s74
      %s91 = sphi 0, %s75
      %s99 = sphi 0, %s101
      %s102 = sphi 0, %s99
      %s103 = sphi 0, %s102
      %s119 = sphi 0, %s103
      %s127 = sphi 0, %s129
      %s130 = sphi 0, %s127
      %s131 = sphi 0, %s130
      %s147 = sphi 0, %s131
      %s151 = sphi 0, %s151
      %s153 = sphi 0, %s151
      %s154 = sphi 0, %s153
      %s168 = sphi 0, %s154
      %s172 = sphi 0, %s172
      %s174 = sphi 0, %s172
      %s175 = sphi 0, %s174
      %s189 = sphi 0, %s175
      %s197 = sphi 0, %s199
      %s200 = sphi 0, %s197
      %s201 = sphi 0, %s200
      %s217 = sphi 0, %s201
    $region4: #{attn_block.3} parent=1 // loop_header_branch
      %15 = sbr.rel (%p13) target = $region8
    $region5: #{attn_block.3} parent=1 // loop_body
      %s17 = ssub.s32 %s12, 1
      %s18 = ssub.s32 %s12, 2
      %s28 = sadd.s32 1, %s21
      %p29 = scmp.ge.s32.totalorder %s28, 2
      %s30 = scalar_select %p29, 0, %s28
      %s31 = sadd.s32 1, %s20
      %s32 = scalar_select %p29, %s31, %s20
      %p33 = scmp.ge.s32.totalorder %s32, 2
      %s34 = scalar_select %p33, 0, %s32
      %s35 = sadd.s32 1, %s19
      %s36 = scalar_select %p33, %s35, %s19
      %p37 = scmp.ge.s32.totalorder %s36, 2
      %s38 = scalar_select %p37, 0, %s36
      %s39 = ssub.s32 %s19, %s38
      %s40 = ssub.s32 %s20, %s34
      %s41 = sor.u32 %s39, %s40
      %p42 = scmp.eq.s32.totalorder %s41, 0
      %s44 = sadd.s32 %s43, 1
      %s45 = scalar_select %p42, %s43, %s44
      %p48 = pneg %p42
      %p49 = scmp.eq.s32.totalorder %s12, 7
      %p50 = por %p48, %p49
      %p51 = scmp.ne.s32.totalorder %s43, %s46
      %p52 = scmp.eq.s32.totalorder %s12, 0
      %p53 = por %p51, %p52
      %p54 = scmp.ne.s32.totalorder %s43, %s46
      %p55 = scmp.eq.s32.totalorder %s17, 7
      %p56 = por %p54, %p55
      %p57 = scmp.ne.s32.totalorder %s46, %s47
      %p58 = scmp.eq.s32.totalorder %s17, 0
      %p59 = por %p57, %p58
      %p60 = scmp.ne.s32.totalorder %s46, %s47
      %p61 = scmp.eq.s32.totalorder %s18, 7
      %p62 = por %p60, %p61
      %p64 = scmp.ne.s32.totalorder %s47, %s63
      %p65 = scmp.eq.s32.totalorder %s18, 0
      %p66 = por %p64, %p65
      %s67 = ssub.s32 %s19, %s38
      %s68 = ssub.s32 %s20, %s34
      %s69 = sor.u32 %s67, %s68
      %p70 = scmp.eq.s32.totalorder %s69, 0
      %s72 = sadd.s32 %s71, 1
      %s73 = scalar_select %p70, %s71, %s72
      %p76 = pneg %p70
      %p77 = scmp.eq.s32.totalorder %s12, 7
      %p78 = por %p76, %p77
      %p79 = scmp.ne.s32.totalorder %s71, %s74
      %p80 = scmp.eq.s32.totalorder %s12, 0
      %p81 = por %p79, %p80
      %p82 = scmp.ne.s32.totalorder %s71, %s74
      %p83 = scmp.eq.s32.totalorder %s17, 7
      %p84 = por %p82, %p83
      %p85 = scmp.ne.s32.totalorder %s74, %s75
      %p86 = scmp.eq.s32.totalorder %s17, 0
      %p87 = por %p85, %p86
      %p88 = scmp.ne.s32.totalorder %s74, %s75
      %p89 = scmp.eq.s32.totalorder %s18, 7
      %p90 = por %p88, %p89
      %p92 = scmp.ne.s32.totalorder %s75, %s91
      %p93 = scmp.eq.s32.totalorder %s18, 0
      %p94 = por %p92, %p93
      %s95 = ssub.s32 %s19, %s38
      %s96 = ssub.s32 %s21, %s30
      %s97 = sor.u32 %s95, %s96
      %p98 = scmp.eq.s32.totalorder %s97, 0
      %s100 = sadd.s32 %s99, 1
      %s101 = scalar_select %p98, %s99, %s100
      %p104 = pneg %p98
      %p105 = scmp.eq.s32.totalorder %s12, 7
      %p106 = por %p104, %p105
      %p107 = scmp.ne.s32.totalorder %s99, %s102
      %p108 = scmp.eq.s32.totalorder %s12, 0
      %p109 = por %p107, %p108
      %p110 = scmp.ne.s32.totalorder %s99, %s102
      %p111 = scmp.eq.s32.totalorder %s17, 7
      %p112 = por %p110, %p111
      %p113 = scmp.ne.s32.totalorder %s102, %s103
      %p114 = scmp.eq.s32.totalorder %s17, 0
      %p115 = por %p113, %p114
      %p116 = scmp.ne.s32.totalorder %s102, %s103
      %p117 = scmp.eq.s32.totalorder %s18, 7
      %p118 = por %p116, %p117
      %p120 = scmp.ne.s32.totalorder %s103, %s119
      %p121 = scmp.eq.s32.totalorder %s18, 0
      %p122 = por %p120, %p121
      %s123 = ssub.s32 %s19, %s38
      %s124 = ssub.s32 %s21, %s30
      %s125 = sor.u32 %s123, %s124
      %p126 = scmp.eq.s32.totalorder %s125, 0
      %s128 = sadd.s32 %s127, 1
      %s129 = scalar_select %p126, %s127, %s128
      %p132 = pneg %p126
      %p133 = scmp.eq.s32.totalorder %s12, 7
      %p134 = por %p132, %p133
      %p135 = scmp.ne.s32.totalorder %s127, %s130
      %p136 = scmp.eq.s32.totalorder %s12, 0
      %p137 = por %p135, %p136
      %p138 = scmp.ne.s32.totalorder %s127, %s130
      %p139 = scmp.eq.s32.totalorder %s17, 7
      %p140 = por %p138, %p139
      %p141 = scmp.ne.s32.totalorder %s130, %s131
      %p142 = scmp.eq.s32.totalorder %s17, 0
      %p143 = por %p141, %p142
      %p144 = scmp.ne.s32.totalorder %s130, %s131
      %p145 = scmp.eq.s32.totalorder %s18, 7
      %p146 = por %p144, %p145
      %p148 = scmp.ne.s32.totalorder %s131, %s147
      %p149 = scmp.eq.s32.totalorder %s18, 0
      %p150 = por %p148, %p149
      %s152 = sadd.s32 %s151, 1
      %p155 = scmp.eq.s32.totalorder %s12, 7
      %p156 = scmp.ne.s32.totalorder %s151, %s153
      %p157 = scmp.eq.s32.totalorder %s12, 0
      %p158 = por %p156, %p157
      %p159 = scmp.ne.s32.totalorder %s151, %s153
      %p160 = scmp.eq.s32.totalorder %s17, 7
      %p161 = por %p159, %p160
      %p162 = scmp.ne.s32.totalorder %s153, %s154
      %p163 = scmp.eq.s32.totalorder %s17, 0
      %p164 = por %p162, %p163
      %p165 = scmp.ne.s32.totalorder %s153, %s154
      %p166 = scmp.eq.s32.totalorder %s18, 7
      %p167 = por %p165, %p166
      %p169 = scmp.ne.s32.totalorder %s154, %s168
      %p170 = scmp.eq.s32.totalorder %s18, 0
      %p171 = por %p169, %p170
      %s173 = sadd.s32 %s172, 1
      %p176 = scmp.eq.s32.totalorder %s12, 7
      %p177 = scmp.ne.s32.totalorder %s172, %s174
      %p178 = scmp.eq.s32.totalorder %s12, 0
      %p179 = por %p177, %p178
      %p180 = scmp.ne.s32.totalorder %s172, %s174
      %p181 = scmp.eq.s32.totalorder %s17, 7
      %p182 = por %p180, %p181
      %p183 = scmp.ne.s32.totalorder %s174, %s175
      %p184 = scmp.eq.s32.totalorder %s17, 0
      %p185 = por %p183, %p184
      %p186 = scmp.ne.s32.totalorder %s174, %s175
      %p187 = scmp.eq.s32.totalorder %s18, 7
      %p188 = por %p186, %p187
      %p190 = scmp.ne.s32.totalorder %s175, %s189
      %p191 = scmp.eq.s32.totalorder %s18, 0
      %p192 = por %p190, %p191
      %s193 = ssub.s32 %s19, %s38
      %s194 = ssub.s32 %s20, %s34
      %s195 = sor.u32 %s193, %s194
      %p196 = scmp.eq.s32.totalorder %s195, 0
      %s198 = sadd.s32 %s197, 1
      %s199 = scalar_select %p196, %s197, %s198
      %p202 = pneg %p196
      %p203 = scmp.eq.s32.totalorder %s12, 7
      %p204 = por %p202, %p203
      %p205 = scmp.ne.s32.totalorder %s197, %s200
      %p206 = scmp.eq.s32.totalorder %s12, 0
      %p207 = por %p205, %p206
      %p208 = scmp.ne.s32.totalorder %s197, %s200
      %p209 = scmp.eq.s32.totalorder %s17, 7
      %p210 = por %p208, %p209
      %p211 = scmp.ne.s32.totalorder %s200, %s201
      %p212 = scmp.eq.s32.totalorder %s17, 0
      %p213 = por %p211, %p212
      %p214 = scmp.ne.s32.totalorder %s200, %s201
      %p215 = scmp.eq.s32.totalorder %s18, 7
      %p216 = por %p214, %p215
      %p218 = scmp.ne.s32.totalorder %s201, %s217
      %p219 = scmp.eq.s32.totalorder %s18, 0
      %p220 = por %p218, %p219
      %p221 = scmp.le.s32.totalorder 1, %s12
      %p222 = scmp.lt.s32.totalorder %s12, 9
      %p223 = pnand %p221, %p222
      %p224 = pneg %p223
      // Predicated region
      $region9: #{attn_block.3} parent=5 // pred_check
        _
      $region10: #{attn_block.3} parent=5 // pred_check_branch
        %226 = sbr.rel (%p223) target = $region12
      $region11: #{attn_block.3} parent=5 // pred_region
        %s227 = ssub.s32 %s12, 1
        // Predicated region
        $region13: #{attn_block.3} parent=11 // pred_check
          %p228 = pneg %p164
        $region14: #{attn_block.3} parent=11 // pred_check_branch
          %230 = sbr.rel (%p228) target = $region16
        $region15: #{attn_block.3} parent=11 // pred_region
          _
        $region16: #{attn_block.3} parent=11 // pred_fallthru
          _
        // Predicated region
        $region17: #{attn_block.3} parent=11 // pred_check
          %p231 = pneg %p185
        $region18: #{attn_block.3} parent=11 // pred_check_branch
          %233 = sbr.rel (%p231) target = $region20
        $region19: #{attn_block.3} parent=11 // pred_region
          _
        $region20: #{attn_block.3} parent=11 // pred_fallthru
          _
      $region12: #{attn_block.3} parent=5 // pred_fallthru
        _
      %p234 = scmp.lt.s32.totalorder %s12, 8
      // Predicated region
      $region21: #{attn_block.3} parent=5 // pred_check
        %p235 = pneg %p234
      $region22: #{attn_block.3} parent=5 // pred_check_branch
        %237 = sbr.rel (%p235) target = $region24
      $region23: #{attn_block.3} parent=5 // pred_region
        // Predicated region
        $region25: #{attn_block.3} parent=23 // pred_check
          %p238 = pneg %p53
        $region26: #{attn_block.3} parent=23 // pred_check_branch
          %240 = sbr.rel (%p238) target = $region28
        $region27: #{attn_block.3} parent=23 // pred_region
          %s241 = sand.u32 %s43, 1
          %s242 = sand.u32 %s43, 1
          %s243 = smul.addr %s242, 64
          %s244 = scalar_lea.vmem [#allocation5], %s243
          %s245 = smul.addr %s19, 16
          %s246 = sadd.s32 %s20, %s245
          %s247 = smul.addr %s246, 8
          %s248 = scalar_lea.vmem %s0, %s247
          // Predicated region
          $region29: #{attn_block.3} parent=27 // pred_check
            _
          $region30: #{attn_block.3} parent=27 // pred_check_branch
            %250 = sbr.rel (0) target = $region32
          $region31: #{attn_block.3} parent=27 // pred_region
            // Predicated region
            $region33: #{attn_block.3} parent=31 // pred_check
              _
            $region34: #{attn_block.3} parent=31 // pred_check_branch
              %252 = sbr.rel (0) target = $region36
            $region35: #{attn_block.3} parent=31 // pred_region
              // Predicated region
              $region48: #{attn_block.3} parent=35 // pred_check
                _
              $region49: #{attn_block.3} parent=35 // pred_check_branch
                %282 = sbr.rel (0) target = $region51
              $region50: #{attn_block.3} parent=35 // pred_region
                loop: start=0, step=1, limit=1
                $region52: #{attn_block.3} parent=50 // loop_pre_header
                  _
                $region53: #{attn_block.3} parent=50 // loop_header
                  %s284 = sphi 0, %s288
                  %p285 = scmp.ge.s32.totalorder %s284, 1
                  %s289 = sphi %s248, %s248
                  %s290 = sphi %s244, %s244
                $region54: #{attn_block.3} parent=50 // loop_header_branch
                  %287 = sbr.rel (%p285) target = $region58
                $region55: #{attn_block.3} parent=50 // loop_body
                  %v291 = vld [vmem:[%s289] sm:$0xff]
                  %292 = vst [vmem:[%s290] sm:$0xff] %v291
                  %v293 = vld [vmem:[%s289 + $0x10] sm:$0xff]
                  %294 = vst [vmem:[%s290 + $0x8] sm:$0xff] %v293
                  %v295 = vld [vmem:[%s289 + $0x20] sm:$0xff]
                  %296 = vst [vmem:[%s290 + $0x10] sm:$0xff] %v295
                  %v297 = vld [vmem:[%s289 + $0x30] sm:$0xff]
                  %298 = vst [vmem:[%s290 + $0x18] sm:$0xff] %v297
                  %v299 = vld [vmem:[%s289 + $0x40] sm:$0xff]
                  %300 = vst [vmem:[%s290 + $0x20] sm:$0xff] %v299
                  %v301 = vld [vmem:[%s289 + $0x50] sm:$0xff]
                  %302 = vst [vmem:[%s290 + $0x28] sm:$0xff] %v301
                  %v303 = vld [vmem:[%s289 + $0x60] sm:$0xff]
                  %304 = vst [vmem:[%s290 + $0x30] sm:$0xff] %v303
                  %v305 = vld [vmem:[%s289 + $0x70] sm:$0xff]
                  %306 = vst [vmem:[%s290 + $0x38] sm:$0xff] %v305
                $region56: #{attn_block.3} parent=50 // loop_footer
                  %s288 = sadd.s32 1, %s284
                $region57: #{attn_block.3} parent=50 // loop_footer_branch
                  %283 = sbr.rel target = $region53
                $region58: #{attn_block.3} parent=50 // loop_exit
                  _
              $region51: #{attn_block.3} parent=35 // pred_fallthru
                _
              // Predicated region
              $region59: #{attn_block.3} parent=35 // pred_check
                _
              $region60: #{attn_block.3} parent=35 // pred_check_branch
                %308 = sbr.rel target = $region62
              $region61: #{attn_block.3} parent=35 // pred_region
                _
              $region62: #{attn_block.3} parent=35 // pred_fallthru
                _
            $region36: #{attn_block.3} parent=31 // pred_fallthru
              _
            // Predicated region
            $region37: #{attn_block.3} parent=31 // pred_check
              _
            $region38: #{attn_block.3} parent=31 // pred_check_branch
              %254 = sbr.rel target = $region40
            $region39: #{attn_block.3} parent=31 // pred_region
              %s256 = ssub.s32 256, 1
              loop: start=0, step=1, limit=1
              $region41: #{attn_block.3} parent=39 // loop_pre_header
                _
              $region42: #{attn_block.3} parent=39 // loop_header
                %s258 = sphi 0, %s262
                %p259 = scmp.ge.s32.totalorder %s258, 1
                %s263 = sphi %s248, %s248
                %s264 = sphi %s244, %s244
              $region43: #{attn_block.3} parent=39 // loop_header_branch
                %261 = sbr.rel (%p259) target = $region47
              $region44: #{attn_block.3} parent=39 // loop_body
                %v265 = vld [vmem:[%s263] sm:%s256]
                %266 = vst [vmem:[%s264] sm:%s256] %v265
                %v267 = vld [vmem:[%s263 + $0x10] sm:%s256]
                %268 = vst [vmem:[%s264 + $0x8] sm:%s256] %v267
                %v269 = vld [vmem:[%s263 + $0x20] sm:%s256]
                %270 = vst [vmem:[%s264 + $0x10] sm:%s256] %v269
                %v271 = vld [vmem:[%s263 + $0x30] sm:%s256]
                %272 = vst [vmem:[%s264 + $0x18] sm:%s256] %v271
                %v273 = vld [vmem:[%s263 + $0x40] sm:%s256]
                %274 = vst [vmem:[%s264 + $0x20] sm:%s256] %v273
                %v275 = vld [vmem:[%s263 + $0x50] sm:%s256]
                %276 = vst [vmem:[%s264 + $0x28] sm:%s256] %v275
                %v277 = vld [vmem:[%s263 + $0x60] sm:%s256]
                %278 = vst [vmem:[%s264 + $0x30] sm:%s256] %v277
                %v279 = vld [vmem:[%s263 + $0x70] sm:%s256]
                %280 = vst [vmem:[%s264 + $0x38] sm:%s256] %v279
              $region45: #{attn_block.3} parent=39 // loop_footer
                %s262 = sadd.s32 1, %s258
              $region46: #{attn_block.3} parent=39 // loop_footer_branch
                %257 = sbr.rel target = $region42
              $region47: #{attn_block.3} parent=39 // loop_exit
                _
            $region40: #{attn_block.3} parent=31 // pred_fallthru
              _
          $region32: #{attn_block.3} parent=27 // pred_fallthru
            _
          %309 = vnop
        $region28: #{attn_block.3} parent=23 // pred_fallthru
          _
        // Predicated region
        $region63: #{attn_block.3} parent=23 // pred_check
          %p310 = pneg %p81
        $region64: #{attn_block.3} parent=23 // pred_check_branch
          %312 = sbr.rel (%p310) target = $region66
        $region65: #{attn_block.3} parent=23 // pred_region
          %s313 = sand.u32 %s71, 1
          %s314 = sand.u32 %s71, 1
          %s315 = smul.addr %s314, 32
          %s316 = scalar_lea.vmem [#allocation6], %s315
          %s317 = smul.addr %s19, 48
          %s318 = sadd.s32 %s20, %s317
          %s319 = smul.addr %s318, 4
          %s320 = scalar_lea.vmem %s1, %s319
          // Predicated region
          $region67: #{attn_block.3} parent=65 // pred_check
            _
          $region68: #{attn_block.3} parent=65 // pred_check_branch
            %322 = sbr.rel (0) target = $region70
          $region69: #{attn_block.3} parent=65 // pred_region
            // Predicated region
            $region71: #{attn_block.3} parent=69 // pred_check
              _
            $region72: #{attn_block.3} parent=69 // pred_check_branch
              %324 = sbr.rel target = $region74
            $region73: #{attn_block.3} parent=69 // pred_region
              // Predicated region
              $region86: #{attn_block.3} parent=73 // pred_check
                _
              $region87: #{attn_block.3} parent=73 // pred_check_branch
                %354 = sbr.rel (0) target = $region89
              $region88: #{attn_block.3} parent=73 // pred_region
                loop: start=0, step=1, limit=1
                $region90: #{attn_block.3} parent=88 // loop_pre_header
                  _
                $region91: #{attn_block.3} parent=88 // loop_header
                  %s356 = sphi 0, %s360
                  %p357 = scmp.ge.s32.totalorder %s356, 1
                  %s361 = sphi %s320, %s320
                  %s362 = sphi %s316, %s316
                $region92: #{attn_block.3} parent=88 // loop_header_branch
                  %359 = sbr.rel (%p357) target = $region96
                $region93: #{attn_block.3} parent=88 // loop_body
                  _
                $region94: #{attn_block.3} parent=88 // loop_footer
                  %s360 = sadd.s32 1, %s356
                $region95: #{attn_block.3} parent=88 // loop_footer_branch
                  %355 = sbr.rel target = $region91
                $region96: #{attn_block.3} parent=88 // loop_exit
                  _
                %s364 = ssub.s32 16, 1
                loop: start=0, step=1, limit=1
                $region97: #{attn_block.3} parent=88 // loop_pre_header
                  _
                $region98: #{attn_block.3} parent=88 // loop_header
                  %s366 = sphi 0, %s370
                  %p367 = scmp.ge.s32.totalorder %s366, 1
                  %s371 = sphi %s320, %s320
                  %s372 = sphi %s316, %s316
                $region99: #{attn_block.3} parent=88 // loop_header_branch
                  %369 = sbr.rel (%p367) target = $region103
                $region100: #{attn_block.3} parent=88 // loop_body
                  %v373 = vld [vmem:[%s371] sm:%s364]
                  %374 = vst [vmem:[%s372] sm:%s364] %v373
                  %v375 = vld [vmem:[%s371 + $0x8] sm:%s364]
                  %376 = vst [vmem:[%s372 + $0x4] sm:%s364] %v375
                  %v377 = vld [vmem:[%s371 + $0x10] sm:%s364]
                  %378 = vst [vmem:[%s372 + $0x8] sm:%s364] %v377
                  %v379 = vld [vmem:[%s371 + $0x18] sm:%s364]
                  %380 = vst [vmem:[%s372 + $0xc] sm:%s364] %v379
                  %v381 = vld [vmem:[%s371 + $0x20] sm:%s364]
                  %382 = vst [vmem:[%s372 + $0x10] sm:%s364] %v381
                  %v383 = vld [vmem:[%s371 + $0x28] sm:%s364]
                  %384 = vst [vmem:[%s372 + $0x14] sm:%s364] %v383
                  %v385 = vld [vmem:[%s371 + $0x30] sm:%s364]
                  %386 = vst [vmem:[%s372 + $0x18] sm:%s364] %v385
                  %v387 = vld [vmem:[%s371 + $0x38] sm:%s364]
                  %388 = vst [vmem:[%s372 + $0x1c] sm:%s364] %v387
                $region101: #{attn_block.3} parent=88 // loop_footer
                  %s370 = sadd.s32 1, %s366
                $region102: #{attn_block.3} parent=88 // loop_footer_branch
                  %365 = sbr.rel target = $region98
                $region103: #{attn_block.3} parent=88 // loop_exit
                  _
              $region89: #{attn_block.3} parent=73 // pred_fallthru
                _
            $region74: #{attn_block.3} parent=69 // pred_fallthru
              _
            // Predicated region
            $region75: #{attn_block.3} parent=69 // pred_check
              _
            $region76: #{attn_block.3} parent=69 // pred_check_branch
              %326 = sbr.rel (0) target = $region78
            $region77: #{attn_block.3} parent=69 // pred_region
              %s328 = ssub.s32 16, 1
              loop: start=0, step=1, limit=1
              $region79: #{attn_block.3} parent=77 // loop_pre_header
                _
              $region80: #{attn_block.3} parent=77 // loop_header
                %s330 = sphi 0, %s334
                %p331 = scmp.ge.s32.totalorder %s330, 1
                %s335 = sphi %s320, %s320
                %s336 = sphi %s316, %s316
              $region81: #{attn_block.3} parent=77 // loop_header_branch
                %333 = sbr.rel (%p331) target = $region85
              $region82: #{attn_block.3} parent=77 // loop_body
                %v337 = vld [vmem:[%s335] sm:%s328]
                %338 = vst [vmem:[%s336] sm:%s328] %v337
                %v339 = vld [vmem:[%s335 + $0x8] sm:%s328]
                %340 = vst [vmem:[%s336 + $0x4] sm:%s328] %v339
                %v341 = vld [vmem:[%s335 + $0x10] sm:%s328]
                %342 = vst [vmem:[%s336 + $0x8] sm:%s328] %v341
                %v343 = vld [vmem:[%s335 + $0x18] sm:%s328]
                %344 = vst [vmem:[%s336 + $0xc] sm:%s328] %v343
                %v345 = vld [vmem:[%s335 + $0x20] sm:%s328]
                %346 = vst [vmem:[%s336 + $0x10] sm:%s328] %v345
                %v347 = vld [vmem:[%s335 + $0x28] sm:%s328]
                %348 = vst [vmem:[%s336 + $0x14] sm:%s328] %v347
                %v349 = vld [vmem:[%s335 + $0x30] sm:%s328]
                %350 = vst [vmem:[%s336 + $0x18] sm:%s328] %v349
                %v351 = vld [vmem:[%s335 + $0x38] sm:%s328]
                %352 = vst [vmem:[%s336 + $0x1c] sm:%s328] %v351
              $region83: #{attn_block.3} parent=77 // loop_footer
                %s334 = sadd.s32 1, %s330
              $region84: #{attn_block.3} parent=77 // loop_footer_branch
                %329 = sbr.rel target = $region80
              $region85: #{attn_block.3} parent=77 // loop_exit
                _
            $region78: #{attn_block.3} parent=69 // pred_fallthru
              _
          $region70: #{attn_block.3} parent=65 // pred_fallthru
            _
          %389 = vnop
        $region66: #{attn_block.3} parent=23 // pred_fallthru
          _
        // Predicated region
        $region104: #{attn_block.3} parent=23 // pred_check
          %p390 = pneg %p109
        $region105: #{attn_block.3} parent=23 // pred_check_branch
          %392 = sbr.rel (%p390) target = $region107
        $region106: #{attn_block.3} parent=23 // pred_region
          %s393 = sand.u32 %s99, 1
          %s394 = sand.u32 %s99, 1
          %s395 = smul.addr %s394, 32
          %s396 = scalar_lea.vmem [#allocation7], %s395
          %s397 = sadd.s32 %s21, 16
          %s398 = smul.addr %s19, 48
          %s399 = sadd.s32 %s397, %s398
          %s400 = smul.addr %s399, 4
          %s401 = scalar_lea.vmem %s2, %s400
          // Predicated region
          $region108: #{attn_block.3} parent=106 // pred_check
            _
          $region109: #{attn_block.3} parent=106 // pred_check_branch
            %403 = sbr.rel (0) target = $region111
          $region110: #{attn_block.3} parent=106 // pred_region
            // Predicated region
            $region112: #{attn_block.3} parent=110 // pred_check
              _
            $region113: #{attn_block.3} parent=110 // pred_check_branch
              %405 = sbr.rel target = $region115
            $region114: #{attn_block.3} parent=110 // pred_region
              // Predicated region
              $region127: #{attn_block.3} parent=114 // pred_check
                _
              $region128: #{attn_block.3} parent=114 // pred_check_branch
                %435 = sbr.rel (0) target = $region130
              $region129: #{attn_block.3} parent=114 // pred_region
                loop: start=0, step=1, limit=1
                $region131: #{attn_block.3} parent=129 // loop_pre_header
                  _
                $region132: #{attn_block.3} parent=129 // loop_header
                  %s437 = sphi 0, %s441
                  %p438 = scmp.ge.s32.totalorder %s437, 1
                  %s442 = sphi %s401, %s401
                  %s443 = sphi %s396, %s396
                $region133: #{attn_block.3} parent=129 // loop_header_branch
                  %440 = sbr.rel (%p438) target = $region137
                $region134: #{attn_block.3} parent=129 // loop_body
                  _
                $region135: #{attn_block.3} parent=129 // loop_footer
                  %s441 = sadd.s32 1, %s437
                $region136: #{attn_block.3} parent=129 // loop_footer_branch
                  %436 = sbr.rel target = $region132
                $region137: #{attn_block.3} parent=129 // loop_exit
                  _
                %s445 = ssub.s32 16, 1
                loop: start=0, step=1, limit=1
                $region138: #{attn_block.3} parent=129 // loop_pre_header
                  _
                $region139: #{attn_block.3} parent=129 // loop_header
                  %s447 = sphi 0, %s451
                  %p448 = scmp.ge.s32.totalorder %s447, 1
                  %s452 = sphi %s401, %s401
                  %s453 = sphi %s396, %s396
                $region140: #{attn_block.3} parent=129 // loop_header_branch
                  %450 = sbr.rel (%p448) target = $region144
                $region141: #{attn_block.3} parent=129 // loop_body
                  %v454 = vld [vmem:[%s452] sm:%s445]
                  %455 = vst [vmem:[%s453] sm:%s445] %v454
                  %v456 = vld [vmem:[%s452 + $0x8] sm:%s445]
                  %457 = vst [vmem:[%s453 + $0x4] sm:%s445] %v456
                  %v458 = vld [vmem:[%s452 + $0x10] sm:%s445]
                  %459 = vst [vmem:[%s453 + $0x8] sm:%s445] %v458
                  %v460 = vld [vmem:[%s452 + $0x18] sm:%s445]
                  %461 = vst [vmem:[%s453 + $0xc] sm:%s445] %v460
                  %v462 = vld [vmem:[%s452 + $0x20] sm:%s445]
                  %463 = vst [vmem:[%s453 + $0x10] sm:%s445] %v462
                  %v464 = vld [vmem:[%s452 + $0x28] sm:%s445]
                  %465 = vst [vmem:[%s453 + $0x14] sm:%s445] %v464
                  %v466 = vld [vmem:[%s452 + $0x30] sm:%s445]
                  %467 = vst [vmem:[%s453 + $0x18] sm:%s445] %v466
                  %v468 = vld [vmem:[%s452 + $0x38] sm:%s445]
                  %469 = vst [vmem:[%s453 + $0x1c] sm:%s445] %v468
                $region142: #{attn_block.3} parent=129 // loop_footer
                  %s451 = sadd.s32 1, %s447
                $region143: #{attn_block.3} parent=129 // loop_footer_branch
                  %446 = sbr.rel target = $region139
                $region144: #{attn_block.3} parent=129 // loop_exit
                  _
              $region130: #{attn_block.3} parent=114 // pred_fallthru
                _
            $region115: #{attn_block.3} parent=110 // pred_fallthru
              _
            // Predicated region
            $region116: #{attn_block.3} parent=110 // pred_check
              _
            $region117: #{attn_block.3} parent=110 // pred_check_branch
              %407 = sbr.rel (0) target = $region119
            $region118: #{attn_block.3} parent=110 // pred_region
              %s409 = ssub.s32 16, 1
              loop: start=0, step=1, limit=1
              $region120: #{attn_block.3} parent=118 // loop_pre_header
                _
              $region121: #{attn_block.3} parent=118 // loop_header
                %s411 = sphi 0, %s415
                %p412 = scmp.ge.s32.totalorder %s411, 1
                %s416 = sphi %s401, %s401
                %s417 = sphi %s396, %s396
              $region122: #{attn_block.3} parent=118 // loop_header_branch
                %414 = sbr.rel (%p412) target = $region126
              $region123: #{attn_block.3} parent=118 // loop_body
                %v418 = vld [vmem:[%s416] sm:%s409]
                %419 = vst [vmem:[%s417] sm:%s409] %v418
                %v420 = vld [vmem:[%s416 + $0x8] sm:%s409]
                %421 = vst [vmem:[%s417 + $0x4] sm:%s409] %v420
                %v422 = vld [vmem:[%s416 + $0x10] sm:%s409]
                %423 = vst [vmem:[%s417 + $0x8] sm:%s409] %v422
                %v424 = vld [vmem:[%s416 + $0x18] sm:%s409]
                %425 = vst [vmem:[%s417 + $0xc] sm:%s409] %v424
                %v426 = vld [vmem:[%s416 + $0x20] sm:%s409]
                %427 = vst [vmem:[%s417 + $0x10] sm:%s409] %v426
                %v428 = vld [vmem:[%s416 + $0x28] sm:%s409]
                %429 = vst [vmem:[%s417 + $0x14] sm:%s409] %v428
                %v430 = vld [vmem:[%s416 + $0x30] sm:%s409]
                %431 = vst [vmem:[%s417 + $0x18] sm:%s409] %v430
                %v432 = vld [vmem:[%s416 + $0x38] sm:%s409]
                %433 = vst [vmem:[%s417 + $0x1c] sm:%s409] %v432
              $region124: #{attn_block.3} parent=118 // loop_footer
                %s415 = sadd.s32 1, %s411
              $region125: #{attn_block.3} parent=118 // loop_footer_branch
                %410 = sbr.rel target = $region121
              $region126: #{attn_block.3} parent=118 // loop_exit
                _
            $region119: #{attn_block.3} parent=110 // pred_fallthru
              _
          $region111: #{attn_block.3} parent=106 // pred_fallthru
            _
          %470 = vnop
        $region107: #{attn_block.3} parent=23 // pred_fallthru
          _
        // Predicated region
        $region145: #{attn_block.3} parent=23 // pred_check
          %p471 = pneg %p137
        $region146: #{attn_block.3} parent=23 // pred_check_branch
          %473 = sbr.rel (%p471) target = $region148
        $region147: #{attn_block.3} parent=23 // pred_region
          %s474 = sand.u32 %s127, 1
          %s475 = sand.u32 %s127, 1
          %s476 = smul.addr %s475, 32
          %s477 = scalar_lea.vmem [#allocation8], %s476
          %s478 = sadd.s32 %s21, 32
          %s479 = smul.addr %s19, 48
          %s480 = sadd.s32 %s478, %s479
          %s481 = smul.addr %s480, 4
          %s482 = scalar_lea.vmem %s3, %s481
          // Predicated region
          $region149: #{attn_block.3} parent=147 // pred_check
            _
          $region150: #{attn_block.3} parent=147 // pred_check_branch
            %484 = sbr.rel (0) target = $region152
          $region151: #{attn_block.3} parent=147 // pred_region
            // Predicated region
            $region153: #{attn_block.3} parent=151 // pred_check
              _
            $region154: #{attn_block.3} parent=151 // pred_check_branch
              %486 = sbr.rel target = $region156
            $region155: #{attn_block.3} parent=151 // pred_region
              // Predicated region
              $region168: #{attn_block.3} parent=155 // pred_check
                _
              $region169: #{attn_block.3} parent=155 // pred_check_branch
                %516 = sbr.rel (0) target = $region171
              $region170: #{attn_block.3} parent=155 // pred_region
                loop: start=0, step=1, limit=1
                $region172: #{attn_block.3} parent=170 // loop_pre_header
                  _
                $region173: #{attn_block.3} parent=170 // loop_header
                  %s518 = sphi 0, %s522
                  %p519 = scmp.ge.s32.totalorder %s518, 1
                  %s523 = sphi %s482, %s482
                  %s524 = sphi %s477, %s477
                $region174: #{attn_block.3} parent=170 // loop_header_branch
                  %521 = sbr.rel (%p519) target = $region178
                $region175: #{attn_block.3} parent=170 // loop_body
                  _
                $region176: #{attn_block.3} parent=170 // loop_footer
                  %s522 = sadd.s32 1, %s518
                $region177: #{attn_block.3} parent=170 // loop_footer_branch
                  %517 = sbr.rel target = $region173
                $region178: #{attn_block.3} parent=170 // loop_exit
                  _
                %s526 = ssub.s32 16, 1
                loop: start=0, step=1, limit=1
                $region179: #{attn_block.3} parent=170 // loop_pre_header
                  _
                $region180: #{attn_block.3} parent=170 // loop_header
                  %s528 = sphi 0, %s532
                  %p529 = scmp.ge.s32.totalorder %s528, 1
                  %s533 = sphi %s482, %s482
                  %s534 = sphi %s477, %s477
                $region181: #{attn_block.3} parent=170 // loop_header_branch
                  %531 = sbr.rel (%p529) target = $region185
                $region182: #{attn_block.3} parent=170 // loop_body
                  %v535 = vld [vmem:[%s533] sm:%s526]
                  %536 = vst [vmem:[%s534] sm:%s526] %v535
                  %v537 = vld [vmem:[%s533 + $0x8] sm:%s526]
                  %538 = vst [vmem:[%s534 + $0x4] sm:%s526] %v537
                  %v539 = vld [vmem:[%s533 + $0x10] sm:%s526]
                  %540 = vst [vmem:[%s534 + $0x8] sm:%s526] %v539
                  %v541 = vld [vmem:[%s533 + $0x18] sm:%s526]
                  %542 = vst [vmem:[%s534 + $0xc] sm:%s526] %v541
                  %v543 = vld [vmem:[%s533 + $0x20] sm:%s526]
                  %544 = vst [vmem:[%s534 + $0x10] sm:%s526] %v543
                  %v545 = vld [vmem:[%s533 + $0x28] sm:%s526]
                  %546 = vst [vmem:[%s534 + $0x14] sm:%s526] %v545
                  %v547 = vld [vmem:[%s533 + $0x30] sm:%s526]
                  %548 = vst [vmem:[%s534 + $0x18] sm:%s526] %v547
                  %v549 = vld [vmem:[%s533 + $0x38] sm:%s526]
                  %550 = vst [vmem:[%s534 + $0x1c] sm:%s526] %v549
                $region183: #{attn_block.3} parent=170 // loop_footer
                  %s532 = sadd.s32 1, %s528
                $region184: #{attn_block.3} parent=170 // loop_footer_branch
                  %527 = sbr.rel target = $region180
                $region185: #{attn_block.3} parent=170 // loop_exit
                  _
              $region171: #{attn_block.3} parent=155 // pred_fallthru
                _
            $region156: #{attn_block.3} parent=151 // pred_fallthru
              _
            // Predicated region
            $region157: #{attn_block.3} parent=151 // pred_check
              _
            $region158: #{attn_block.3} parent=151 // pred_check_branch
              %488 = sbr.rel (0) target = $region160
            $region159: #{attn_block.3} parent=151 // pred_region
              %s490 = ssub.s32 16, 1
              loop: start=0, step=1, limit=1
              $region161: #{attn_block.3} parent=159 // loop_pre_header
                _
              $region162: #{attn_block.3} parent=159 // loop_header
                %s492 = sphi 0, %s496
                %p493 = scmp.ge.s32.totalorder %s492, 1
                %s497 = sphi %s482, %s482
                %s498 = sphi %s477, %s477
              $region163: #{attn_block.3} parent=159 // loop_header_branch
                %495 = sbr.rel (%p493) target = $region167
              $region164: #{attn_block.3} parent=159 // loop_body
                %v499 = vld [vmem:[%s497] sm:%s490]
                %500 = vst [vmem:[%s498] sm:%s490] %v499
                %v501 = vld [vmem:[%s497 + $0x8] sm:%s490]
                %502 = vst [vmem:[%s498 + $0x4] sm:%s490] %v501
                %v503 = vld [vmem:[%s497 + $0x10] sm:%s490]
                %504 = vst [vmem:[%s498 + $0x8] sm:%s490] %v503
                %v505 = vld [vmem:[%s497 + $0x18] sm:%s490]
                %506 = vst [vmem:[%s498 + $0xc] sm:%s490] %v505
                %v507 = vld [vmem:[%s497 + $0x20] sm:%s490]
                %508 = vst [vmem:[%s498 + $0x10] sm:%s490] %v507
                %v509 = vld [vmem:[%s497 + $0x28] sm:%s490]
                %510 = vst [vmem:[%s498 + $0x14] sm:%s490] %v509
                %v511 = vld [vmem:[%s497 + $0x30] sm:%s490]
                %512 = vst [vmem:[%s498 + $0x18] sm:%s490] %v511
                %v513 = vld [vmem:[%s497 + $0x38] sm:%s490]
                %514 = vst [vmem:[%s498 + $0x1c] sm:%s490] %v513
              $region165: #{attn_block.3} parent=159 // loop_footer
                %s496 = sadd.s32 1, %s492
              $region166: #{attn_block.3} parent=159 // loop_footer_branch
                %491 = sbr.rel target = $region162
              $region167: #{attn_block.3} parent=159 // loop_exit
                _
            $region160: #{attn_block.3} parent=151 // pred_fallthru
              _
          $region152: #{attn_block.3} parent=147 // pred_fallthru
            _
          %551 = vnop
        $region148: #{attn_block.3} parent=23 // pred_fallthru
          _
      $region24: #{attn_block.3} parent=5 // pred_fallthru
        _
      %p552 = scmp.le.s32.totalorder 1, %s12
      %p553 = scmp.lt.s32.totalorder %s12, 9
      %p554 = pnand %p552, %p553
      %p555 = pneg %p554
      // Predicated region
      $region186: #{attn_block.3} parent=5 // pred_check
        _
      $region187: #{attn_block.3} parent=5 // pred_check_branch
        %557 = sbr.rel (%p554) target = $region189
      $region188: #{attn_block.3} parent=5 // pred_region
        %s558 = ssub.s32 %s12, 1
        %s559 = sand.u32 %s46, 1
        %s560 = sand.u32 %s46, 1
        %s561 = smul.addr %s560, 64
        %s562 = scalar_lea.vmem [#allocation5], %s561
        // Predicated region
        $region190: #{attn_block.3} parent=188 // pred_check
          %p563 = pneg %p59
        $region191: #{attn_block.3} parent=188 // pred_check_branch
          %565 = sbr.rel (%p563) target = $region193
        $region192: #{attn_block.3} parent=188 // pred_region
          _
        $region193: #{attn_block.3} parent=188 // pred_fallthru
          _
        %s566 = sand.u32 %s74, 1
        %s567 = sand.u32 %s74, 1
        %s568 = smul.addr %s567, 32
        %s569 = scalar_lea.vmem [#allocation6], %s568
        // Predicated region
        $region194: #{attn_block.3} parent=188 // pred_check
          %p570 = pneg %p87
        $region195: #{attn_block.3} parent=188 // pred_check_branch
          %572 = sbr.rel (%p570) target = $region197
        $region196: #{attn_block.3} parent=188 // pred_region
          _
        $region197: #{attn_block.3} parent=188 // pred_fallthru
          _
        %s573 = sand.u32 %s102, 1
        %s574 = sand.u32 %s102, 1
        %s575 = smul.addr %s574, 32
        %s576 = scalar_lea.vmem [#allocation7], %s575
        // Predicated region
        $region198: #{attn_block.3} parent=188 // pred_check
          %p577 = pneg %p115
        $region199: #{attn_block.3} parent=188 // pred_check_branch
          %579 = sbr.rel (%p577) target = $region201
        $region200: #{attn_block.3} parent=188 // pred_region
          _
        $region201: #{attn_block.3} parent=188 // pred_fallthru
          _
        %s580 = sand.u32 %s130, 1
        %s581 = sand.u32 %s130, 1
        %s582 = smul.addr %s581, 32
        %s583 = scalar_lea.vmem [#allocation8], %s582
        // Predicated region
        $region202: #{attn_block.3} parent=188 // pred_check
          %p584 = pneg %p143
        $region203: #{attn_block.3} parent=188 // pred_check_branch
          %586 = sbr.rel (%p584) target = $region205
        $region204: #{attn_block.3} parent=188 // pred_region
          _
        $region205: #{attn_block.3} parent=188 // pred_fallthru
          _
        %s587 = sand.u32 %s46, 1
        %s588 = sand.u32 %s46, 1
        %s589 = smul.addr %s588, 64
        %s590 = scalar_lea.vmem [#allocation5], %s589
        %p591 = pneg %p59
        %p592 = pneg %p56
        %s593 = sand.u32 %s74, 1
        %s594 = sand.u32 %s74, 1
        %s595 = smul.addr %s594, 32
        %s596 = scalar_lea.vmem [#allocation6], %s595
        %p597 = pneg %p87
        %p598 = pneg %p84
        %s599 = sand.u32 %s102, 1
        %s600 = sand.u32 %s102, 1
        %s601 = smul.addr %s600, 32
        %s602 = scalar_lea.vmem [#allocation7], %s601
        %p603 = pneg %p115
        %p604 = pneg %p112
        %s605 = sand.u32 %s130, 1
        %s606 = sand.u32 %s130, 1
        %s607 = smul.addr %s606, 32
        %s608 = scalar_lea.vmem [#allocation8], %s607
        %p609 = pneg %p143
        %p610 = pneg %p140
        %p611 = pneg %p164
        %p612 = pneg %p161
        %p613 = pneg %p185
        %p614 = pneg %p182
        %p615 = pneg %p213
        %p616 = pneg %p210
        %s617 = sand.u32 %s200, 1
        %s618 = sand.u32 %s200, 1
        %s619 = smul.addr %s618, 64
        %s620 = scalar_lea.vmem [#allocation9], %s619
        %p622 = scmp.eq.s32.totalorder %s24, 0
        // Predicated region
        $region206: #{attn_block.3} parent=188 // pred_check
          %p623 = pneg %p622
        $region207: #{attn_block.3} parent=188 // pred_check_branch
          %625 = sbr.rel (%p623) target = $region209
        $region208: #{attn_block.3} parent=188 // pred_region
          %626 = vst [vmem:[#allocation2] sm:$0x1] -inf
          %627 = vst [vmem:[#allocation3] sm:$0x1] 0.0
          %628 = vst [vmem:[#allocation4] sm:$0xff] 0.0
          %629 = vst [vmem:[#allocation4 + $0x8] sm:$0xff] 0.0
          %630 = vst [vmem:[#allocation4 + $0x10] sm:$0xff] 0.0
          %631 = vst [vmem:[#allocation4 + $0x18] sm:$0xff] 0.0
          %632 = vst [vmem:[#allocation4 + $0x20] sm:$0xff] 0.0
          %633 = vst [vmem:[#allocation4 + $0x28] sm:$0xff] 0.0
          %634 = vst [vmem:[#allocation4 + $0x30] sm:$0xff] 0.0
          %635 = vst [vmem:[#allocation4 + $0x38] sm:$0xff] 0.0
        $region209: #{attn_block.3} parent=188 // pred_fallthru
          _
        %v636 = vld [vmem:[%s569] sm:$0xf]
        %v637 = vld [vmem:[%s569 + $0x4] sm:$0xf]
        %v638 = vld [vmem:[%s569 + $0x8] sm:$0xf]
        %v639 = vld [vmem:[%s569 + $0xc] sm:$0xf]
        %v640 = vld [vmem:[%s569 + $0x10] sm:$0xf]
        %v641 = vld [vmem:[%s569 + $0x14] sm:$0xf]
        %v642 = vld [vmem:[%s569 + $0x18] sm:$0xf]
        %v643 = vld [vmem:[%s569 + $0x1c] sm:$0xf]
        %v644 = vld [vmem:[%s576] sm:$0xf]
        %v645 = vld [vmem:[%s576 + $0x4] sm:$0xf]
        %v646 = vld [vmem:[%s576 + $0x8] sm:$0xf]
        %v647 = vld [vmem:[%s576 + $0xc] sm:$0xf]
        %v648 = vld [vmem:[%s576 + $0x10] sm:$0xf]
        %v649 = vld [vmem:[%s576 + $0x14] sm:$0xf]
        %v650 = vld [vmem:[%s576 + $0x18] sm:$0xf]
        %v651 = vld [vmem:[%s576 + $0x1c] sm:$0xf]
        %v652 = vld [vmem:[%s583] sm:$0xf]
        %v653 = vld [vmem:[%s583 + $0x4] sm:$0xf]
        %v654 = vld [vmem:[%s583 + $0x8] sm:$0xf]
        %v655 = vld [vmem:[%s583 + $0xc] sm:$0xf]
        %v656 = vld [vmem:[%s583 + $0x10] sm:$0xf]
        %v657 = vld [vmem:[%s583 + $0x14] sm:$0xf]
        %v658 = vld [vmem:[%s583 + $0x18] sm:$0xf]
        %v659 = vld [vmem:[%s583 + $0x1c] sm:$0xf]
        %v668 = vunpack.c.l.b16 %v644
        %v669 = vunpack.c.l.b16 %v645
        %v670 = vunpack.c.l.b16 %v646
        %v671 = vunpack.c.l.b16 %v647
        %v672 = vunpack.c.l.b16 %v648
        %v673 = vunpack.c.l.b16 %v649
        %v674 = vunpack.c.l.b16 %v650
        %v675 = vunpack.c.l.b16 %v651
        %v676 = vpack.c.b16 %v669, %v668
        %v677 = vpack.c.b16 %v671, %v670
        %v678 = vpack.c.b16 %v673, %v672
        %v679 = vpack.c.b16 %v675, %v674
        %684 = vxpose.xlu0.c.b16.start [1/8] %v676, 128
        %685 = vxpose.xlu0.c.b16.cont [2/8] %v677, 128
        %686 = vxpose.xlu0.c.b16.cont [3/8] %v678, 128
        %687 = vxpose.xlu0.c.b16.cont [4/8] %v679, 128
        %688 = vxpose.xlu0.c.b16.cont [5/8] 0, 128
        %689 = vxpose.xlu0.c.b16.cont [6/8] 0, 128
        %690 = vxpose.xlu0.c.b16.cont [7/8] 0, 128
        %691 = vxpose.xlu0.c.b16.end [8/8] 0, 128
        %v692 = vpop.trf.xlu0
        %v693 = vpop.trf.xlu0
        %v694 = vpop.trf.xlu0
        %v695 = vpop.trf.xlu0
        %v696 = vpop.trf.xlu0
        %v697 = vpop.trf.xlu0
        %v698 = vpop.trf.xlu0
        %v699 = vpop.trf.xlu0
        %v708 = vunpack.c.l.b16 %v636
        %v709 = vunpack.c.l.b16 %v637
        %v710 = vunpack.c.l.b16 %v638
        %v711 = vunpack.c.l.b16 %v639
        %v712 = vunpack.c.l.b16 %v640
        %v713 = vunpack.c.l.b16 %v641
        %v714 = vunpack.c.l.b16 %v642
        %v715 = vunpack.c.l.b16 %v643
        %v716 = vpack.c.b16 %v709, %v708
        %v717 = vpack.c.b16 %v711, %v710
        %v718 = vpack.c.b16 %v713, %v712
        %v719 = vpack.c.b16 %v715, %v714
        %vm724 = vcmask 523264
        %v726 = vsel %vm724, %v692, 0
        %v729 = vsel %vm724, %v693, 0
        %v732 = vsel %vm724, %v694, 0
        %v735 = vsel %vm724, %v695, 0
        %v738 = vsel %vm724, %v696, 0
        %v741 = vsel %vm724, %v697, 0
        %v744 = vsel %vm724, %v698, 0
        %v747 = vsel %vm724, %v699, 0
        %749 = vmatprep.subr.bf16.mxu0 0
        %750 = vmatpush1.bf16.msra.mxu0 0
        %751 = vmatprep.subr.bf16.mxu0 0
        %752 = vmatpush1.bf16.msra.mxu0 0
        %753 = vmatprep.subr.bf16.mxu0 0
        %754 = vmatpush1.bf16.msra.mxu0 0
        %755 = vmatprep.subr.bf16.mxu0 0
        %756 = vmatpush1.bf16.msra.mxu0 0
        %757 = vmatprep.subr.bf16.mxu0 0
        %758 = vmatpush1.bf16.msra.mxu0 %v719
        %759 = vmatprep.subr.bf16.mxu0 0
        %760 = vmatpush1.bf16.msra.mxu0 %v718
        %761 = vmatprep.subr.bf16.mxu0 0
        %762 = vmatpush1.bf16.msra.mxu0 %v717
        %763 = vmatprep.subr.bf16.mxu0 0
        %764 = vmatpush1.bf16.msra.mxu0 %v716
        %765 = vmatprep.subr.bf16.mxu0 0
        %766 = vmatpush2.bf16.msra.mxu0 0
        %767 = vmatprep.subr.bf16.mxu0 0
        %768 = vmatpush2.bf16.msra.mxu0 0
        %769 = vmatprep.subr.bf16.mxu0 0
        %770 = vmatpush2.bf16.msra.mxu0 0
        %771 = vmatprep.subr.bf16.mxu0 0
        %772 = vmatpush2.bf16.msra.mxu0 0
        %773 = vmatprep.subr.bf16.mxu0 0
        %774 = vmatpush2.bf16.msra.mxu0 0
        %775 = vmatprep.subr.bf16.mxu0 0
        %776 = vmatpush2.bf16.msra.mxu0 0
        %777 = vmatprep.subr.bf16.mxu0 0
        %778 = vmatpush2.bf16.msra.mxu0 0
        %779 = vmatprep.subr.bf16.mxu0 0
        %780 = vmatpush2.bf16.msra.mxu0 0
        %781 = vmatprep.mubr.bf16.mxu0 0
        %782 = vmatmul.mubr.bf16.gmra.mxu0 %v726
        %v783 = vpop.f32.mrf.mxu0
        %v784 = vadd.f32 0.0, %v783
        %v785 = vpop.f32.mrf.mxu0
        %v786 = vpop.f32.mrf.mxu0
        %v787 = vadd.f32 0.0, %v786
        %v788 = vpop.f32.mrf.mxu0
        %789 = vmatprep.mubr.bf16.mxu0 0
        %790 = vmatmul.mubr.bf16.gmra.mxu0 %v729
        %v791 = vpop.f32.mrf.mxu0
        %v792 = vadd.f32 0.0, %v791
        %v793 = vpop.f32.mrf.mxu0
        %v794 = vpop.f32.mrf.mxu0
        %v795 = vadd.f32 0.0, %v794
        %v796 = vpop.f32.mrf.mxu0
        %797 = vmatprep.mubr.bf16.mxu0 0
        %798 = vmatmul.mubr.bf16.gmra.mxu0 %v732
        %v799 = vpop.f32.mrf.mxu0
        %v800 = vadd.f32 0.0, %v799
        %v801 = vpop.f32.mrf.mxu0
        %v802 = vpop.f32.mrf.mxu0
        %v803 = vadd.f32 0.0, %v802
        %v804 = vpop.f32.mrf.mxu0
        %805 = vmatprep.mubr.bf16.mxu0 0
        %806 = vmatmul.mubr.bf16.gmra.mxu0 %v735
        %v807 = vpop.f32.mrf.mxu0
        %v808 = vadd.f32 0.0, %v807
        %v809 = vpop.f32.mrf.mxu0
        %v810 = vpop.f32.mrf.mxu0
        %v811 = vadd.f32 0.0, %v810
        %v812 = vpop.f32.mrf.mxu0
        %813 = vmatprep.mubr.bf16.mxu0 0
        %814 = vmatmul.mubr.bf16.gmra.mxu0 %v738
        %v815 = vpop.f32.mrf.mxu0
        %v816 = vadd.f32 0.0, %v815
        %v817 = vpop.f32.mrf.mxu0
        %v818 = vpop.f32.mrf.mxu0
        %v819 = vadd.f32 0.0, %v818
        %v820 = vpop.f32.mrf.mxu0
        %821 = vmatprep.mubr.bf16.mxu0 0
        %822 = vmatmul.mubr.bf16.gmra.mxu0 %v741
        %v823 = vpop.f32.mrf.mxu0
        %v824 = vadd.f32 0.0, %v823
        %v825 = vpop.f32.mrf.mxu0
        %v826 = vpop.f32.mrf.mxu0
        %v827 = vadd.f32 0.0, %v826
        %v828 = vpop.f32.mrf.mxu0
        %829 = vmatprep.mubr.bf16.mxu0 0
        %830 = vmatmul.mubr.bf16.gmra.mxu0 %v744
        %v831 = vpop.f32.mrf.mxu0
        %v832 = vadd.f32 0.0, %v831
        %v833 = vpop.f32.mrf.mxu0
        %v834 = vpop.f32.mrf.mxu0
        %v835 = vadd.f32 0.0, %v834
        %v836 = vpop.f32.mrf.mxu0
        %837 = vmatprep.mubr.bf16.mxu0 0
        %838 = vmatmul.mubr.bf16.gmra.mxu0 %v747
        %v839 = vpop.f32.mrf.mxu0
        %v840 = vadd.f32 0.0, %v839
        %v841 = vpop.f32.mrf.mxu0
        %v842 = vpop.f32.mrf.mxu0
        %v843 = vadd.f32 0.0, %v842
        %v844 = vpop.f32.mrf.mxu0
        %845 = vdwg.mxu0
        %v846 = vld [vmem:[#allocation2] sm:$0x1]
        %v847 = vmax.f32 %v784, %v800
        %v848 = vmax.f32 %v787, %v803
        %v849 = vmax.f32 %v792, %v808
        %v850 = vmax.f32 %v795, %v811
        %v851 = vmax.f32 %v847, %v816
        %v852 = vmax.f32 %v848, %v819
        %v853 = vmax.f32 %v849, %v824
        %v854 = vmax.f32 %v850, %v827
        %v855 = vmax.f32 %v851, %v832
        %v856 = vmax.f32 %v852, %v835
        %v857 = vmax.f32 %v853, %v840
        %v858 = vmax.f32 %v854, %v843
        %v859 = vmax.f32 %v855, %v856
        %v860 = vmax.f32 %v857, %v858
        %v861 = vmax.f32 %v859, %v860
        %v862 = vrot.slane %v861, 4
        %v863 = vmax.f32 %v861, %v862
        %v864 = vrot.slane %v863, 2
        %v865 = vmax.f32 %v863, %v864
        %v866 = vrot.slane %v865, 1
        %v867 = vmax.f32 %v865, %v866
        %v868 = vmax.f32 %v846, %v867
        %v869 = vsub.f32 %v846, %v868
        %v870 = vmul.f32 %v869, 1.442695
        %v871 = vpow.pop %v870
        %v873 = vlaneseq
        %v874 = vshrl.u32 %v873, 7
        %v875 = vsub.s32 0, %v874
        %v876 = vrot.slane %v868, %v875
        %v878 = vsub.f32 %v784, %v876
        %v879 = vsub.f32 %v787, %v876
        %v880 = vsub.f32 %v792, %v876
        %v881 = vsub.f32 %v795, %v876
        %v882 = vsub.f32 %v800, %v876
        %v883 = vsub.f32 %v803, %v876
        %v884 = vsub.f32 %v808, %v876
        %v885 = vsub.f32 %v811, %v876
        %v886 = vsub.f32 %v816, %v876
        %v887 = vsub.f32 %v819, %v876
        %v888 = vsub.f32 %v824, %v876
        %v889 = vsub.f32 %v827, %v876
        %v890 = vsub.f32 %v832, %v876
        %v891 = vsub.f32 %v835, %v876
        %v892 = vsub.f32 %v840, %v876
        %v893 = vsub.f32 %v843, %v876
        %v894 = vmul.f32 %v878, 1.442695
        %v895 = vpow.pop %v894
        %v896 = vmul.f32 %v879, 1.442695
        %v897 = vpow.pop %v896
        %v898 = vmul.f32 %v880, 1.442695
        %v899 = vpow.pop %v898
        %v900 = vmul.f32 %v881, 1.442695
        %v901 = vpow.pop %v900
        %v902 = vmul.f32 %v882, 1.442695
        %v903 = vpow.pop %v902
        %v904 = vmul.f32 %v883, 1.442695
        %v905 = vpow.pop %v904
        %v906 = vmul.f32 %v884, 1.442695
        %v907 = vpow.pop %v906
        %v908 = vmul.f32 %v885, 1.442695
        %v909 = vpow.pop %v908
        %v910 = vmul.f32 %v886, 1.442695
        %v911 = vpow.pop %v910
        %v912 = vmul.f32 %v887, 1.442695
        %v913 = vpow.pop %v912
        %v914 = vmul.f32 %v888, 1.442695
        %v915 = vpow.pop %v914
        %v916 = vmul.f32 %v889, 1.442695
        %v917 = vpow.pop %v916
        %v918 = vmul.f32 %v890, 1.442695
        %v919 = vpow.pop %v918
        %v920 = vmul.f32 %v891, 1.442695
        %v921 = vpow.pop %v920
        %v922 = vmul.f32 %v892, 1.442695
        %v923 = vpow.pop %v922
        %v924 = vmul.f32 %v893, 1.442695
        %v925 = vpow.pop %v924
        %v926 = vld [vmem:[#allocation3] sm:$0x1]
        %v927 = vmul.f32 %v871, %v926
        %v928 = vadd.f32 %v895, %v897
        %v929 = vadd.f32 %v928, %v899
        %v930 = vadd.f32 %v929, %v901
        %v931 = vadd.f32 %v930, %v903
        %v932 = vadd.f32 %v931, %v905
        %v933 = vadd.f32 %v932, %v907
        %v934 = vadd.f32 %v933, %v909
        %v935 = vadd.f32 %v934, %v911
        %v936 = vadd.f32 %v935, %v913
        %v937 = vadd.f32 %v936, %v915
        %v938 = vadd.f32 %v937, %v917
        %v939 = vadd.f32 %v938, %v919
        %v940 = vadd.f32 %v939, %v921
        %v941 = vadd.f32 %v940, %v923
        %v942 = vadd.f32 %v941, %v925
        %v943 = vrot.slane %v942, 4
        %v944 = vadd.f32 %v942, %v943
        %v945 = vrot.slane %v944, 2
        %v946 = vadd.f32 %v944, %v945
        %v947 = vrot.slane %v946, 1
        %v948 = vadd.f32 %v946, %v947
        %v949 = vadd.f32 %v927, %v948
        %950 = vst [vmem:[#allocation3] sm:$0x1] %v949
        %v951 = vld [vmem:[#allocation4] sm:$0xff]
        %v952 = vld [vmem:[#allocation4 + $0x8] sm:$0xff]
        %v953 = vld [vmem:[#allocation4 + $0x10] sm:$0xff]
        %v954 = vld [vmem:[#allocation4 + $0x18] sm:$0xff]
        %v955 = vld [vmem:[#allocation4 + $0x20] sm:$0xff]
        %v956 = vld [vmem:[#allocation4 + $0x28] sm:$0xff]
        %v957 = vld [vmem:[#allocation4 + $0x30] sm:$0xff]
        %v958 = vld [vmem:[#allocation4 + $0x38] sm:$0xff]
        %v960 = vlaneseq
        %v961 = vshrl.u32 %v960, 7
        %v962 = vsub.s32 0, %v961
        %v963 = vrot.slane %v871, %v962
        %v965 = vmul.f32 %v963, %v951
        %v966 = vmul.f32 %v963, %v952
        %v967 = vmul.f32 %v963, %v953
        %v968 = vmul.f32 %v963, %v954
        %v969 = vmul.f32 %v963, %v955
        %v970 = vmul.f32 %v963, %v956
        %v971 = vmul.f32 %v963, %v957
        %v972 = vmul.f32 %v963, %v958
        %v973 = vpack.c.bf16 %v897, %v895
        %v974 = vpack.c.bf16 %v901, %v899
        %v975 = vpack.c.bf16 %v905, %v903
        %v976 = vpack.c.bf16 %v909, %v907
        %v977 = vpack.c.bf16 %v913, %v911
        %v978 = vpack.c.bf16 %v917, %v915
        %v979 = vpack.c.bf16 %v921, %v919
        %v980 = vpack.c.bf16 %v925, %v923
        %v989 = vunpack.c.l.b16 %v652
        %v990 = vunpack.c.l.b16 %v653
        %v991 = vunpack.c.l.b16 %v654
        %v992 = vunpack.c.l.b16 %v655
        %v993 = vunpack.c.l.b16 %v656
        %v994 = vunpack.c.l.b16 %v657
        %v995 = vunpack.c.l.b16 %v658
        %v996 = vunpack.c.l.b16 %v659
        %v997 = vpack.c.b16 %v990, %v989
        %v998 = vpack.c.b16 %v992, %v991
        %v999 = vpack.c.b16 %v994, %v993
        %v1000 = vpack.c.b16 %v996, %v995
        %1005 = vmatprep.subr.bf16.mxu0 0
        %1006 = vmatpush1.bf16.msra.mxu0 %v980
        %1007 = vmatprep.subr.bf16.mxu0 0
        %1008 = vmatpush1.bf16.msra.mxu0 %v979
        %1009 = vmatprep.subr.bf16.mxu0 0
        %1010 = vmatpush1.bf16.msra.mxu0 %v978
        %1011 = vmatprep.subr.bf16.mxu0 0
        %1012 = vmatpush1.bf16.msra.mxu0 %v977
        %1013 = vmatprep.subr.bf16.mxu0 0
        %1014 = vmatpush1.bf16.msra.mxu0 %v976
        %1015 = vmatprep.subr.bf16.mxu0 0
        %1016 = vmatpush1.bf16.msra.mxu0 %v975
        %1017 = vmatprep.subr.bf16.mxu0 0
        %1018 = vmatpush1.bf16.msra.mxu0 %v974
        %1019 = vmatprep.subr.bf16.mxu0 0
        %1020 = vmatpush1.bf16.msra.mxu0 %v973
        %1021 = vmatprep.subr.bf16.mxu0 0
        %1022 = vmatpush2.bf16.msra.mxu0 0
        %1023 = vmatprep.subr.bf16.mxu0 0
        %1024 = vmatpush2.bf16.msra.mxu0 0
        %1025 = vmatprep.subr.bf16.mxu0 0
        %1026 = vmatpush2.bf16.msra.mxu0 0
        %1027 = vmatprep.subr.bf16.mxu0 0
        %1028 = vmatpush2.bf16.msra.mxu0 0
        %1029 = vmatprep.subr.bf16.mxu0 0
        %1030 = vmatpush2.bf16.msra.mxu0 0
        %1031 = vmatprep.subr.bf16.mxu0 0
        %1032 = vmatpush2.bf16.msra.mxu0 0
        %1033 = vmatprep.subr.bf16.mxu0 0
        %1034 = vmatpush2.bf16.msra.mxu0 0
        %1035 = vmatprep.subr.bf16.mxu0 0
        %1036 = vmatpush2.bf16.msra.mxu0 0
        %1037 = vmatprep.mubr.bf16.mxu0 0
        %1038 = vmatmul.mubr.bf16.gmra.mxu0 %v997
        %v1039 = vpop.f32.mrf.mxu0
        %v1040 = vadd.f32 0.0, %v1039
        %v1041 = vpop.f32.mrf.mxu0
        %v1042 = vpop.f32.mrf.mxu0
        %v1043 = vadd.f32 0.0, %v1042
        %v1044 = vpop.f32.mrf.mxu0
        %1045 = vmatprep.mubr.bf16.mxu0 0
        %1046 = vmatmul.mubr.bf16.gmra.mxu0 %v998
        %v1047 = vpop.f32.mrf.mxu0
        %v1048 = vadd.f32 0.0, %v1047
        %v1049 = vpop.f32.mrf.mxu0
        %v1050 = vpop.f32.mrf.mxu0
        %v1051 = vadd.f32 0.0, %v1050
        %v1052 = vpop.f32.mrf.mxu0
        %1053 = vmatprep.mubr.bf16.mxu0 0
        %1054 = vmatmul.mubr.bf16.gmra.mxu0 %v999
        %v1055 = vpop.f32.mrf.mxu0
        %v1056 = vadd.f32 0.0, %v1055
        %v1057 = vpop.f32.mrf.mxu0
        %v1058 = vpop.f32.mrf.mxu0
        %v1059 = vadd.f32 0.0, %v1058
        %v1060 = vpop.f32.mrf.mxu0
        %1061 = vmatprep.mubr.bf16.mxu0 0
        %1062 = vmatmul.mubr.bf16.gmra.mxu0 %v1000
        %v1063 = vpop.f32.mrf.mxu0
        %v1064 = vadd.f32 0.0, %v1063
        %v1065 = vpop.f32.mrf.mxu0
        %v1066 = vpop.f32.mrf.mxu0
        %v1067 = vadd.f32 0.0, %v1066
        %v1068 = vpop.f32.mrf.mxu0
        %1069 = vdwg.mxu0
        %v1070 = vadd.f32 %v965, %v1040
        %v1071 = vadd.f32 %v966, %v1043
        %v1072 = vadd.f32 %v967, %v1048
        %v1073 = vadd.f32 %v968, %v1051
        %v1074 = vadd.f32 %v969, %v1056
        %v1075 = vadd.f32 %v970, %v1059
        %v1076 = vadd.f32 %v971, %v1064
        %v1077 = vadd.f32 %v972, %v1067
        %1078 = vst [vmem:[#allocation4] sm:$0xff] %v1070
        %1079 = vst [vmem:[#allocation4 + $0x8] sm:$0xff] %v1071
        %1080 = vst [vmem:[#allocation4 + $0x10] sm:$0xff] %v1072
        %1081 = vst [vmem:[#allocation4 + $0x18] sm:$0xff] %v1073
        %1082 = vst [vmem:[#allocation4 + $0x20] sm:$0xff] %v1074
        %1083 = vst [vmem:[#allocation4 + $0x28] sm:$0xff] %v1075
        %1084 = vst [vmem:[#allocation4 + $0x30] sm:$0xff] %v1076
        %1085 = vst [vmem:[#allocation4 + $0x38] sm:$0xff] %v1077
        %1086 = vst [vmem:[#allocation2] sm:$0x1] %v868
        %p1087 = scmp.eq.s32.totalorder %s24, 1
        // Predicated region
        $region210: #{attn_block.3} parent=188 // pred_check
          %p1088 = pneg %p1087
        $region211: #{attn_block.3} parent=188 // pred_check_branch
          %1090 = sbr.rel (%p1088) target = $region213
        $region212: #{attn_block.3} parent=188 // pred_region
          %v1091 = vld [vmem:[#allocation3] sm:$0x1]
          %v1092 = vrcp.pop %v1091
          %v1093 = vld [vmem:[#allocation4] sm:$0xff]
          %v1094 = vld [vmem:[#allocation4 + $0x8] sm:$0xff]
          %v1095 = vld [vmem:[#allocation4 + $0x10] sm:$0xff]
          %v1096 = vld [vmem:[#allocation4 + $0x18] sm:$0xff]
          %v1097 = vld [vmem:[#allocation4 + $0x20] sm:$0xff]
          %v1098 = vld [vmem:[#allocation4 + $0x28] sm:$0xff]
          %v1099 = vld [vmem:[#allocation4 + $0x30] sm:$0xff]
          %v1100 = vld [vmem:[#allocation4 + $0x38] sm:$0xff]
          %v1102 = vlaneseq
          %v1103 = vshrl.u32 %v1102, 7
          %v1104 = vsub.s32 0, %v1103
          %v1105 = vrot.slane %v1092, %v1104
          %v1107 = vmul.f32 %v1093, %v1105
          %v1108 = vmul.f32 %v1094, %v1105
          %v1109 = vmul.f32 %v1095, %v1105
          %v1110 = vmul.f32 %v1096, %v1105
          %v1111 = vmul.f32 %v1097, %v1105
          %v1112 = vmul.f32 %v1098, %v1105
          %v1113 = vmul.f32 %v1099, %v1105
          %v1114 = vmul.f32 %v1100, %v1105
          %v1115 = vpack.c.bf16 %v1108, %v1107
          %v1116 = vpack.c.bf16 %v1110, %v1109
          %v1117 = vpack.c.bf16 %v1112, %v1111
          %v1118 = vpack.c.bf16 %v1114, %v1113
          %v1119 = vld [vmem:[%s4] sm:$0xf]
          %v1120 = vld [vmem:[%s4 + $0x4] sm:$0xf]
          %v1121 = vld [vmem:[%s4 + $0x8] sm:$0xf]
          %v1122 = vld [vmem:[%s4 + $0xc] sm:$0xf]
          %v1123 = vld [vmem:[%s4 + $0x10] sm:$0xf]
          %v1124 = vld [vmem:[%s4 + $0x14] sm:$0xf]
          %v1125 = vld [vmem:[%s4 + $0x18] sm:$0xf]
          %v1126 = vld [vmem:[%s4 + $0x1c] sm:$0xf]
          %v1127 = vld [vmem:[%s4 + $0x20] sm:$0xf]
          %v1128 = vld [vmem:[%s4 + $0x24] sm:$0xf]
          %v1129 = vld [vmem:[%s4 + $0x28] sm:$0xf]
          %v1130 = vld [vmem:[%s4 + $0x2c] sm:$0xf]
          %v1131 = vld [vmem:[%s4 + $0x30] sm:$0xf]
          %v1132 = vld [vmem:[%s4 + $0x34] sm:$0xf]
          %v1133 = vld [vmem:[%s4 + $0x38] sm:$0xf]
          %v1134 = vld [vmem:[%s4 + $0x3c] sm:$0xf]
          %v1135 = vld [vmem:[%s5] sm:$0x1]
          %v1137 = vlaneseq
          %v1138 = vshrl.u32 %v1137, 7
          %v1139 = vsub.s32 0, %v1138
          %v1140 = vrot.slane %v1135, %v1139
          %v1158 = vunpack.c.l.b16 %v1119
          %v1159 = vunpack.c.l.b16 %v1120
          %v1160 = vunpack.c.l.b16 %v1121
          %v1161 = vunpack.c.l.b16 %v1122
          %v1162 = vunpack.c.l.b16 %v1123
          %v1163 = vunpack.c.l.b16 %v1124
          %v1164 = vunpack.c.l.b16 %v1125
          %v1165 = vunpack.c.l.b16 %v1126
          %v1166 = vunpack.c.l.b16 %v1127
          %v1167 = vunpack.c.l.b16 %v1128
          %v1168 = vunpack.c.l.b16 %v1129
          %v1169 = vunpack.c.l.b16 %v1130
          %v1170 = vunpack.c.l.b16 %v1131
          %v1171 = vunpack.c.l.b16 %v1132
          %v1172 = vunpack.c.l.b16 %v1133
          %v1173 = vunpack.c.l.b16 %v1134
          %v1174 = vpack.c.b16 %v1159, %v1158
          %v1175 = vpack.c.b16 %v1161, %v1160
          %v1176 = vpack.c.b16 %v1163, %v1162
          %v1177 = vpack.c.b16 %v1165, %v1164
          %v1178 = vpack.c.b16 %v1167, %v1166
          %v1179 = vpack.c.b16 %v1169, %v1168
          %v1180 = vpack.c.b16 %v1171, %v1170
          %v1181 = vpack.c.b16 %v1173, %v1172
          %1190 = vmatprep.subr.bf16.mxu0 0
          %1191 = vmatpush1.bf16.msra.mxu0 %v1181
          %1192 = vmatprep.subr.bf16.mxu0 0
          %1193 = vmatpush1.bf16.msra.mxu0 %v1180
          %1194 = vmatprep.subr.bf16.mxu0 0
          %1195 = vmatpush1.bf16.msra.mxu0 %v1179
          %1196 = vmatprep.subr.bf16.mxu0 0
          %1197 = vmatpush1.bf16.msra.mxu0 %v1178
          %1198 = vmatprep.subr.bf16.mxu0 0
          %1199 = vmatpush1.bf16.msra.mxu0 %v1177
          %1200 = vmatprep.subr.bf16.mxu0 0
          %1201 = vmatpush1.bf16.msra.mxu0 %v1176
          %1202 = vmatprep.subr.bf16.mxu0 0
          %1203 = vmatpush1.bf16.msra.mxu0 %v1175
          %1204 = vmatprep.subr.bf16.mxu0 0
          %1205 = vmatpush1.bf16.msra.mxu0 %v1174
          %1206 = vmatprep.subr.bf16.mxu0 0
          %1207 = vmatpush2.bf16.msra.mxu0 0
          %1208 = vmatprep.subr.bf16.mxu0 0
          %1209 = vmatpush2.bf16.msra.mxu0 0
          %1210 = vmatprep.subr.bf16.mxu0 0
          %1211 = vmatpush2.bf16.msra.mxu0 0
          %1212 = vmatprep.subr.bf16.mxu0 0
          %1213 = vmatpush2.bf16.msra.mxu0 0
          %1214 = vmatprep.subr.bf16.mxu0 0
          %1215 = vmatpush2.bf16.msra.mxu0 0
          %1216 = vmatprep.subr.bf16.mxu0 0
          %1217 = vmatpush2.bf16.msra.mxu0 0
          %1218 = vmatprep.subr.bf16.mxu0 0
          %1219 = vmatpush2.bf16.msra.mxu0 0
          %1220 = vmatprep.subr.bf16.mxu0 0
          %1221 = vmatpush2.bf16.msra.mxu0 0
          %1222 = vmatprep.mubr.bf16.mxu0 0
          %1223 = vmatmul.mubr.bf16.gmra.mxu0 %v1115
          %v1224 = vpop.f32.mrf.mxu0
          %v1225 = vadd.f32 %v1140, %v1224
          %v1226 = vpop.f32.mrf.mxu0
          %v1227 = vpop.f32.mrf.mxu0
          %v1228 = vadd.f32 %v1140, %v1227
          %v1229 = vpop.f32.mrf.mxu0
          %1230 = vmatprep.mubr.bf16.mxu0 0
          %1231 = vmatmul.mubr.bf16.gmra.mxu0 %v1116
          %v1232 = vpop.f32.mrf.mxu0
          %v1233 = vadd.f32 %v1140, %v1232
          %v1234 = vpop.f32.mrf.mxu0
          %v1235 = vpop.f32.mrf.mxu0
          %v1236 = vadd.f32 %v1140, %v1235
          %v1237 = vpop.f32.mrf.mxu0
          %1238 = vmatprep.mubr.bf16.mxu0 0
          %1239 = vmatmul.mubr.bf16.gmra.mxu0 %v1117
          %v1240 = vpop.f32.mrf.mxu0
          %v1241 = vadd.f32 %v1140, %v1240
          %v1242 = vpop.f32.mrf.mxu0
          %v1243 = vpop.f32.mrf.mxu0
          %v1244 = vadd.f32 %v1140, %v1243
          %v1245 = vpop.f32.mrf.mxu0
          %1246 = vmatprep.mubr.bf16.mxu0 0
          %1247 = vmatmul.mubr.bf16.gmra.mxu0 %v1118
          %v1248 = vpop.f32.mrf.mxu0
          %v1249 = vadd.f32 %v1140, %v1248
          %v1250 = vpop.f32.mrf.mxu0
          %v1251 = vpop.f32.mrf.mxu0
          %v1252 = vadd.f32 %v1140, %v1251
          %v1253 = vpop.f32.mrf.mxu0
          %1254 = vdwg.mxu0
          %v1255 = vld [vmem:[%s562] sm:$0xff]
          %v1256 = vld [vmem:[%s562 + $0x8] sm:$0xff]
          %v1257 = vld [vmem:[%s562 + $0x10] sm:$0xff]
          %v1258 = vld [vmem:[%s562 + $0x18] sm:$0xff]
          %v1259 = vld [vmem:[%s562 + $0x20] sm:$0xff]
          %v1260 = vld [vmem:[%s562 + $0x28] sm:$0xff]
          %v1261 = vld [vmem:[%s562 + $0x30] sm:$0xff]
          %v1262 = vld [vmem:[%s562 + $0x38] sm:$0xff]
          %v1263 = vadd.f32 %v1255, %v1225
          %v1264 = vadd.f32 %v1256, %v1228
          %v1265 = vadd.f32 %v1257, %v1233
          %v1266 = vadd.f32 %v1258, %v1236
          %v1267 = vadd.f32 %v1259, %v1241
          %v1268 = vadd.f32 %v1260, %v1244
          %v1269 = vadd.f32 %v1261, %v1249
          %v1270 = vadd.f32 %v1262, %v1252
          %1271 = vst [vmem:[%s620] sm:$0xff] %v1263
          %1272 = vst [vmem:[%s620 + $0x8] sm:$0xff] %v1264
          %1273 = vst [vmem:[%s620 + $0x10] sm:$0xff] %v1265
          %1274 = vst [vmem:[%s620 + $0x18] sm:$0xff] %v1266
          %1275 = vst [vmem:[%s620 + $0x20] sm:$0xff] %v1267
          %1276 = vst [vmem:[%s620 + $0x28] sm:$0xff] %v1268
          %1277 = vst [vmem:[%s620 + $0x30] sm:$0xff] %v1269
          %1278 = vst [vmem:[%s620 + $0x38] sm:$0xff] %v1270
        $region213: #{attn_block.3} parent=188 // pred_fallthru
          _
        %s1279 = sand.u32 %s200, 1
        %s1280 = sand.u32 %s200, 1
        %s1281 = smul.addr %s1280, 64
        %s1282 = scalar_lea.vmem [#allocation9], %s1281
        // Predicated region
        $region214: #{attn_block.3} parent=188 // pred_check
          %p1283 = pneg %p210
        $region215: #{attn_block.3} parent=188 // pred_check_branch
          %1285 = sbr.rel (%p1283) target = $region217
        $region216: #{attn_block.3} parent=188 // pred_region
          %s1286 = smul.addr %s22, 16
          %s1287 = sadd.s32 %s23, %s1286
          %s1288 = smul.addr %s1287, 8
          %s1289 = scalar_lea.vmem %s6, %s1288
          // Predicated region
          $region218: #{attn_block.3} parent=216 // pred_check
            _
          $region219: #{attn_block.3} parent=216 // pred_check_branch
            %1291 = sbr.rel (0) target = $region221
          $region220: #{attn_block.3} parent=216 // pred_region
            // Predicated region
            $region222: #{attn_block.3} parent=220 // pred_check
              _
            $region223: #{attn_block.3} parent=220 // pred_check_branch
              %1293 = sbr.rel (0) target = $region225
            $region224: #{attn_block.3} parent=220 // pred_region
              // Predicated region
              $region237: #{attn_block.3} parent=224 // pred_check
                _
              $region238: #{attn_block.3} parent=224 // pred_check_branch
                %1323 = sbr.rel (0) target = $region240
              $region239: #{attn_block.3} parent=224 // pred_region
                loop: start=0, step=1, limit=1
                $region241: #{attn_block.3} parent=239 // loop_pre_header
                  _
                $region242: #{attn_block.3} parent=239 // loop_header
                  %s1325 = sphi 0, %s1329
                  %p1326 = scmp.ge.s32.totalorder %s1325, 1
                  %s1330 = sphi %s1282, %s1282
                  %s1331 = sphi %s1289, %s1289
                $region243: #{attn_block.3} parent=239 // loop_header_branch
                  %1328 = sbr.rel (%p1326) target = $region247
                $region244: #{attn_block.3} parent=239 // loop_body
                  %v1332 = vld [vmem:[%s1330] sm:$0xff]
                  %1333 = vst [vmem:[%s1331] sm:$0xff] %v1332
                  %v1334 = vld [vmem:[%s1330 + $0x8] sm:$0xff]
                  %1335 = vst [vmem:[%s1331 + $0x10] sm:$0xff] %v1334
                  %v1336 = vld [vmem:[%s1330 + $0x10] sm:$0xff]
                  %1337 = vst [vmem:[%s1331 + $0x20] sm:$0xff] %v1336
                  %v1338 = vld [vmem:[%s1330 + $0x18] sm:$0xff]
                  %1339 = vst [vmem:[%s1331 + $0x30] sm:$0xff] %v1338
                  %v1340 = vld [vmem:[%s1330 + $0x20] sm:$0xff]
                  %1341 = vst [vmem:[%s1331 + $0x40] sm:$0xff] %v1340
                  %v1342 = vld [vmem:[%s1330 + $0x28] sm:$0xff]
                  %1343 = vst [vmem:[%s1331 + $0x50] sm:$0xff] %v1342
                  %v1344 = vld [vmem:[%s1330 + $0x30] sm:$0xff]
                  %1345 = vst [vmem:[%s1331 + $0x60] sm:$0xff] %v1344
                  %v1346 = vld [vmem:[%s1330 + $0x38] sm:$0xff]
                  %1347 = vst [vmem:[%s1331 + $0x70] sm:$0xff] %v1346
                $region245: #{attn_block.3} parent=239 // loop_footer
                  %s1329 = sadd.s32 1, %s1325
                $region246: #{attn_block.3} parent=239 // loop_footer_branch
                  %1324 = sbr.rel target = $region242
                $region247: #{attn_block.3} parent=239 // loop_exit
                  _
              $region240: #{attn_block.3} parent=224 // pred_fallthru
                _
              // Predicated region
              $region248: #{attn_block.3} parent=224 // pred_check
                _
              $region249: #{attn_block.3} parent=224 // pred_check_branch
                %1349 = sbr.rel target = $region251
              $region250: #{attn_block.3} parent=224 // pred_region
                _
              $region251: #{attn_block.3} parent=224 // pred_fallthru
                _
            $region225: #{attn_block.3} parent=220 // pred_fallthru
              _
            // Predicated region
            $region226: #{attn_block.3} parent=220 // pred_check
              _
            $region227: #{attn_block.3} parent=220 // pred_check_branch
              %1295 = sbr.rel target = $region229
            $region228: #{attn_block.3} parent=220 // pred_region
              %s1297 = ssub.s32 256, 1
              loop: start=0, step=1, limit=1
              $region230: #{attn_block.3} parent=228 // loop_pre_header
                _
              $region231: #{attn_block.3} parent=228 // loop_header
                %s1299 = sphi 0, %s1303
                %p1300 = scmp.ge.s32.totalorder %s1299, 1
                %s1304 = sphi %s1282, %s1282
                %s1305 = sphi %s1289, %s1289
              $region232: #{attn_block.3} parent=228 // loop_header_branch
                %1302 = sbr.rel (%p1300) target = $region236
              $region233: #{attn_block.3} parent=228 // loop_body
                %v1306 = vld [vmem:[%s1304] sm:%s1297]
                %1307 = vst [vmem:[%s1305] sm:%s1297] %v1306
                %v1308 = vld [vmem:[%s1304 + $0x8] sm:%s1297]
                %1309 = vst [vmem:[%s1305 + $0x10] sm:%s1297] %v1308
                %v1310 = vld [vmem:[%s1304 + $0x10] sm:%s1297]
                %1311 = vst [vmem:[%s1305 + $0x20] sm:%s1297] %v1310
                %v1312 = vld [vmem:[%s1304 + $0x18] sm:%s1297]
                %1313 = vst [vmem:[%s1305 + $0x30] sm:%s1297] %v1312
                %v1314 = vld [vmem:[%s1304 + $0x20] sm:%s1297]
                %1315 = vst [vmem:[%s1305 + $0x40] sm:%s1297] %v1314
                %v1316 = vld [vmem:[%s1304 + $0x28] sm:%s1297]
                %1317 = vst [vmem:[%s1305 + $0x50] sm:%s1297] %v1316
                %v1318 = vld [vmem:[%s1304 + $0x30] sm:%s1297]
                %1319 = vst [vmem:[%s1305 + $0x60] sm:%s1297] %v1318
                %v1320 = vld [vmem:[%s1304 + $0x38] sm:%s1297]
                %1321 = vst [vmem:[%s1305 + $0x70] sm:%s1297] %v1320
              $region234: #{attn_block.3} parent=228 // loop_footer
                %s1303 = sadd.s32 1, %s1299
              $region235: #{attn_block.3} parent=228 // loop_footer_branch
                %1298 = sbr.rel target = $region231
              $region236: #{attn_block.3} parent=228 // loop_exit
                _
            $region229: #{attn_block.3} parent=220 // pred_fallthru
              _
          $region221: #{attn_block.3} parent=216 // pred_fallthru
            _
          %1350 = vnop
        $region217: #{attn_block.3} parent=188 // pred_fallthru
          _
      $region189: #{attn_block.3} parent=5 // pred_fallthru
        _
      %p1351 = scmp.le.s32.totalorder 2, %s12
      // Predicated region
      $region252: #{attn_block.3} parent=5 // pred_check
        %p1352 = pneg %p1351
      $region253: #{attn_block.3} parent=5 // pred_check_branch
        %1354 = sbr.rel (%p1352) target = $region255
      $region254: #{attn_block.3} parent=5 // pred_region
        %s1355 = ssub.s32 %s12, 2
        // Predicated region
        $region256: #{attn_block.3} parent=254 // pred_check
          %p1356 = pneg %p216
        $region257: #{attn_block.3} parent=254 // pred_check_branch
          %1358 = sbr.rel (%p1356) target = $region259
        $region258: #{attn_block.3} parent=254 // pred_region
          %s1359 = sand.u32 %s201, 1
          %s1360 = sand.u32 %s201, 1
          %s1361 = smul.addr %s1360, 64
          %s1362 = scalar_lea.vmem [#allocation9], %s1361
        $region259: #{attn_block.3} parent=254 // pred_fallthru
          _
      $region255: #{attn_block.3} parent=5 // pred_fallthru
        _
    $region6: #{attn_block.3} parent=1 // loop_footer
      %s16 = sadd.s32 1, %s12
    $region7: #{attn_block.3} parent=1 // loop_footer_branch
      %11 = sbr.rel target = $region3
    $region8: #{attn_block.3} parent=1 // loop_exit
      _

</llo_original>
